<compile_context>
chip_gen: v5e
topology: v5e:2x2
jax: 0.10.0
libtpu: 0.0.40
codegen_flags: <defaults>
</compile_context>

<pallas_src>
import functools

import jax
import jax.numpy as jnp
from jax import lax
from jax.experimental import pallas as pl
from jax.experimental.pallas import tpu as pltpu

_LANE = 128
_HALO_BLK = 128          # lane width of the prev/next halo fetch blocks


def _round_up(a, b):
    return -(-a // b) * b


# ---------------------------------------------------------------------------
# Kernel 1: fused input projection for ALL THREE TCNs in one MXU matmul.
#   act0[g] = (W_in[g] @ W_ds[g]) @ x + b_proj[g], zeroed outside [0, T).
# ---------------------------------------------------------------------------
def _inproj_kernel(x_ref, v_ref, w_ref, b_ref, o_ref, *, c):
    # x_ref: (dim, t_in) bf16, w_ref: (3c, dim) bf16 -> one matmul, M = 3c.
    y = jnp.dot(w_ref[...], x_ref[...], preferred_element_type=jnp.float32)
    y = (y + b_ref[...]) * v_ref[...]
    for g in range(3):                       # split the 3 TCN slabs (static)
        o_ref[g] = y[g * c:(g + 1) * c]


def _input_projection(xp, valid, w_all, b_all, c, t_in):
    n, dim, core = xp.shape
    nt = core // t_in
    return pl.pallas_call(
        functools.partial(_inproj_kernel, c=c),
        out_shape=jax.ShapeDtypeStruct((3, n, c, core), jnp.float32),
        grid_spec=pltpu.PrefetchScalarGridSpec(
            num_scalar_prefetch=0,
            grid=(n, nt),
            in_specs=[
                pl.BlockSpec((None, dim, t_in), lambda i, j: (i, 0, j)),
                pl.BlockSpec((1, t_in), lambda i, j: (0, j)),
                pl.BlockSpec((3 * c, dim), lambda i, j: (0, 0)),
                pl.BlockSpec((3 * c, 1), lambda i, j: (0, 0)),
            ],
            out_specs=pl.BlockSpec((3, None, c, t_in),
                                   lambda i, j: (0, i, 0, j)),
        ),
        compiler_params=pltpu.CompilerParams(
            dimension_semantics=("parallel", "parallel"),
            vmem_limit_bytes=32 * 1024 * 1024),
    )(xp, valid, w_all, b_all)


# ---------------------------------------------------------------------------
# Kernel 2: fused stack of DilatedResidualLayers + head, one pallas_call for
# all three TCNs (TCN index is a grid axis; weights indexed by it).
# ---------------------------------------------------------------------------
def _make_stack_kernel(dilations, t_tile, c):
    halo = sum(dilations)                    # exact contamination depth
    dmax = max(dilations)
    win = t_tile + 2 * halo                  # exact overlap window
    winc = _round_up(win, _LANE)             # lane-aligned compute window
    w0 = _HALO_BLK                           # window start inside buf (aligned)
    assert w0 >= dmax and halo <= _HALO_BLK
    f32 = jnp.float32
    bf16 = jnp.bfloat16

    def kernel(xp_ref, xc_ref, xn_ref, mp_ref, mc_ref, mn_ref,
               w1_ref, b1_ref, w2_ref, b2_ref,
               wp_ref, bp_ref, wu_ref, bu_ref,
               o_ref, buf, mrow):
        j = pl.program_id(2)
        lscale = (j > 0).astype(f32)                        # zero left halo @ j==0
        rscale = (j < pl.num_programs(2) - 1).astype(f32)   # zero right halo @ last

        # Tap rims (their values never reach the centre; zeroed for hygiene).
        buf[:, w0 - dmax:w0] = jnp.zeros((c, dmax), f32)
        buf[:, w0 + winc:w0 + winc + dmax] = jnp.zeros((c, dmax), f32)

        # Activation window: [prev halo | centre tile | next halo | zero tail].
        buf[:, w0:w0 + halo] = xp_ref[:, _HALO_BLK - halo:] * lscale
        buf[:, w0 + halo:w0 + halo + t_tile] = xc_ref[...]
        buf[:, w0 + halo + t_tile:w0 + win] = xn_ref[:, :halo] * rscale
        if winc > win:
            buf[:, w0 + win:w0 + winc] = jnp.zeros((c, winc - win), f32)

        # Mask window; broadcast to (c, winc) ONCE, reused by every layer.
        mrow[:, 0:halo] = mp_ref[:, _HALO_BLK - halo:] * lscale
        mrow[:, halo:halo + t_tile] = mc_ref[...]
        mrow[:, halo + t_tile:win] = mn_ref[:, :halo] * rscale
        if winc > win:
            mrow[:, win:winc] = jnp.zeros((1, winc - win), f32)
        mwin = jnp.broadcast_to(mrow[...], (c, winc))

        # Fused dilated residual layers: activation stays resident in VMEM,
        # residual stream in f32, matmul operands cast to bf16 (f32 accum),
        # three accumulating K=c matmuls read the +/-d tap slices directly.
        for idx, d in enumerate(dilations):
            xc = buf[:, w0:w0 + winc]
            xl = buf[:, w0 - d:w0 - d + winc].astype(bf16)
            x0 = xc.astype(bf16)
            xr = buf[:, w0 + d:w0 + d + winc].astype(bf16)
            h = (jnp.dot(w1_ref[3 * idx + 0], xl, preferred_element_type=f32)
                 + jnp.dot(w1_ref[3 * idx + 1], x0, preferred_element_type=f32)
                 + jnp.dot(w1_ref[3 * idx + 2], xr, preferred_element_type=f32)
                 + b1_ref[idx])
            h = jnp.maximum(h, 0.0).astype(bf16)
            y = jnp.dot(w2_ref[idx], h, preferred_element_type=f32) + b2_ref[idx]
            buf[:, w0:w0 + winc] = (y + xc) * mwin

        # Fused head on the exact centre tile:
        #   prediction_conv -> *mask -> upsample_conv (k=1 transpose) -> *mask.
        xcen = buf[:, w0 + halo:w0 + halo + t_tile].astype(bf16)
        mc = mc_ref[...]
        z = jnp.dot(wp_ref[...], xcen, preferred_element_type=f32) + bp_ref[...]
        z = z * mc
        y = jnp.dot(wu_ref[...], z.astype(bf16),
                    preferred_element_type=f32) + bu_ref[...]
        o_ref[...] = (y * mc).astype(o_ref.dtype)

    return kernel


def _tcn_stack_and_head(act0, mp, w1a, b1a, w2a, b2a, wpa, bpa, wua, bua,
                        dilations, t_tile):
    ng, n, c, core = act0.shape
    num_l = len(dilations)
    k_cls = int(wpa.shape[1])
    nt = core // t_tile
    nb = t_tile // _HALO_BLK          # halo-block stride per centre tile
    nblk = core // _HALO_BLK          # total halo blocks in the core
    halo = sum(dilations)
    dmax = max(dilations)
    winc = _round_up(t_tile + 2 * halo, _LANE)
    buf_w = _round_up(_HALO_BLK + winc + dmax, _LANE)
    kernel = _make_stack_kernel(tuple(dilations), t_tile, c)

    def a_prev(g, i, j):
        return (g, i, 0, jnp.maximum(j * nb - 1, 0))

    def a_cen(g, i, j):
        return (g, i, 0, j)

    def a_next(g, i, j):
        return (g, i, 0, jnp.minimum((j + 1) * nb, nblk - 1))

    def m_prev(g, i, j):
        return (i, 0, jnp.maximum(j * nb - 1, 0))

    def m_cen(g, i, j):
        return (i, 0, j)

    def m_next(g, i, j):
        return (i, 0, jnp.minimum((j + 1) * nb, nblk - 1))

    def wspec(*dims):
        nd = len(dims)
        return pl.BlockSpec((None,) + dims, lambda g, i, j: (g,) + (0,) * nd)

    return pl.pallas_call(
        kernel,
        out_shape=jax.ShapeDtypeStruct((ng, n, k_cls, core), jnp.float32),
        grid_spec=pltpu.PrefetchScalarGridSpec(
            num_scalar_prefetch=0,
            grid=(ng, n, nt),
            in_specs=[
                pl.BlockSpec((None, None, c, _HALO_BLK), a_prev),
                pl.BlockSpec((None, None, c, t_tile), a_cen),
                pl.BlockSpec((None, None, c, _HALO_BLK), a_next),
                pl.BlockSpec((None, 1, _HALO_BLK), m_prev),
                pl.BlockSpec((None, 1, t_tile), m_cen),
                pl.BlockSpec((None, 1, _HALO_BLK), m_next),
                wspec(3 * num_l, c, c),     # dilated-conv taps (bf16)
                wspec(num_l, c, 1),         # b1 (f32)
                wspec(num_l, c, c),         # 1x1 conv (bf16)
                wspec(num_l, c, 1),         # b2 (f32)
                wspec(k_cls, c),            # prediction conv (bf16)
                wspec(k_cls, 1),
                wspec(k_cls, k_cls),        # upsample (k=1 transpose) (bf16)
                wspec(k_cls, 1),
            ],
            out_specs=pl.BlockSpec((None, None, k_cls, t_tile), a_cen),
            scratch_shapes=[
                pltpu.VMEM((c, buf_w), jnp.float32),   # resident activation
                pltpu.VMEM((1, winc), jnp.float32),    # mask window row
            ],
        ),
        compiler_params=pltpu.CompilerParams(
            dimension_semantics=("parallel", "parallel", "parallel"),
            vmem_limit_bytes=32 * 1024 * 1024),
    )(act0, act0, act0, mp, mp, mp,
      w1a, b1a, w2a, b2a, wpa, bpa, wua, bua)


# ---------------------------------------------------------------------------
# Full ParallelTCNs forward (Pallas).
# ---------------------------------------------------------------------------
def parallel_tcns_forward(x, mask, params_list):
    n, dim, T = x.shape
    p0 = params_list[0]
    num_l = int(p0["w1"].shape[0])
    c = int(p0["w1"].shape[1])
    k_cls = int(p0["w_pred"].shape[0])
    dilations = tuple(range(1, num_l + 1))
    halo = sum(dilations)
    if halo > _HALO_BLK:
        raise ValueError("sum of dilations must fit in one 128-lane halo block")

    t_tile = max(_LANE, min(1024, _round_up(T, _LANE)))
    nt = -(-T // t_tile)
    core = nt * t_tile
    t_in = next(d for d in (512, 256, 128) if t_tile % d == 0)

    # ---- parameter folding / stacking across the 3 TCNs (plain-JAX glue) ----
    def fold(p):
        w_ds = p["w_ds"][:, :, 0]
        w_in = p["w_in"][:, :, 0]
        w_proj = w_in @ w_ds                               # fold the two 1x1s
        b_proj = w_in @ p["b_ds"] + p["b_in"]
        w1 = jnp.transpose(p["w1"], (0, 3, 1, 2)).reshape(3 * num_l, c, c)
        b1 = p["b1"].reshape(num_l, c, 1)
        w2 = p["w2"][:, :, :, 0]
        b2 = p["b2"].reshape(num_l, c, 1)
        wp = p["w_pred"][:, :, 0]
        bp = p["b_pred"].reshape(k_cls, 1)
        wu = p["w_up"][:, :, 0].T                          # ConvTranspose1d, k=1
        bu = p["b_up"].reshape(k_cls, 1)
        return w_proj, b_proj, w1, b1, w2, b2, wp, bp, wu, bu

    folded = [fold(p) for p in params_list]

    def stack(idx, dtype=None):
        v = jnp.stack([f[idx] for f in folded])
        return v if dtype is None else v.astype(dtype)

    bf16 = jnp.bfloat16
    w_proj_all = jnp.concatenate([f[0] for f in folded], axis=0).astype(bf16)
    b_proj_all = jnp.concatenate([f[1] for f in folded], axis=0).reshape(3 * c, 1)
    w1a, b1a = stack(2, bf16), stack(3)
    w2a, b2a = stack(4, bf16), stack(5)
    wpa, bpa = stack(6, bf16), stack(7)
    wua, bua = stack(8, bf16), stack(9)

    # ---- lane-dense zero-padded layouts (bf16 x halves its HBM traffic) ----
    xp = jnp.zeros((n, dim, core), bf16).at[:, :, :T].set(x.astype(bf16))
    mask_row = mask[:, 0:1, :]
    mp = jnp.zeros((n, 1, core), jnp.float32).at[:, :, :T].set(
        mask_row.astype(jnp.float32))
    valid = jnp.zeros((1, core), jnp.float32).at[:, :T].set(1.0)

    act0 = _input_projection(xp, valid, w_proj_all, b_proj_all, c, t_in)
    out_all = _tcn_stack_and_head(act0, mp, w1a, b1a, w2a, b2a,
                                  wpa, bpa, wua, bua, dilations, t_tile)
    out_all = out_all[:, :, :, :T]
    # Final 3-way mean + mask: trivial elementwise glue, left to XLA.
    avg = jnp.mean(out_all, axis=0) * mask_row
    return out_all[0], out_all[1], out_all[2], avg


# ---------------------------------------------------------------------------
# Parameter construction (PyTorch layouts) and pure-JAX f32 reference.
# ---------------------------------------------------------------------------
def _conv_params(key, out_ch, in_ch, ksize, scale=0.1):
    kw, kb = jax.random.split(key)
    w = scale * jax.random.normal(kw, (out_ch, in_ch, ksize), dtype=jnp.float32)
    b = scale * jax.random.normal(kb, (out_ch,), dtype=jnp.float32)
    return w, b


def _init_sampled_tcn(key, num_layers, num_f_maps, dim, num_classes):
    keys = jax.random.split(key, num_layers + 4)
    w_ds, b_ds = _conv_params(keys[0], dim, dim, 1)
    w_in, b_in = _conv_params(keys[1], num_f_maps, dim, 1)
    w1s, b1s, w2s, b2s = [], [], [], []
    for i in range(num_layers):
        ka, kb = jax.random.split(keys[2 + i])
        w1, b1 = _conv_params(ka, num_f_maps, num_f_maps, 3)
        w2, b2 = _conv_params(kb, num_f_maps, num_f_maps, 1)
        w1s.append(w1); b1s.append(b1); w2s.append(w2); b2s.append(b2)
    w_pred, b_pred = _conv_params(keys[num_layers + 2], num_classes, num_f_maps, 1)
    # ConvTranspose1d(k=1) weight layout: (in_channels, out_channels, 1).
    w_up, b_up = _conv_params(keys[num_layers + 3], num_classes, num_classes, 1)
    return dict(w_ds=w_ds, b_ds=b_ds, w_in=w_in, b_in=b_in,
                w1=jnp.stack(w1s), b1=jnp.stack(b1s),
                w2=jnp.stack(w2s), b2=jnp.stack(b2s),
                w_pred=w_pred, b_pred=b_pred, w_up=w_up, b_up=b_up)


def _conv1x1_ref(x, w, b):
    return jnp.einsum("oi,nit->not", w[:, :, 0], x,
                      precision=lax.Precision.HIGHEST) + b[None, :, None]


def _convT1x1_ref(x, w, b):
    return jnp.einsum("io,nit->not", w[:, :, 0], x,
                      precision=lax.Precision.HIGHEST) + b[None, :, None]


def _dilated_residual_ref(x, mask_row, w1, b1, w2, b2, d):
    y = lax.conv_general_dilated(
        x, w1, window_strides=(1,), padding=[(d, d)], rhs_dilation=(d,),
        dimension_numbers=("NCH", "OIH", "NCH"),
        precision=lax.Precision.HIGHEST) + b1[None, :, None]
    y = jnp.maximum(y, 0.0)
    y = _conv1x1_ref(y, w2, b2)
    return (y + x) * mask_row


def _sampled_tcn_ref(x, mask_row, p):
    out = _conv1x1_ref(x, p["w_ds"], p["b_ds"])
    out = _conv1x1_ref(out, p["w_in"], p["b_in"])
    for i in range(p["w1"].shape[0]):
        out = _dilated_residual_ref(out, mask_row, p["w1"][i], p["b1"][i],
                                    p["w2"][i], p["b2"][i], i + 1)
    out = _conv1x1_ref(out, p["w_pred"], p["b_pred"]) * mask_row
    out = _convT1x1_ref(out, p["w_up"], p["b_up"]) * mask_row
    return out


def _parallel_tcns_ref(x, mask, params_list):
    mask_row = mask[:, 0:1, :]
    outs = tuple(_sampled_tcn_ref(x, mask_row, p) for p in params_list)
    avg = jnp.mean(jnp.stack(outs), axis=0) * mask_row
    return outs + (avg,)


if __name__ == "__main__":
    key = jax.random.PRNGKey(0)
    # Small shapes consistent with the module (real model: dim=2048, C=64,
    # classes=48, 10 layers): here dim=64, C=32, classes=16, 3 layers.
    n, dim, T = 2, 64, 600            # T is ragged (not a multiple of 128)
    num_layers, num_f_maps, num_classes = 3, 32, 16

    k_x, k_m, k1, k2, k3 = jax.random.split(key, 5)
    x = jax.random.normal(k_x, (n, dim, T), dtype=jnp.float32)
    mask = (jax.random.uniform(k_m, (n, num_classes, T)) > 0.2).astype(jnp.float32)

    params = tuple(
        _init_sampled_tcn(k, num_layers, num_f_maps, dim, num_classes)
        for k in (k1, k2, k3))

    fwd = jax.jit(parallel_tcns_forward)
    outs = jax.block_until_ready(fwd(x, mask, params))

    refs = _parallel_tcns_ref(x, mask, params)
    names = ("out1", "out2", "out3", "average_out")
    for name, o, r in zip(names, outs, refs):
        assert o.shape == r.shape, (name, o.shape, r.shape)
        err = float(jnp.max(jnp.abs(o - r)))
        # bf16 matmul operands (f32 accumulation) vs. f32 reference.
        assert err < 3e-2, (name, err)

    print("KERNEL_OK")
</pallas_src>

<mosaic_0001>
module attributes {stable_mosaic.version = 11 : i64} {
  func.func @_inproj_kernel(%arg0: i32, %arg1: i32, %arg2: memref<1x64x128xbf16, #tpu.memory_space<vmem>>, %arg3: memref<1x128xf32, #tpu.memory_space<vmem>>, %arg4: memref<96x64xbf16, #tpu.memory_space<vmem>>, %arg5: memref<96x1xf32, #tpu.memory_space<vmem>>, %arg6: memref<3x1x32x128xf32, #tpu.memory_space<vmem>>) attributes {dimension_semantics = [#tpu.dimension_semantics<parallel>, #tpu.dimension_semantics<parallel>], iteration_bounds = array<i64: 2, 5>, scalar_prefetch = 0 : i64, scratch_operands = 0 : i64, tpu.core_type = #tpu.core_type<tc>, window_params = [{transform_indices = @transform_0, window_bounds = array<i64: 1, 64, 128>}, {transform_indices = @transform_1, window_bounds = array<i64: 1, 128>}, {pipeline_mode = #tpu.pipeline_mode<synchronous>, transform_indices = @transform_2, window_bounds = array<i64: 96, 64>}, {pipeline_mode = #tpu.pipeline_mode<synchronous>, transform_indices = @transform_3, window_bounds = array<i64: 96, 1>}, {transform_indices = @transform_4, window_bounds = array<i64: 3, 1, 32, 128>}]} {
    %c0 = arith.constant 0 : index
    %c0_0 = arith.constant 0 : index
    %0 = vector.load %arg4[%c0, %c0_0] : memref<96x64xbf16, #tpu.memory_space<vmem>>, vector<96x64xbf16>
    %c0_1 = arith.constant 0 : index
    %c0_2 = arith.constant 0 : index
    %c0_3 = arith.constant 0 : index
    %1 = vector.load %arg2[%c0_1, %c0_2, %c0_3] : memref<1x64x128xbf16, #tpu.memory_space<vmem>>, vector<1x64x128xbf16>
    %2 = vector.shape_cast %1 : vector<1x64x128xbf16> to vector<64x128xbf16>
    %cst = arith.constant dense<0.000000e+00> : vector<96x128xf32>
    %3 = tpu.matmul %0, %2, %cst {dimension_numbers = #tpu.dot_dimension_numbers<[1], [0], [0], [1], [0, 0, 1, 1], [], []>} : vector<96x64xbf16>, vector<64x128xbf16>, vector<96x128xf32> -> vector<96x128xf32>
    %c0_4 = arith.constant 0 : index
    %c0_5 = arith.constant 0 : index
    %4 = vector.load %arg5[%c0_4, %c0_5] : memref<96x1xf32, #tpu.memory_space<vmem>>, vector<96x1xf32>
    %5 = vector.broadcast %4 : vector<96x1xf32> to vector<96x128xf32>
    %6 = arith.addf %3, %5 : vector<96x128xf32>
    %c0_6 = arith.constant 0 : index
    %c0_7 = arith.constant 0 : index
    %7 = vector.load %arg3[%c0_6, %c0_7] : memref<1x128xf32, #tpu.memory_space<vmem>>, vector<1x128xf32>
    %8 = vector.broadcast %7 : vector<1x128xf32> to vector<96x128xf32>
    %9 = arith.mulf %6, %8 : vector<96x128xf32>
    %10 = vector.extract_strided_slice %9 {offsets = [0, 0], sizes = [32, 128], strides = [1, 1]} : vector<96x128xf32> to vector<32x128xf32>
    %c0_8 = arith.constant 0 : index
    %c0_9 = arith.constant 0 : index
    %c0_10 = arith.constant 0 : index
    %c0_11 = arith.constant 0 : index
    %11 = vector.load %arg6[%c0_8, %c0_9, %c0_10, %c0_11] : memref<3x1x32x128xf32, #tpu.memory_space<vmem>>, vector<1x1x32x128xf32>
    %12 = vector.shape_cast %11 : vector<1x1x32x128xf32> to vector<32x128xf32>
    %13 = vector.shape_cast %10 : vector<32x128xf32> to vector<1x1x32x128xf32>
    tpu.vector_store %arg6[%c0_8, %c0_9, %c0_10, %c0_11], %13 {strides = array<i32>} : memref<3x1x32x128xf32, #tpu.memory_space<vmem>>, vector<1x1x32x128xf32>,
    %14 = vector.extract_strided_slice %9 {offsets = [32, 0], sizes = [32, 128], strides = [1, 1]} : vector<96x128xf32> to vector<32x128xf32>
    %c1 = arith.constant 1 : index
    %c0_12 = arith.constant 0 : index
    %c0_13 = arith.constant 0 : index
    %c0_14 = arith.constant 0 : index
    %15 = vector.load %arg6[%c1, %c0_12, %c0_13, %c0_14] : memref<3x1x32x128xf32, #tpu.memory_space<vmem>>, vector<1x1x32x128xf32>
    %16 = vector.shape_cast %15 : vector<1x1x32x128xf32> to vector<32x128xf32>
    %17 = vector.shape_cast %14 : vector<32x128xf32> to vector<1x1x32x128xf32>
    tpu.vector_store %arg6[%c1, %c0_12, %c0_13, %c0_14], %17 {strides = array<i32>} : memref<3x1x32x128xf32, #tpu.memory_space<vmem>>, vector<1x1x32x128xf32>,
    %18 = vector.extract_strided_slice %9 {offsets = [64, 0], sizes = [32, 128], strides = [1, 1]} : vector<96x128xf32> to vector<32x128xf32>
    %c2 = arith.constant 2 : index
    %c0_15 = arith.constant 0 : index
    %c0_16 = arith.constant 0 : index
    %c0_17 = arith.constant 0 : index
    %19 = vector.load %arg6[%c2, %c0_15, %c0_16, %c0_17] : memref<3x1x32x128xf32, #tpu.memory_space<vmem>>, vector<1x1x32x128xf32>
    %20 = vector.shape_cast %19 : vector<1x1x32x128xf32> to vector<32x128xf32>
    %21 = vector.shape_cast %18 : vector<32x128xf32> to vector<1x1x32x128xf32>
    tpu.vector_store %arg6[%c2, %c0_15, %c0_16, %c0_17], %21 {strides = array<i32>} : memref<3x1x32x128xf32, #tpu.memory_space<vmem>>, vector<1x1x32x128xf32>,
    return
  }
  func.func @transform_0(%arg0: i32, %arg1: i32) -> (i32, i32, i32) {
    %c0_i32 = arith.constant 0 : i32
    %c0_i32_0 = arith.constant 0 : i32
    return %arg0, %c0_i32, %arg1 : i32, i32, i32
  }
  func.func @transform_1(%arg0: i32, %arg1: i32) -> (i32, i32) {
    %c0_i32 = arith.constant 0 : i32
    %c0_i32_0 = arith.constant 0 : i32
    return %c0_i32, %arg1 : i32, i32
  }
  func.func @transform_2(%arg0: i32, %arg1: i32) -> (i32, i32) {
    %c0_i32 = arith.constant 0 : i32
    %c0_i32_0 = arith.constant 0 : i32
    %c0_i32_1 = arith.constant 0 : i32
    return %c0_i32, %c0_i32_0 : i32, i32
  }
  func.func @transform_3(%arg0: i32, %arg1: i32) -> (i32, i32) {
    %c0_i32 = arith.constant 0 : i32
    %c0_i32_0 = arith.constant 0 : i32
    %c0_i32_1 = arith.constant 0 : i32
    return %c0_i32, %c0_i32_0 : i32, i32
  }
  func.func @transform_4(%arg0: i32, %arg1: i32) -> (i32, i32, i32, i32) {
    %c0_i32 = arith.constant 0 : i32
    %c0_i32_0 = arith.constant 0 : i32
    %c0_i32_1 = arith.constant 0 : i32
    return %c0_i32, %arg0, %c0_i32_0, %arg1 : i32, i32, i32, i32
  }
}

module attributes {stable_mosaic.version = 11 : i64} {
  func.func @kernel(%arg0: i32, %arg1: i32, %arg2: i32, %arg3: memref<1x1x32x128xf32, #tpu.memory_space<vmem>>, %arg4: memref<1x1x32x640xf32, #tpu.memory_space<vmem>>, %arg5: memref<1x1x32x128xf32, #tpu.memory_space<vmem>>, %arg6: memref<1x1x128xf32, #tpu.memory_space<vmem>>, %arg7: memref<1x1x640xf32, #tpu.memory_space<vmem>>, %arg8: memref<1x1x128xf32, #tpu.memory_space<vmem>>, %arg9: memref<1x9x32x32xbf16, #tpu.memory_space<vmem>>, %arg10: memref<1x3x32x1xf32, #tpu.memory_space<vmem>>, %arg11: memref<1x3x32x32xbf16, #tpu.memory_space<vmem>>, %arg12: memref<1x3x32x1xf32, #tpu.memory_space<vmem>>, %arg13: memref<1x16x32xbf16, #tpu.memory_space<vmem>>, %arg14: memref<1x16x1xf32, #tpu.memory_space<vmem>>, %arg15: memref<1x16x16xbf16, #tpu.memory_space<vmem>>, %arg16: memref<1x16x1xf32, #tpu.memory_space<vmem>>, %arg17: memref<1x1x16x640xf32, #tpu.memory_space<vmem>>, %arg18: memref<32x1024xf32, #tpu.memory_space<vmem>>, %arg19: memref<1x768xf32, #tpu.memory_space<vmem>>) attributes {dimension_semantics = [#tpu.dimension_semantics<parallel>, #tpu.dimension_semantics<parallel>, #tpu.dimension_semantics<parallel>], iteration_bounds = array<i64: 3, 2, 1>, scalar_prefetch = 0 : i64, scratch_operands = 2 : i64, tpu.core_type = #tpu.core_type<tc>, window_params = [{transform_indices = @transform_0, window_bounds = array<i64: 1, 1, 32, 128>}, {transform_indices = @transform_1, window_bounds = array<i64: 1, 1, 32, 640>}, {transform_indices = @transform_2, window_bounds = array<i64: 1, 1, 32, 128>}, {transform_indices = @transform_3, window_bounds = array<i64: 1, 1, 128>}, {transform_indices = @transform_4, window_bounds = array<i64: 1, 1, 640>}, {transform_indices = @transform_5, window_bounds = array<i64: 1, 1, 128>}, {transform_indices = @transform_6, window_bounds = array<i64: 1, 9, 32, 32>}, {transform_indices = @transform_7, window_bounds = array<i64: 1, 3, 32, 1>}, {transform_indices = @transform_8, window_bounds = array<i64: 1, 3, 32, 32>}, {transform_indices = @transform_9, window_bounds = array<i64: 1, 3, 32, 1>}, {transform_indices = @transform_10, window_bounds = array<i64: 1, 16, 32>}, {transform_indices = @transform_11, window_bounds = array<i64: 1, 16, 1>}, {transform_indices = @transform_12, window_bounds = array<i64: 1, 16, 16>}, {transform_indices = @transform_13, window_bounds = array<i64: 1, 16, 1>}, {transform_indices = @transform_14, window_bounds = array<i64: 1, 1, 16, 640>}]} {
    %c0_i32 = arith.constant 0 : i32
    %0 = arith.cmpi sgt, %arg2, %c0_i32 : i32
    %1 = arith.extui %0 : i1 to i32
    %2 = arith.sitofp %1 : i32 to f32
    %c0_i32_0 = arith.constant 0 : i32
    %3 = arith.cmpi slt, %arg2, %c0_i32_0 : i32
    %4 = arith.extui %3 : i1 to i32
    %5 = arith.sitofp %4 : i32 to f32
    %cst = arith.constant 0.000000e+00 : f32
    %6 = vector.broadcast %cst : f32 to vector<32x3xf32>
    %c0 = arith.constant 0 : index
    %c125 = arith.constant 125 : index
    %7 = vector.load %arg18[%c0, %c125] : memref<32x1024xf32, #tpu.memory_space<vmem>>, vector<32x3xf32>
    tpu.vector_store %arg18[%c0, %c125], %6 {strides = array<i32>} : memref<32x1024xf32, #tpu.memory_space<vmem>>, vector<32x3xf32>,
    %cst_1 = arith.constant 0.000000e+00 : f32
    %8 = vector.broadcast %cst_1 : f32 to vector<32x3xf32>
    %c0_2 = arith.constant 0 : index
    %c896 = arith.constant 896 : index
    %9 = vector.load %arg18[%c0_2, %c896] : memref<32x1024xf32, #tpu.memory_space<vmem>>, vector<32x3xf32>
    tpu.vector_store %arg18[%c0_2, %c896], %8 {strides = array<i32>} : memref<32x1024xf32, #tpu.memory_space<vmem>>, vector<32x3xf32>,
    %c0_3 = arith.constant 0 : index
    %c0_4 = arith.constant 0 : index
    %c0_5 = arith.constant 0 : index
    %c122 = arith.constant 122 : index
    %10 = vector.load %arg3[%c0_3, %c0_4, %c0_5, %c122] : memref<1x1x32x128xf32, #tpu.memory_space<vmem>>, vector<1x1x32x6xf32>
    %11 = vector.shape_cast %10 : vector<1x1x32x6xf32> to vector<32x6xf32>
    %12 = vector.broadcast %2 : f32 to vector<32x6xf32>
    %13 = arith.mulf %11, %12 : vector<32x6xf32>
    %c0_6 = arith.constant 0 : index
    %c128 = arith.constant 128 : index
    %14 = vector.load %arg18[%c0_6, %c128] : memref<32x1024xf32, #tpu.memory_space<vmem>>, vector<32x6xf32>
    tpu.vector_store %arg18[%c0_6, %c128], %13 {strides = array<i32>} : memref<32x1024xf32, #tpu.memory_space<vmem>>, vector<32x6xf32>,
    %c0_7 = arith.constant 0 : index
    %c0_8 = arith.constant 0 : index
    %c0_9 = arith.constant 0 : index
    %c0_10 = arith.constant 0 : index
    %15 = vector.load %arg4[%c0_7, %c0_8, %c0_9, %c0_10] : memref<1x1x32x640xf32, #tpu.memory_space<vmem>>, vector<1x1x32x640xf32>
    %16 = vector.shape_cast %15 : vector<1x1x32x640xf32> to vector<32x640xf32>
    %c0_11 = arith.constant 0 : index
    %c134 = arith.constant 134 : index
    %17 = vector.load %arg18[%c0_11, %c134] : memref<32x1024xf32, #tpu.memory_space<vmem>>, vector<32x640xf32>
    tpu.vector_store %arg18[%c0_11, %c134], %16 {strides = array<i32>} : memref<32x1024xf32, #tpu.memory_space<vmem>>, vector<32x640xf32>,
    %c0_12 = arith.constant 0 : index
    %c0_13 = arith.constant 0 : index
    %c0_14 = arith.constant 0 : index
    %c0_15 = arith.constant 0 : index
    %18 = vector.load %arg5[%c0_12, %c0_13, %c0_14, %c0_15] : memref<1x1x32x128xf32, #tpu.memory_space<vmem>>, vector<1x1x32x6xf32>
    %19 = vector.shape_cast %18 : vector<1x1x32x6xf32> to vector<32x6xf32>
    %20 = vector.broadcast %5 : f32 to vector<32x6xf32>
    %21 = arith.mulf %19, %20 : vector<32x6xf32>
    %c0_16 = arith.constant 0 : index
    %c774 = arith.constant 774 : index
    %22 = vector.load %arg18[%c0_16, %c774] : memref<32x1024xf32, #tpu.memory_space<vmem>>, vector<32x6xf32>
    tpu.vector_store %arg18[%c0_16, %c774], %21 {strides = array<i32>} : memref<32x1024xf32, #tpu.memory_space<vmem>>, vector<32x6xf32>,
    %cst_17 = arith.constant 0.000000e+00 : f32
    %23 = vector.broadcast %cst_17 : f32 to vector<32x116xf32>
    %c0_18 = arith.constant 0 : index
    %c780 = arith.constant 780 : index
    %24 = vector.load %arg18[%c0_18, %c780] : memref<32x1024xf32, #tpu.memory_space<vmem>>, vector<32x116xf32>
    tpu.vector_store %arg18[%c0_18, %c780], %23 {strides = array<i32>} : memref<32x1024xf32, #tpu.memory_space<vmem>>, vector<32x116xf32>,
    %c0_19 = arith.constant 0 : index
    %c0_20 = arith.constant 0 : index
    %c122_21 = arith.constant 122 : index
    %25 = vector.load %arg6[%c0_19, %c0_20, %c122_21] : memref<1x1x128xf32, #tpu.memory_space<vmem>>, vector<1x1x6xf32>
    %26 = vector.shape_cast %25 : vector<1x1x6xf32> to vector<1x6xf32>
    %27 = vector.broadcast %2 : f32 to vector<1x6xf32>
    %28 = arith.mulf %26, %27 : vector<1x6xf32>
    %c0_22 = arith.constant 0 : index
    %c0_23 = arith.constant 0 : index
    %29 = vector.load %arg19[%c0_22, %c0_23] : memref<1x768xf32, #tpu.memory_space<vmem>>, vector<1x6xf32>
    tpu.vector_store %arg19[%c0_22, %c0_23], %28 {strides = array<i32>} : memref<1x768xf32, #tpu.memory_space<vmem>>, vector<1x6xf32>,
    %c0_24 = arith.constant 0 : index
    %c0_25 = arith.constant 0 : index
    %c0_26 = arith.constant 0 : index
    %30 = vector.load %arg7[%c0_24, %c0_25, %c0_26] : memref<1x1x640xf32, #tpu.memory_space<vmem>>, vector<1x1x640xf32>
    %31 = vector.shape_cast %30 : vector<1x1x640xf32> to vector<1x640xf32>
    %c0_27 = arith.constant 0 : index
    %c6 = arith.constant 6 : index
    %32 = vector.load %arg19[%c0_27, %c6] : memref<1x768xf32, #tpu.memory_space<vmem>>, vector<1x640xf32>
    tpu.vector_store %arg19[%c0_27, %c6], %31 {strides = array<i32>} : memref<1x768xf32, #tpu.memory_space<vmem>>, vector<1x640xf32>,
    %c0_28 = arith.constant 0 : index
    %c0_29 = arith.constant 0 : index
    %c0_30 = arith.constant 0 : index
    %33 = vector.load %arg8[%c0_28, %c0_29, %c0_30] : memref<1x1x128xf32, #tpu.memory_space<vmem>>, vector<1x1x6xf32>
    %34 = vector.shape_cast %33 : vector<1x1x6xf32> to vector<1x6xf32>
    %35 = vector.broadcast %5 : f32 to vector<1x6xf32>
    %36 = arith.mulf %34, %35 : vector<1x6xf32>
    %c0_31 = arith.constant 0 : index
    %c646 = arith.constant 646 : index
    %37 = vector.load %arg19[%c0_31, %c646] : memref<1x768xf32, #tpu.memory_space<vmem>>, vector<1x6xf32>
    tpu.vector_store %arg19[%c0_31, %c646], %36 {strides = array<i32>} : memref<1x768xf32, #tpu.memory_space<vmem>>, vector<1x6xf32>,
    %cst_32 = arith.constant 0.000000e+00 : f32
    %38 = vector.broadcast %cst_32 : f32 to vector<1x116xf32>
    %c0_33 = arith.constant 0 : index
    %c652 = arith.constant 652 : index
    %39 = vector.load %arg19[%c0_33, %c652] : memref<1x768xf32, #tpu.memory_space<vmem>>, vector<1x116xf32>
    tpu.vector_store %arg19[%c0_33, %c652], %38 {strides = array<i32>} : memref<1x768xf32, #tpu.memory_space<vmem>>, vector<1x116xf32>,
    %c0_34 = arith.constant 0 : index
    %c0_35 = arith.constant 0 : index
    %40 = vector.load %arg19[%c0_34, %c0_35] : memref<1x768xf32, #tpu.memory_space<vmem>>, vector<1x768xf32>
    %41 = vector.shape_cast %40 : vector<1x768xf32> to vector<1x768xf32>
    %42 = vector.broadcast %41 : vector<1x768xf32> to vector<32x768xf32>
    %c0_36 = arith.constant 0 : index
    %c128_37 = arith.constant 128 : index
    %43 = vector.load %arg18[%c0_36, %c128_37] : memref<32x1024xf32, #tpu.memory_space<vmem>>, vector<32x768xf32>
    %c0_38 = arith.constant 0 : index
    %c127 = arith.constant 127 : index
    %44 = vector.load %arg18[%c0_38, %c127] : memref<32x1024xf32, #tpu.memory_space<vmem>>, vector<32x768xf32>
    %45 = arith.truncf %44 : vector<32x768xf32> to vector<32x768xbf16>
    %46 = arith.truncf %43 : vector<32x768xf32> to vector<32x768xbf16>
    %c0_39 = arith.constant 0 : index
    %c129 = arith.constant 129 : index
    %47 = vector.load %arg18[%c0_39, %c129] : memref<32x1024xf32, #tpu.memory_space<vmem>>, vector<32x768xf32>
    %48 = arith.truncf %47 : vector<32x768xf32> to vector<32x768xbf16>
    %c0_40 = arith.constant 0 : index
    %c0_41 = arith.constant 0 : index
    %c0_42 = arith.constant 0 : index
    %c0_43 = arith.constant 0 : index
    %49 = vector.load %arg9[%c0_40, %c0_41, %c0_42, %c0_43] : memref<1x9x32x32xbf16, #tpu.memory_space<vmem>>, vector<1x1x32x32xbf16>
    %50 = vector.shape_cast %49 : vector<1x1x32x32xbf16> to vector<32x32xbf16>
    %cst_44 = arith.constant dense<0.000000e+00> : vector<32x768xf32>
    %51 = tpu.matmul %50, %45, %cst_44 {dimension_numbers = #tpu.dot_dimension_numbers<[1], [0], [0], [1], [0, 0, 1, 1], [], []>} : vector<32x32xbf16>, vector<32x768xbf16>, vector<32x768xf32> -> vector<32x768xf32>
    %c0_45 = arith.constant 0 : index
    %c1 = arith.constant 1 : index
    %c0_46 = arith.constant 0 : index
    %c0_47 = arith.constant 0 : index
    %52 = vector.load %arg9[%c0_45, %c1, %c0_46, %c0_47] : memref<1x9x32x32xbf16, #tpu.memory_space<vmem>>, vector<1x1x32x32xbf16>
    %53 = vector.shape_cast %52 : vector<1x1x32x32xbf16> to vector<32x32xbf16>
    %cst_48 = arith.constant dense<0.000000e+00> : vector<32x768xf32>
    %54 = tpu.matmul %53, %46, %cst_48 {dimension_numbers = #tpu.dot_dimension_numbers<[1], [0], [0], [1], [0, 0, 1, 1], [], []>} : vector<32x32xbf16>, vector<32x768xbf16>, vector<32x768xf32> -> vector<32x768xf32>
    %55 = arith.addf %51, %54 : vector<32x768xf32>
    %c0_49 = arith.constant 0 : index
    %c2 = arith.constant 2 : index
    %c0_50 = arith.constant 0 : index
    %c0_51 = arith.constant 0 : index
    %56 = vector.load %arg9[%c0_49, %c2, %c0_50, %c0_51] : memref<1x9x32x32xbf16, #tpu.memory_space<vmem>>, vector<1x1x32x32xbf16>
    %57 = vector.shape_cast %56 : vector<1x1x32x32xbf16> to vector<32x32xbf16>
    %cst_52 = arith.constant dense<0.000000e+00> : vector<32x768xf32>
    %58 = tpu.matmul %57, %48, %cst_52 {dimension_numbers = #tpu.dot_dimension_numbers<[1], [0], [0], [1], [0, 0, 1, 1], [], []>} : vector<32x32xbf16>, vector<32x768xbf16>, vector<32x768xf32> -> vector<32x768xf32>
    %59 = arith.addf %55, %58 : vector<32x768xf32>
    %c0_53 = arith.constant 0 : index
    %c0_54 = arith.constant 0 : index
    %c0_55 = arith.constant 0 : index
    %c0_56 = arith.constant 0 : index
    %60 = vector.load %arg10[%c0_53, %c0_54, %c0_55, %c0_56] : memref<1x3x32x1xf32, #tpu.memory_space<vmem>>, vector<1x1x32x1xf32>
    %61 = vector.shape_cast %60 : vector<1x1x32x1xf32> to vector<32x1xf32>
    %62 = vector.broadcast %61 : vector<32x1xf32> to vector<32x768xf32>
    %63 = arith.addf %59, %62 : vector<32x768xf32>
    %cst_57 = arith.constant 0.000000e+00 : f32
    %64 = vector.broadcast %cst_57 : f32 to vector<32x768xf32>
    %65 = arith.maximumf %63, %64 : vector<32x768xf32>
    %66 = arith.truncf %65 : vector<32x768xf32> to vector<32x768xbf16>
    %c0_58 = arith.constant 0 : index
    %c0_59 = arith.constant 0 : index
    %c0_60 = arith.constant 0 : index
    %c0_61 = arith.constant 0 : index
    %67 = vector.load %arg11[%c0_58, %c0_59, %c0_60, %c0_61] : memref<1x3x32x32xbf16, #tpu.memory_space<vmem>>, vector<1x1x32x32xbf16>
    %68 = vector.shape_cast %67 : vector<1x1x32x32xbf16> to vector<32x32xbf16>
    %cst_62 = arith.constant dense<0.000000e+00> : vector<32x768xf32>
    %69 = tpu.matmul %68, %66, %cst_62 {dimension_numbers = #tpu.dot_dimension_numbers<[1], [0], [0], [1], [0, 0, 1, 1], [], []>} : vector<32x32xbf16>, vector<32x768xbf16>, vector<32x768xf32> -> vector<32x768xf32>
    %c0_63 = arith.constant 0 : index
    %c0_64 = arith.constant 0 : index
    %c0_65 = arith.constant 0 : index
    %c0_66 = arith.constant 0 : index
    %70 = vector.load %arg12[%c0_63, %c0_64, %c0_65, %c0_66] : memref<1x3x32x1xf32, #tpu.memory_space<vmem>>, vector<1x1x32x1xf32>
    %71 = vector.shape_cast %70 : vector<1x1x32x1xf32> to vector<32x1xf32>
    %72 = vector.broadcast %71 : vector<32x1xf32> to vector<32x768xf32>
    %73 = arith.addf %69, %72 : vector<32x768xf32>
    %74 = arith.addf %73, %43 : vector<32x768xf32>
    %75 = arith.mulf %74, %42 : vector<32x768xf32>
    %c0_67 = arith.constant 0 : index
    %c128_68 = arith.constant 128 : index
    %76 = vector.load %arg18[%c0_67, %c128_68] : memref<32x1024xf32, #tpu.memory_space<vmem>>, vector<32x768xf32>
    tpu.vector_store %arg18[%c0_67, %c128_68], %75 {strides = array<i32>} : memref<32x1024xf32, #tpu.memory_space<vmem>>, vector<32x768xf32>,
    %c0_69 = arith.constant 0 : index
    %c128_70 = arith.constant 128 : index
    %77 = vector.load %arg18[%c0_69, %c128_70] : memref<32x1024xf32, #tpu.memory_space<vmem>>, vector<32x768xf32>
    %c0_71 = arith.constant 0 : index
    %c126 = arith.constant 126 : index
    %78 = vector.load %arg18[%c0_71, %c126] : memref<32x1024xf32, #tpu.memory_space<vmem>>, vector<32x768xf32>
    %79 = arith.truncf %78 : vector<32x768xf32> to vector<32x768xbf16>
    %80 = arith.truncf %77 : vector<32x768xf32> to vector<32x768xbf16>
    %c0_72 = arith.constant 0 : index
    %c130 = arith.constant 130 : index
    %81 = vector.load %arg18[%c0_72, %c130] : memref<32x1024xf32, #tpu.memory_space<vmem>>, vector<32x768xf32>
    %82 = arith.truncf %81 : vector<32x768xf32> to vector<32x768xbf16>
    %c0_73 = arith.constant 0 : index
    %c3 = arith.constant 3 : index
    %c0_74 = arith.constant 0 : index
    %c0_75 = arith.constant 0 : index
    %83 = vector.load %arg9[%c0_73, %c3, %c0_74, %c0_75] : memref<1x9x32x32xbf16, #tpu.memory_space<vmem>>, vector<1x1x32x32xbf16>
    %84 = vector.shape_cast %83 : vector<1x1x32x32xbf16> to vector<32x32xbf16>
    %cst_76 = arith.constant dense<0.000000e+00> : vector<32x768xf32>
    %85 = tpu.matmul %84, %79, %cst_76 {dimension_numbers = #tpu.dot_dimension_numbers<[1], [0], [0], [1], [0, 0, 1, 1], [], []>} : vector<32x32xbf16>, vector<32x768xbf16>, vector<32x768xf32> -> vector<32x768xf32>
    %c0_77 = arith.constant 0 : index
    %c4 = arith.constant 4 : index
    %c0_78 = arith.constant 0 : index
    %c0_79 = arith.constant 0 : index
    %86 = vector.load %arg9[%c0_77, %c4, %c0_78, %c0_79] : memref<1x9x32x32xbf16, #tpu.memory_space<vmem>>, vector<1x1x32x32xbf16>
    %87 = vector.shape_cast %86 : vector<1x1x32x32xbf16> to vector<32x32xbf16>
    %cst_80 = arith.constant dense<0.000000e+00> : vector<32x768xf32>
    %88 = tpu.matmul %87, %80, %cst_80 {dimension_numbers = #tpu.dot_dimension_numbers<[1], [0], [0], [1], [0, 0, 1, 1], [], []>} : vector<32x32xbf16>, vector<32x768xbf16>, vector<32x768xf32> -> vector<32x768xf32>
    %89 = arith.addf %85, %88 : vector<32x768xf32>
    %c0_81 = arith.constant 0 : index
    %c5 = arith.constant 5 : index
    %c0_82 = arith.constant 0 : index
    %c0_83 = arith.constant 0 : index
    %90 = vector.load %arg9[%c0_81, %c5, %c0_82, %c0_83] : memref<1x9x32x32xbf16, #tpu.memory_space<vmem>>, vector<1x1x32x32xbf16>
    %91 = vector.shape_cast %90 : vector<1x1x32x32xbf16> to vector<32x32xbf16>
    %cst_84 = arith.constant dense<0.000000e+00> : vector<32x768xf32>
    %92 = tpu.matmul %91, %82, %cst_84 {dimension_numbers = #tpu.dot_dimension_numbers<[1], [0], [0], [1], [0, 0, 1, 1], [], []>} : vector<32x32xbf16>, vector<32x768xbf16>, vector<32x768xf32> -> vector<32x768xf32>
    %93 = arith.addf %89, %92 : vector<32x768xf32>
    %c0_85 = arith.constant 0 : index
    %c1_86 = arith.constant 1 : index
    %c0_87 = arith.constant 0 : index
    %c0_88 = arith.constant 0 : index
    %94 = vector.load %arg10[%c0_85, %c1_86, %c0_87, %c0_88] : memref<1x3x32x1xf32, #tpu.memory_space<vmem>>, vector<1x1x32x1xf32>
    %95 = vector.shape_cast %94 : vector<1x1x32x1xf32> to vector<32x1xf32>
    %96 = vector.broadcast %95 : vector<32x1xf32> to vector<32x768xf32>
    %97 = arith.addf %93, %96 : vector<32x768xf32>
    %cst_89 = arith.constant 0.000000e+00 : f32
    %98 = vector.broadcast %cst_89 : f32 to vector<32x768xf32>
    %99 = arith.maximumf %97, %98 : vector<32x768xf32>
    %100 = arith.truncf %99 : vector<32x768xf32> to vector<32x768xbf16>
    %c0_90 = arith.constant 0 : index
    %c1_91 = arith.constant 1 : index
    %c0_92 = arith.constant 0 : index
    %c0_93 = arith.constant 0 : index
    %101 = vector.load %arg11[%c0_90, %c1_91, %c0_92, %c0_93] : memref<1x3x32x32xbf16, #tpu.memory_space<vmem>>, vector<1x1x32x32xbf16>
    %102 = vector.shape_cast %101 : vector<1x1x32x32xbf16> to vector<32x32xbf16>
    %cst_94 = arith.constant dense<0.000000e+00> : vector<32x768xf32>
    %103 = tpu.matmul %102, %100, %cst_94 {dimension_numbers = #tpu.dot_dimension_numbers<[1], [0], [0], [1], [0, 0, 1, 1], [], []>} : vector<32x32xbf16>, vector<32x768xbf16>, vector<32x768xf32> -> vector<32x768xf32>
    %c0_95 = arith.constant 0 : index
    %c1_96 = arith.constant 1 : index
    %c0_97 = arith.constant 0 : index
    %c0_98 = arith.constant 0 : index
    %104 = vector.load %arg12[%c0_95, %c1_96, %c0_97, %c0_98] : memref<1x3x32x1xf32, #tpu.memory_space<vmem>>, vector<1x1x32x1xf32>
    %105 = vector.shape_cast %104 : vector<1x1x32x1xf32> to vector<32x1xf32>
    %106 = vector.broadcast %105 : vector<32x1xf32> to vector<32x768xf32>
    %107 = arith.addf %103, %106 : vector<32x768xf32>
    %108 = arith.addf %107, %77 : vector<32x768xf32>
    %109 = arith.mulf %108, %42 : vector<32x768xf32>
    %c0_99 = arith.constant 0 : index
    %c128_100 = arith.constant 128 : index
    %110 = vector.load %arg18[%c0_99, %c128_100] : memref<32x1024xf32, #tpu.memory_space<vmem>>, vector<32x768xf32>
    tpu.vector_store %arg18[%c0_99, %c128_100], %109 {strides = array<i32>} : memref<32x1024xf32, #tpu.memory_space<vmem>>, vector<32x768xf32>,
    %c0_101 = arith.constant 0 : index
    %c128_102 = arith.constant 128 : index
    %111 = vector.load %arg18[%c0_101, %c128_102] : memref<32x1024xf32, #tpu.memory_space<vmem>>, vector<32x768xf32>
    %c0_103 = arith.constant 0 : index
    %c125_104 = arith.constant 125 : index
    %112 = vector.load %arg18[%c0_103, %c125_104] : memref<32x1024xf32, #tpu.memory_space<vmem>>, vector<32x768xf32>
    %113 = arith.truncf %112 : vector<32x768xf32> to vector<32x768xbf16>
    %114 = arith.truncf %111 : vector<32x768xf32> to vector<32x768xbf16>
    %c0_105 = arith.constant 0 : index
    %c131 = arith.constant 131 : index
    %115 = vector.load %arg18[%c0_105, %c131] : memref<32x1024xf32, #tpu.memory_space<vmem>>, vector<32x768xf32>
    %116 = arith.truncf %115 : vector<32x768xf32> to vector<32x768xbf16>
    %c0_106 = arith.constant 0 : index
    %c6_107 = arith.constant 6 : index
    %c0_108 = arith.constant 0 : index
    %c0_109 = arith.constant 0 : index
    %117 = vector.load %arg9[%c0_106, %c6_107, %c0_108, %c0_109] : memref<1x9x32x32xbf16, #tpu.memory_space<vmem>>, vector<1x1x32x32xbf16>
    %118 = vector.shape_cast %117 : vector<1x1x32x32xbf16> to vector<32x32xbf16>
    %cst_110 = arith.constant dense<0.000000e+00> : vector<32x768xf32>
    %119 = tpu.matmul %118, %113, %cst_110 {dimension_numbers = #tpu.dot_dimension_numbers<[1], [0], [0], [1], [0, 0, 1, 1], [], []>} : vector<32x32xbf16>, vector<32x768xbf16>, vector<32x768xf32> -> vector<32x768xf32>
    %c0_111 = arith.constant 0 : index
    %c7 = arith.constant 7 : index
    %c0_112 = arith.constant 0 : index
    %c0_113 = arith.constant 0 : index
    %120 = vector.load %arg9[%c0_111, %c7, %c0_112, %c0_113] : memref<1x9x32x32xbf16, #tpu.memory_space<vmem>>, vector<1x1x32x32xbf16>
    %121 = vector.shape_cast %120 : vector<1x1x32x32xbf16> to vector<32x32xbf16>
    %cst_114 = arith.constant dense<0.000000e+00> : vector<32x768xf32>
    %122 = tpu.matmul %121, %114, %cst_114 {dimension_numbers = #tpu.dot_dimension_numbers<[1], [0], [0], [1], [0, 0, 1, 1], [], []>} : vector<32x32xbf16>, vector<32x768xbf16>, vector<32x768xf32> -> vector<32x768xf32>
    %123 = arith.addf %119, %122 : vector<32x768xf32>
    %c0_115 = arith.constant 0 : index
    %c8 = arith.constant 8 : index
    %c0_116 = arith.constant 0 : index
    %c0_117 = arith.constant 0 : index
    %124 = vector.load %arg9[%c0_115, %c8, %c0_116, %c0_117] : memref<1x9x32x32xbf16, #tpu.memory_space<vmem>>, vector<1x1x32x32xbf16>
    %125 = vector.shape_cast %124 : vector<1x1x32x32xbf16> to vector<32x32xbf16>
    %cst_118 = arith.constant dense<0.000000e+00> : vector<32x768xf32>
    %126 = tpu.matmul %125, %116, %cst_118 {dimension_numbers = #tpu.dot_dimension_numbers<[1], [0], [0], [1], [0, 0, 1, 1], [], []>} : vector<32x32xbf16>, vector<32x768xbf16>, vector<32x768xf32> -> vector<32x768xf32>
    %127 = arith.addf %123, %126 : vector<32x768xf32>
    %c0_119 = arith.constant 0 : index
    %c2_120 = arith.constant 2 : index
    %c0_121 = arith.constant 0 : index
    %c0_122 = arith.constant 0 : index
    %128 = vector.load %arg10[%c0_119, %c2_120, %c0_121, %c0_122] : memref<1x3x32x1xf32, #tpu.memory_space<vmem>>, vector<1x1x32x1xf32>
    %129 = vector.shape_cast %128 : vector<1x1x32x1xf32> to vector<32x1xf32>
    %130 = vector.broadcast %129 : vector<32x1xf32> to vector<32x768xf32>
    %131 = arith.addf %127, %130 : vector<32x768xf32>
    %cst_123 = arith.constant 0.000000e+00 : f32
    %132 = vector.broadcast %cst_123 : f32 to vector<32x768xf32>
    %133 = arith.maximumf %131, %132 : vector<32x768xf32>
    %134 = arith.truncf %133 : vector<32x768xf32> to vector<32x768xbf16>
    %c0_124 = arith.constant 0 : index
    %c2_125 = arith.constant 2 : index
    %c0_126 = arith.constant 0 : index
    %c0_127 = arith.constant 0 : index
    %135 = vector.load %arg11[%c0_124, %c2_125, %c0_126, %c0_127] : memref<1x3x32x32xbf16, #tpu.memory_space<vmem>>, vector<1x1x32x32xbf16>
    %136 = vector.shape_cast %135 : vector<1x1x32x32xbf16> to vector<32x32xbf16>
    %cst_128 = arith.constant dense<0.000000e+00> : vector<32x768xf32>
    %137 = tpu.matmul %136, %134, %cst_128 {dimension_numbers = #tpu.dot_dimension_numbers<[1], [0], [0], [1], [0, 0, 1, 1], [], []>} : vector<32x32xbf16>, vector<32x768xbf16>, vector<32x768xf32> -> vector<32x768xf32>
    %c0_129 = arith.constant 0 : index
    %c2_130 = arith.constant 2 : index
    %c0_131 = arith.constant 0 : index
    %c0_132 = arith.constant 0 : index
    %138 = vector.load %arg12[%c0_129, %c2_130, %c0_131, %c0_132] : memref<1x3x32x1xf32, #tpu.memory_space<vmem>>, vector<1x1x32x1xf32>
    %139 = vector.shape_cast %138 : vector<1x1x32x1xf32> to vector<32x1xf32>
    %140 = vector.broadcast %139 : vector<32x1xf32> to vector<32x768xf32>
    %141 = arith.addf %137, %140 : vector<32x768xf32>
    %142 = arith.addf %141, %111 : vector<32x768xf32>
    %143 = arith.mulf %142, %42 : vector<32x768xf32>
    %c0_133 = arith.constant 0 : index
    %c128_134 = arith.constant 128 : index
    %144 = vector.load %arg18[%c0_133, %c128_134] : memref<32x1024xf32, #tpu.memory_space<vmem>>, vector<32x768xf32>
    tpu.vector_store %arg18[%c0_133, %c128_134], %143 {strides = array<i32>} : memref<32x1024xf32, #tpu.memory_space<vmem>>, vector<32x768xf32>,
    %c0_135 = arith.constant 0 : index
    %c134_136 = arith.constant 134 : index
    %145 = vector.load %arg18[%c0_135, %c134_136] : memref<32x1024xf32, #tpu.memory_space<vmem>>, vector<32x640xf32>
    %146 = arith.truncf %145 : vector<32x640xf32> to vector<32x640xbf16>
    %c0_137 = arith.constant 0 : index
    %c0_138 = arith.constant 0 : index
    %c0_139 = arith.constant 0 : index
    %147 = vector.load %arg7[%c0_137, %c0_138, %c0_139] : memref<1x1x640xf32, #tpu.memory_space<vmem>>, vector<1x1x640xf32>
    %148 = vector.shape_cast %147 : vector<1x1x640xf32> to vector<1x640xf32>
    %c0_140 = arith.constant 0 : index
    %c0_141 = arith.constant 0 : index
    %c0_142 = arith.constant 0 : index
    %149 = vector.load %arg13[%c0_140, %c0_141, %c0_142] : memref<1x16x32xbf16, #tpu.memory_space<vmem>>, vector<1x16x32xbf16>
    %150 = vector.shape_cast %149 : vector<1x16x32xbf16> to vector<16x32xbf16>
    %cst_143 = arith.constant dense<0.000000e+00> : vector<16x640xf32>
    %151 = tpu.matmul %150, %146, %cst_143 {dimension_numbers = #tpu.dot_dimension_numbers<[1], [0], [0], [1], [0, 0, 1, 1], [], []>} : vector<16x32xbf16>, vector<32x640xbf16>, vector<16x640xf32> -> vector<16x640xf32>
    %c0_144 = arith.constant 0 : index
    %c0_145 = arith.constant 0 : index
    %c0_146 = arith.constant 0 : index
    %152 = vector.load %arg14[%c0_144, %c0_145, %c0_146] : memref<1x16x1xf32, #tpu.memory_space<vmem>>, vector<1x16x1xf32>
    %153 = vector.shape_cast %152 : vector<1x16x1xf32> to vector<16x1xf32>
    %154 = vector.broadcast %153 : vector<16x1xf32> to vector<16x640xf32>
    %155 = arith.addf %151, %154 : vector<16x640xf32>
    %156 = vector.broadcast %148 : vector<1x640xf32> to vector<16x640xf32>
    %157 = arith.mulf %155, %156 : vector<16x640xf32>
    %c0_147 = arith.constant 0 : index
    %c0_148 = arith.constant 0 : index
    %c0_149 = arith.constant 0 : index
    %158 = vector.load %arg15[%c0_147, %c0_148, %c0_149] : memref<1x16x16xbf16, #tpu.memory_space<vmem>>, vector<1x16x16xbf16>
    %159 = vector.shape_cast %158 : vector<1x16x16xbf16> to vector<16x16xbf16>
    %160 = arith.truncf %157 : vector<16x640xf32> to vector<16x640xbf16>
    %cst_150 = arith.constant dense<0.000000e+00> : vector<16x640xf32>
    %161 = tpu.matmul %159, %160, %cst_150 {dimension_numbers = #tpu.dot_dimension_numbers<[1], [0], [0], [1], [0, 0, 1, 1], [], []>} : vector<16x16xbf16>, vector<16x640xbf16>, vector<16x640xf32> -> vector<16x640xf32>
    %c0_151 = arith.constant 0 : index
    %c0_152 = arith.constant 0 : index
    %c0_153 = arith.constant 0 : index
    %162 = vector.load %arg16[%c0_151, %c0_152, %c0_153] : memref<1x16x1xf32, #tpu.memory_space<vmem>>, vector<1x16x1xf32>
    %163 = vector.shape_cast %162 : vector<1x16x1xf32> to vector<16x1xf32>
    %164 = vector.broadcast %163 : vector<16x1xf32> to vector<16x640xf32>
    %165 = arith.addf %161, %164 : vector<16x640xf32>
    %166 = vector.broadcast %148 : vector<1x640xf32> to vector<16x640xf32>
    %167 = arith.mulf %165, %166 : vector<16x640xf32>
    %c0_154 = arith.constant 0 : index
    %c0_155 = arith.constant 0 : index
    %c0_156 = arith.constant 0 : index
    %c0_157 = arith.constant 0 : index
    %168 = vector.load %arg17[%c0_154, %c0_155, %c0_156, %c0_157] : memref<1x1x16x640xf32, #tpu.memory_space<vmem>>, vector<1x1x16x640xf32>
    %169 = vector.shape_cast %168 : vector<1x1x16x640xf32> to vector<16x640xf32>
    %170 = vector.shape_cast %167 : vector<16x640xf32> to vector<1x1x16x640xf32>
    tpu.vector_store %arg17[%c0_154, %c0_155, %c0_156, %c0_157], %170 {strides = array<i32>} : memref<1x1x16x640xf32, #tpu.memory_space<vmem>>, vector<1x1x16x640xf32>,
    return
  }
  func.func @transform_0(%arg0: i32, %arg1: i32, %arg2: i32) -> (i32, i32, i32, i32) {
    %c5_i32 = arith.constant 5 : i32
    %0 = arith.muli %arg2, %c5_i32 : i32
    %c1_i32 = arith.constant 1 : i32
    %1 = arith.subi %0, %c1_i32 : i32
    %c0_i32 = arith.constant 0 : i32
    %2 = arith.maxsi %1, %c0_i32 : i32
    %c0_i32_0 = arith.constant 0 : i32
    %c0_i32_1 = arith.constant 0 : i32
    return %arg0, %arg1, %c0_i32_0, %2 : i32, i32, i32, i32
  }
  func.func @transform_1(%arg0: i32, %arg1: i32, %arg2: i32) -> (i32, i32, i32, i32) {
    %c0_i32 = arith.constant 0 : i32
    %c0_i32_0 = arith.constant 0 : i32
    return %arg0, %arg1, %c0_i32, %arg2 : i32, i32, i32, i32
  }
  func.func @transform_2(%arg0: i32, %arg1: i32, %arg2: i32) -> (i32, i32, i32, i32) {
    %c1_i32 = arith.constant 1 : i32
    %0 = arith.addi %arg2, %c1_i32 : i32
    %c5_i32 = arith.constant 5 : i32
    %1 = arith.muli %0, %c5_i32 : i32
    %c4_i32 = arith.constant 4 : i32
    %2 = arith.minsi %1, %c4_i32 : i32
    %c0_i32 = arith.constant 0 : i32
    %c0_i32_0 = arith.constant 0 : i32
    return %arg0, %arg1, %c0_i32, %2 : i32, i32, i32, i32
  }
  func.func @transform_3(%arg0: i32, %arg1: i32, %arg2: i32) -> (i32, i32, i32) {
    %c5_i32 = arith.constant 5 : i32
    %0 = arith.muli %arg2, %c5_i32 : i32
    %c1_i32 = arith.constant 1 : i32
    %1 = arith.subi %0, %c1_i32 : i32
    %c0_i32 = arith.constant 0 : i32
    %2 = arith.maxsi %1, %c0_i32 : i32
    %c0_i32_0 = arith.constant 0 : i32
    %c0_i32_1 = arith.constant 0 : i32
    return %arg1, %c0_i32_0, %2 : i32, i32, i32
  }
  func.func @transform_4(%arg0: i32, %arg1: i32, %arg2: i32) -> (i32, i32, i32) {
    %c0_i32 = arith.constant 0 : i32
    %c0_i32_0 = arith.constant 0 : i32
    return %arg1, %c0_i32, %arg2 : i32, i32, i32
  }
  func.func @transform_5(%arg0: i32, %arg1: i32, %arg2: i32) -> (i32, i32, i32) {
    %c1_i32 = arith.constant 1 : i32
    %0 = arith.addi %arg2, %c1_i32 : i32
    %c5_i32 = arith.constant 5 : i32
    %1 = arith.muli %0, %c5_i32 : i32
    %c4_i32 = arith.constant 4 : i32
    %2 = arith.minsi %1, %c4_i32 : i32
    %c0_i32 = arith.constant 0 : i32
    %c0_i32_0 = arith.constant 0 : i32
    return %arg1, %c0_i32, %2 : i32, i32, i32
  }
  func.func @transform_6(%arg0: i32, %arg1: i32, %arg2: i32) -> (i32, i32, i32, i32) {
    %c0_i32 = arith.constant 0 : i32
    %c0_i32_0 = arith.constant 0 : i32
    %c0_i32_1 = arith.constant 0 : i32
    %c0_i32_2 = arith.constant 0 : i32
    return %arg0, %c0_i32, %c0_i32_0, %c0_i32_1 : i32, i32, i32, i32
  }
  func.func @transform_7(%arg0: i32, %arg1: i32, %arg2: i32) -> (i32, i32, i32, i32) {
    %c0_i32 = arith.constant 0 : i32
    %c0_i32_0 = arith.constant 0 : i32
    %c0_i32_1 = arith.constant 0 : i32
    %c0_i32_2 = arith.constant 0 : i32
    return %arg0, %c0_i32, %c0_i32_0, %c0_i32_1 : i32, i32, i32, i32
  }
  func.func @transform_8(%arg0: i32, %arg1: i32, %arg2: i32) -> (i32, i32, i32, i32) {
    %c0_i32 = arith.constant 0 : i32
    %c0_i32_0 = arith.constant 0 : i32
    %c0_i32_1 = arith.constant 0 : i32
    %c0_i32_2 = arith.constant 0 : i32
    return %arg0, %c0_i32, %c0_i32_0, %c0_i32_1 : i32, i32, i32, i32
  }
  func.func @transform_9(%arg0: i32, %arg1: i32, %arg2: i32) -> (i32, i32, i32, i32) {
    %c0_i32 = arith.constant 0 : i32
    %c0_i32_0 = arith.constant 0 : i32
    %c0_i32_1 = arith.constant 0 : i32
    %c0_i32_2 = arith.constant 0 : i32
    return %arg0, %c0_i32, %c0_i32_0, %c0_i32_1 : i32, i32, i32, i32
  }
  func.func @transform_10(%arg0: i32, %arg1: i32, %arg2: i32) -> (i32, i32, i32) {
    %c0_i32 = arith.constant 0 : i32
    %c0_i32_0 = arith.constant 0 : i32
    %c0_i32_1 = arith.constant 0 : i32
    return %arg0, %c0_i32, %c0_i32_0 : i32, i32, i32
  }
  func.func @transform_11(%arg0: i32, %arg1: i32, %arg2: i32) -> (i32, i32, i32) {
    %c0_i32 = arith.constant 0 : i32
    %c0_i32_0 = arith.constant 0 : i32
    %c0_i32_1 = arith.constant 0 : i32
    return %arg0, %c0_i32, %c0_i32_0 : i32, i32, i32
  }
  func.func @transform_12(%arg0: i32, %arg1: i32, %arg2: i32) -> (i32, i32, i32) {
    %c0_i32 = arith.constant 0 : i32
    %c0_i32_0 = arith.constant 0 : i32
    %c0_i32_1 = arith.constant 0 : i32
    return %arg0, %c0_i32, %c0_i32_0 : i32, i32, i32
  }
  func.func @transform_13(%arg0: i32, %arg1: i32, %arg2: i32) -> (i32, i32, i32) {
    %c0_i32 = arith.constant 0 : i32
    %c0_i32_0 = arith.constant 0 : i32
    %c0_i32_1 = arith.constant 0 : i32
    return %arg0, %c0_i32, %c0_i32_0 : i32, i32, i32
  }
  func.func @transform_14(%arg0: i32, %arg1: i32, %arg2: i32) -> (i32, i32, i32, i32) {
    %c0_i32 = arith.constant 0 : i32
    %c0_i32_0 = arith.constant 0 : i32
    return %arg0, %arg1, %c0_i32, %arg2 : i32, i32, i32, i32
  }
}

</mosaic_0001>

<llo_original>
// kernel: parallel_tcns_forward.2
$region0: #{parallel_tcns_forward.2}
  #allocation0 [shape = 'u32[]', space=smem, size = 0x4, offset = 0x4, fixed_abs, tag = 'smem constant byte address 0x4 - core index']
  #allocation1 [shape = 'u32[72,128]{1,0:T(1,128)}', space=vmem, size = 0x9000, scoped, tag = 'internal scratch']
  %s0 = inlined_call_operand.vmem [shape: bf16[2,64,640], index: 0, kind: input, shape index: {}]
  %s1 = inlined_call_operand.vmem [shape: f32[1,640], index: 1, kind: input, shape index: {}]
  %s2 = inlined_call_operand.vmem [shape: bf16[96,64], index: 2, kind: input, shape index: {}]
  %s3 = inlined_call_operand.vmem [shape: f32[96,1], index: 3, kind: input, shape index: {}]
  %s4 = inlined_call_operand.vmem [shape: f32[3,2,32,640], index: 4, kind: output, shape index: {}]
  %s5 = sld [smem:[#allocation0]]
  $region124: #{parallel_tcns_forward.2} parent=0
    _
  %s7 = ssub.s32 1, %s5
  %s8 = scalar_select 0, %s7, %s5
  $region1: #{parallel_tcns_forward.2} parent=0
    #allocation2 [shape = 'u8[32768]{0}', space=vmem, size = 0x8000, scoped, tag = 'input window, operand 0']
    #allocation3 [shape = 'u8[98304]{0}', space=vmem, size = 0x18000, scoped, tag = 'output window, operand 0']
    loop: start=0, step=1, limit=12
    $region2: #{parallel_tcns_forward.2} parent=1 // loop_pre_header
      _
    $region3: #{parallel_tcns_forward.2} parent=1 // loop_header
      %s10 = sphi 0, %s14
      %p11 = scmp.ge.s32.totalorder %s10, 12
      %s17 = sphi 0, %s29
      %s18 = sphi 0, %s25
      %s19 = sphi 0, %s17
      %s20 = sphi 0, %s18
      %s21 = sphi 0, %s19
      %s22 = sphi 0, %s20
      %s34 = sphi 0, %s36
      %s37 = sphi 0, %s34
      %s38 = sphi 0, %s37
      %s54 = sphi 0, %s38
      %s60 = sphi 0, %s62
      %s63 = sphi 0, %s60
      %s64 = sphi 0, %s63
      %s80 = sphi 0, %s64
      %s84 = sphi 0, %s84
      %s86 = sphi 0, %s84
      %s87 = sphi 0, %s86
      %s101 = sphi 0, %s87
      %s105 = sphi 0, %s105
      %s107 = sphi 0, %s105
      %s108 = sphi 0, %s107
      %s122 = sphi 0, %s108
      %s130 = sphi 0, %s132
      %s133 = sphi 0, %s130
      %s134 = sphi 0, %s133
      %s150 = sphi 0, %s134
    $region4: #{parallel_tcns_forward.2} parent=1 // loop_header_branch
      %13 = sbr.rel (%p11) target = $region8
    $region5: #{parallel_tcns_forward.2} parent=1 // loop_body
      %s15 = ssub.s32 %s10, 1
      %s16 = ssub.s32 %s10, 2
      %s23 = sadd.s32 1, %s18
      %p24 = scmp.ge.s32.totalorder %s23, 5
      %s25 = scalar_select %p24, 0, %s23
      %s26 = sadd.s32 1, %s17
      %s27 = scalar_select %p24, %s26, %s17
      %p28 = scmp.ge.s32.totalorder %s27, 2
      %s29 = scalar_select %p28, 0, %s27
      %s30 = ssub.s32 %s17, %s29
      %s31 = ssub.s32 %s18, %s25
      %s32 = sor.u32 %s30, %s31
      %p33 = scmp.eq.s32.totalorder %s32, 0
      %s35 = sadd.s32 %s34, 1
      %s36 = scalar_select %p33, %s34, %s35
      %p39 = pneg %p33
      %p40 = scmp.eq.s32.totalorder %s10, 9
      %p41 = por %p39, %p40
      %p42 = scmp.ne.s32.totalorder %s34, %s37
      %p43 = scmp.eq.s32.totalorder %s10, 0
      %p44 = por %p42, %p43
      %p45 = scmp.ne.s32.totalorder %s34, %s37
      %p46 = scmp.eq.s32.totalorder %s15, 9
      %p47 = por %p45, %p46
      %p48 = scmp.ne.s32.totalorder %s37, %s38
      %p49 = scmp.eq.s32.totalorder %s15, 0
      %p50 = por %p48, %p49
      %p51 = scmp.ne.s32.totalorder %s37, %s38
      %p52 = scmp.eq.s32.totalorder %s16, 9
      %p53 = por %p51, %p52
      %p55 = scmp.ne.s32.totalorder %s38, %s54
      %p56 = scmp.eq.s32.totalorder %s16, 0
      %p57 = por %p55, %p56
      %s58 = ssub.s32 %s18, %s25
      %p59 = scmp.eq.s32.totalorder %s58, 0
      %s61 = sadd.s32 %s60, 1
      %s62 = scalar_select %p59, %s60, %s61
      %p65 = pneg %p59
      %p66 = scmp.eq.s32.totalorder %s10, 9
      %p67 = por %p65, %p66
      %p68 = scmp.ne.s32.totalorder %s60, %s63
      %p69 = scmp.eq.s32.totalorder %s10, 0
      %p70 = por %p68, %p69
      %p71 = scmp.ne.s32.totalorder %s60, %s63
      %p72 = scmp.eq.s32.totalorder %s15, 9
      %p73 = por %p71, %p72
      %p74 = scmp.ne.s32.totalorder %s63, %s64
      %p75 = scmp.eq.s32.totalorder %s15, 0
      %p76 = por %p74, %p75
      %p77 = scmp.ne.s32.totalorder %s63, %s64
      %p78 = scmp.eq.s32.totalorder %s16, 9
      %p79 = por %p77, %p78
      %p81 = scmp.ne.s32.totalorder %s64, %s80
      %p82 = scmp.eq.s32.totalorder %s16, 0
      %p83 = por %p81, %p82
      %s85 = sadd.s32 %s84, 1
      %p88 = scmp.eq.s32.totalorder %s10, 9
      %p89 = scmp.ne.s32.totalorder %s84, %s86
      %p90 = scmp.eq.s32.totalorder %s10, 0
      %p91 = por %p89, %p90
      %p92 = scmp.ne.s32.totalorder %s84, %s86
      %p93 = scmp.eq.s32.totalorder %s15, 9
      %p94 = por %p92, %p93
      %p95 = scmp.ne.s32.totalorder %s86, %s87
      %p96 = scmp.eq.s32.totalorder %s15, 0
      %p97 = por %p95, %p96
      %p98 = scmp.ne.s32.totalorder %s86, %s87
      %p99 = scmp.eq.s32.totalorder %s16, 9
      %p100 = por %p98, %p99
      %p102 = scmp.ne.s32.totalorder %s87, %s101
      %p103 = scmp.eq.s32.totalorder %s16, 0
      %p104 = por %p102, %p103
      %s106 = sadd.s32 %s105, 1
      %p109 = scmp.eq.s32.totalorder %s10, 9
      %p110 = scmp.ne.s32.totalorder %s105, %s107
      %p111 = scmp.eq.s32.totalorder %s10, 0
      %p112 = por %p110, %p111
      %p113 = scmp.ne.s32.totalorder %s105, %s107
      %p114 = scmp.eq.s32.totalorder %s15, 9
      %p115 = por %p113, %p114
      %p116 = scmp.ne.s32.totalorder %s107, %s108
      %p117 = scmp.eq.s32.totalorder %s15, 0
      %p118 = por %p116, %p117
      %p119 = scmp.ne.s32.totalorder %s107, %s108
      %p120 = scmp.eq.s32.totalorder %s16, 9
      %p121 = por %p119, %p120
      %p123 = scmp.ne.s32.totalorder %s108, %s122
      %p124 = scmp.eq.s32.totalorder %s16, 0
      %p125 = por %p123, %p124
      %s126 = ssub.s32 %s17, %s29
      %s127 = ssub.s32 %s18, %s25
      %s128 = sor.u32 %s126, %s127
      %p129 = scmp.eq.s32.totalorder %s128, 0
      %s131 = sadd.s32 %s130, 1
      %s132 = scalar_select %p129, %s130, %s131
      %p135 = pneg %p129
      %p136 = scmp.eq.s32.totalorder %s10, 9
      %p137 = por %p135, %p136
      %p138 = scmp.ne.s32.totalorder %s130, %s133
      %p139 = scmp.eq.s32.totalorder %s10, 0
      %p140 = por %p138, %p139
      %p141 = scmp.ne.s32.totalorder %s130, %s133
      %p142 = scmp.eq.s32.totalorder %s15, 9
      %p143 = por %p141, %p142
      %p144 = scmp.ne.s32.totalorder %s133, %s134
      %p145 = scmp.eq.s32.totalorder %s15, 0
      %p146 = por %p144, %p145
      %p147 = scmp.ne.s32.totalorder %s133, %s134
      %p148 = scmp.eq.s32.totalorder %s16, 9
      %p149 = por %p147, %p148
      %p151 = scmp.ne.s32.totalorder %s134, %s150
      %p152 = scmp.eq.s32.totalorder %s16, 0
      %p153 = por %p151, %p152
      %p154 = scmp.le.s32.totalorder 1, %s10
      %p155 = scmp.lt.s32.totalorder %s10, 11
      %p156 = pnand %p154, %p155
      %p157 = pneg %p156
      // Predicated region
      $region9: #{parallel_tcns_forward.2} parent=5 // pred_check
        _
      $region10: #{parallel_tcns_forward.2} parent=5 // pred_check_branch
        %159 = sbr.rel (%p156) target = $region12
      $region11: #{parallel_tcns_forward.2} parent=5 // pred_region
        %s160 = ssub.s32 %s10, 1
        // Predicated region
        $region13: #{parallel_tcns_forward.2} parent=11 // pred_check
          %p161 = pneg %p97
        $region14: #{parallel_tcns_forward.2} parent=11 // pred_check_branch
          %163 = sbr.rel (%p161) target = $region16
        $region15: #{parallel_tcns_forward.2} parent=11 // pred_region
          _
        $region16: #{parallel_tcns_forward.2} parent=11 // pred_fallthru
          _
        // Predicated region
        $region17: #{parallel_tcns_forward.2} parent=11 // pred_check
          %p164 = pneg %p118
        $region18: #{parallel_tcns_forward.2} parent=11 // pred_check_branch
          %166 = sbr.rel (%p164) target = $region20
        $region19: #{parallel_tcns_forward.2} parent=11 // pred_region
          _
        $region20: #{parallel_tcns_forward.2} parent=11 // pred_fallthru
          _
      $region12: #{parallel_tcns_forward.2} parent=5 // pred_fallthru
        _
      %p167 = scmp.lt.s32.totalorder %s10, 10
      // Predicated region
      $region21: #{parallel_tcns_forward.2} parent=5 // pred_check
        %p168 = pneg %p167
      $region22: #{parallel_tcns_forward.2} parent=5 // pred_check_branch
        %170 = sbr.rel (%p168) target = $region24
      $region23: #{parallel_tcns_forward.2} parent=5 // pred_region
        // Predicated region
        $region25: #{parallel_tcns_forward.2} parent=23 // pred_check
          %p171 = pneg %p44
        $region26: #{parallel_tcns_forward.2} parent=23 // pred_check_branch
          %173 = sbr.rel (%p171) target = $region28
        $region27: #{parallel_tcns_forward.2} parent=23 // pred_region
          %s174 = sand.u32 %s34, 1
          %s175 = sand.u32 %s34, 1
          %s176 = smul.addr %s175, 32
          %s177 = scalar_lea.vmem [#allocation2], %s176
          %s178 = smul.addr %s17, 40
          %s179 = sadd.s32 %s18, %s178
          %s180 = smul.addr %s179, 4
          %s181 = scalar_lea.vmem %s0, %s180
          // Predicated region
          $region29: #{parallel_tcns_forward.2} parent=27 // pred_check
            _
          $region30: #{parallel_tcns_forward.2} parent=27 // pred_check_branch
            %183 = sbr.rel (0) target = $region32
          $region31: #{parallel_tcns_forward.2} parent=27 // pred_region
            // Predicated region
            $region33: #{parallel_tcns_forward.2} parent=31 // pred_check
              _
            $region34: #{parallel_tcns_forward.2} parent=31 // pred_check_branch
              %185 = sbr.rel target = $region36
            $region35: #{parallel_tcns_forward.2} parent=31 // pred_region
              // Predicated region
              $region48: #{parallel_tcns_forward.2} parent=35 // pred_check
                _
              $region49: #{parallel_tcns_forward.2} parent=35 // pred_check_branch
                %215 = sbr.rel (0) target = $region51
              $region50: #{parallel_tcns_forward.2} parent=35 // pred_region
                loop: start=0, step=1, limit=1
                $region52: #{parallel_tcns_forward.2} parent=50 // loop_pre_header
                  _
                $region53: #{parallel_tcns_forward.2} parent=50 // loop_header
                  %s217 = sphi 0, %s221
                  %p218 = scmp.ge.s32.totalorder %s217, 1
                  %s222 = sphi %s181, %s181
                  %s223 = sphi %s177, %s177
                $region54: #{parallel_tcns_forward.2} parent=50 // loop_header_branch
                  %220 = sbr.rel (%p218) target = $region58
                $region55: #{parallel_tcns_forward.2} parent=50 // loop_body
                  _
                $region56: #{parallel_tcns_forward.2} parent=50 // loop_footer
                  %s221 = sadd.s32 1, %s217
                $region57: #{parallel_tcns_forward.2} parent=50 // loop_footer_branch
                  %216 = sbr.rel target = $region53
                $region58: #{parallel_tcns_forward.2} parent=50 // loop_exit
                  _
                %s225 = ssub.s32 16, 1
                loop: start=0, step=1, limit=1
                $region59: #{parallel_tcns_forward.2} parent=50 // loop_pre_header
                  _
                $region60: #{parallel_tcns_forward.2} parent=50 // loop_header
                  %s227 = sphi 0, %s231
                  %p228 = scmp.ge.s32.totalorder %s227, 1
                  %s232 = sphi %s181, %s181
                  %s233 = sphi %s177, %s177
                $region61: #{parallel_tcns_forward.2} parent=50 // loop_header_branch
                  %230 = sbr.rel (%p228) target = $region65
                $region62: #{parallel_tcns_forward.2} parent=50 // loop_body
                  %v234 = vld [vmem:[%s232] sm:%s225]
                  %235 = vst [vmem:[%s233] sm:%s225] %v234
                  %v236 = vld [vmem:[%s232 + $0x14] sm:%s225]
                  %237 = vst [vmem:[%s233 + $0x4] sm:%s225] %v236
                  %v238 = vld [vmem:[%s232 + $0x28] sm:%s225]
                  %239 = vst [vmem:[%s233 + $0x8] sm:%s225] %v238
                  %v240 = vld [vmem:[%s232 + $0x3c] sm:%s225]
                  %241 = vst [vmem:[%s233 + $0xc] sm:%s225] %v240
                  %v242 = vld [vmem:[%s232 + $0x50] sm:%s225]
                  %243 = vst [vmem:[%s233 + $0x10] sm:%s225] %v242
                  %v244 = vld [vmem:[%s232 + $0x64] sm:%s225]
                  %245 = vst [vmem:[%s233 + $0x14] sm:%s225] %v244
                  %v246 = vld [vmem:[%s232 + $0x78] sm:%s225]
                  %247 = vst [vmem:[%s233 + $0x18] sm:%s225] %v246
                  %v248 = vld [vmem:[%s232 + $0x8c] sm:%s225]
                  %249 = vst [vmem:[%s233 + $0x1c] sm:%s225] %v248
                $region63: #{parallel_tcns_forward.2} parent=50 // loop_footer
                  %s231 = sadd.s32 1, %s227
                $region64: #{parallel_tcns_forward.2} parent=50 // loop_footer_branch
                  %226 = sbr.rel target = $region60
                $region65: #{parallel_tcns_forward.2} parent=50 // loop_exit
                  _
              $region51: #{parallel_tcns_forward.2} parent=35 // pred_fallthru
                _
            $region36: #{parallel_tcns_forward.2} parent=31 // pred_fallthru
              _
            // Predicated region
            $region37: #{parallel_tcns_forward.2} parent=31 // pred_check
              _
            $region38: #{parallel_tcns_forward.2} parent=31 // pred_check_branch
              %187 = sbr.rel (0) target = $region40
            $region39: #{parallel_tcns_forward.2} parent=31 // pred_region
              %s189 = ssub.s32 16, 1
              loop: start=0, step=1, limit=1
              $region41: #{parallel_tcns_forward.2} parent=39 // loop_pre_header
                _
              $region42: #{parallel_tcns_forward.2} parent=39 // loop_header
                %s191 = sphi 0, %s195
                %p192 = scmp.ge.s32.totalorder %s191, 1
                %s196 = sphi %s181, %s181
                %s197 = sphi %s177, %s177
              $region43: #{parallel_tcns_forward.2} parent=39 // loop_header_branch
                %194 = sbr.rel (%p192) target = $region47
              $region44: #{parallel_tcns_forward.2} parent=39 // loop_body
                %v198 = vld [vmem:[%s196] sm:%s189]
                %199 = vst [vmem:[%s197] sm:%s189] %v198
                %v200 = vld [vmem:[%s196 + $0x14] sm:%s189]
                %201 = vst [vmem:[%s197 + $0x4] sm:%s189] %v200
                %v202 = vld [vmem:[%s196 + $0x28] sm:%s189]
                %203 = vst [vmem:[%s197 + $0x8] sm:%s189] %v202
                %v204 = vld [vmem:[%s196 + $0x3c] sm:%s189]
                %205 = vst [vmem:[%s197 + $0xc] sm:%s189] %v204
                %v206 = vld [vmem:[%s196 + $0x50] sm:%s189]
                %207 = vst [vmem:[%s197 + $0x10] sm:%s189] %v206
                %v208 = vld [vmem:[%s196 + $0x64] sm:%s189]
                %209 = vst [vmem:[%s197 + $0x14] sm:%s189] %v208
                %v210 = vld [vmem:[%s196 + $0x78] sm:%s189]
                %211 = vst [vmem:[%s197 + $0x18] sm:%s189] %v210
                %v212 = vld [vmem:[%s196 + $0x8c] sm:%s189]
                %213 = vst [vmem:[%s197 + $0x1c] sm:%s189] %v212
              $region45: #{parallel_tcns_forward.2} parent=39 // loop_footer
                %s195 = sadd.s32 1, %s191
              $region46: #{parallel_tcns_forward.2} parent=39 // loop_footer_branch
                %190 = sbr.rel target = $region42
              $region47: #{parallel_tcns_forward.2} parent=39 // loop_exit
                _
            $region40: #{parallel_tcns_forward.2} parent=31 // pred_fallthru
              _
          $region32: #{parallel_tcns_forward.2} parent=27 // pred_fallthru
            _
          %250 = vnop
        $region28: #{parallel_tcns_forward.2} parent=23 // pred_fallthru
          _
        // Predicated region
        $region66: #{parallel_tcns_forward.2} parent=23 // pred_check
          %p251 = pneg %p70
        $region67: #{parallel_tcns_forward.2} parent=23 // pred_check_branch
          %253 = sbr.rel (%p251) target = $region69
        $region68: #{parallel_tcns_forward.2} parent=23 // pred_region
          %p254 = scmp.lt.s32.totalorder %s18, 4
          %s255 = scalar_select %p254, %s18, 4
          %s256 = scalar_lea.vmem %s1, %s255
        $region69: #{parallel_tcns_forward.2} parent=23 // pred_fallthru
          _
      $region24: #{parallel_tcns_forward.2} parent=5 // pred_fallthru
        _
      %p257 = scmp.le.s32.totalorder 1, %s10
      %p258 = scmp.lt.s32.totalorder %s10, 11
      %p259 = pnand %p257, %p258
      %p260 = pneg %p259
      // Predicated region
      $region70: #{parallel_tcns_forward.2} parent=5 // pred_check
        _
      $region71: #{parallel_tcns_forward.2} parent=5 // pred_check_branch
        %262 = sbr.rel (%p259) target = $region73
      $region72: #{parallel_tcns_forward.2} parent=5 // pred_region
        %s263 = ssub.s32 %s10, 1
        %s264 = sand.u32 %s37, 1
        %s265 = sand.u32 %s37, 1
        %s266 = smul.addr %s265, 32
        %s267 = scalar_lea.vmem [#allocation2], %s266
        // Predicated region
        $region74: #{parallel_tcns_forward.2} parent=72 // pred_check
          %p268 = pneg %p50
        $region75: #{parallel_tcns_forward.2} parent=72 // pred_check_branch
          %270 = sbr.rel (%p268) target = $region77
        $region76: #{parallel_tcns_forward.2} parent=72 // pred_region
          _
        $region77: #{parallel_tcns_forward.2} parent=72 // pred_fallthru
          _
        %s271 = sand.u32 %s37, 1
        %s272 = sand.u32 %s37, 1
        %s273 = smul.addr %s272, 32
        %s274 = scalar_lea.vmem [#allocation2], %s273
        %p275 = pneg %p50
        %p276 = pneg %p47
        %p277 = scmp.lt.s32.totalorder %s20, 4
        %s278 = scalar_select %p277, %s20, 4
        %s279 = scalar_lea.vmem %s1, %s278
        %p280 = pneg %p76
        %p281 = pneg %p73
        %p282 = pneg %p97
        %p283 = pneg %p94
        %p284 = pneg %p118
        %p285 = pneg %p115
        %p286 = pneg %p146
        %p287 = pneg %p143
        %s288 = sand.u32 %s133, 1
        %s289 = sand.u32 %s133, 1
        %s290 = smul.addr %s289, 96
        %s291 = scalar_lea.vmem [#allocation3], %s290
        %p292 = scmp.lt.s32.totalorder %s20, 4
        %s293 = scalar_select %p292, %s20, 4
        %s294 = scalar_lea.vmem %s1, %s293
        %v296 = vld [vmem:[%s2] sm:$0xf]
        %v297 = vld [vmem:[%s2 + $0x4] sm:$0xf]
        %v298 = vld [vmem:[%s2 + $0x8] sm:$0xf]
        %v299 = vld [vmem:[%s2 + $0xc] sm:$0xf]
        %v300 = vld [vmem:[%s2 + $0x10] sm:$0xf]
        %v301 = vld [vmem:[%s2 + $0x14] sm:$0xf]
        %v302 = vld [vmem:[%s2 + $0x18] sm:$0xf]
        %v303 = vld [vmem:[%s2 + $0x1c] sm:$0xf]
        %v304 = vld [vmem:[%s2 + $0x20] sm:$0xf]
        %v305 = vld [vmem:[%s2 + $0x24] sm:$0xf]
        %v306 = vld [vmem:[%s2 + $0x28] sm:$0xf]
        %v307 = vld [vmem:[%s2 + $0x2c] sm:$0xf]
        %v308 = vld [vmem:[%s267] sm:$0xf]
        %v309 = vld [vmem:[%s267 + $0x4] sm:$0xf]
        %v310 = vld [vmem:[%s267 + $0x8] sm:$0xf]
        %v311 = vld [vmem:[%s267 + $0xc] sm:$0xf]
        %v312 = vld [vmem:[%s267 + $0x10] sm:$0xf]
        %v313 = vld [vmem:[%s267 + $0x14] sm:$0xf]
        %v314 = vld [vmem:[%s267 + $0x18] sm:$0xf]
        %v315 = vld [vmem:[%s267 + $0x1c] sm:$0xf]
        %v316 = vld [vmem:[%s3] sm:$0xff]
        %v317 = vld [vmem:[%s3 + $0x8] sm:$0xff]
        %v318 = vld [vmem:[%s3 + $0x10] sm:$0xff]
        %v319 = vld [vmem:[%s3 + $0x18] sm:$0xff]
        %v320 = vld [vmem:[%s3 + $0x20] sm:$0xff]
        %v321 = vld [vmem:[%s3 + $0x28] sm:$0xff]
        %v322 = vld [vmem:[%s3 + $0x30] sm:$0xff]
        %v323 = vld [vmem:[%s3 + $0x38] sm:$0xff]
        %v324 = vld [vmem:[%s3 + $0x40] sm:$0xff]
        %v325 = vld [vmem:[%s3 + $0x48] sm:$0xff]
        %v326 = vld [vmem:[%s3 + $0x50] sm:$0xff]
        %v327 = vld [vmem:[%s3 + $0x58] sm:$0xff]
        %329 = vset.pattern.permute.xlu0 0
        %330 = vperm.xlu0 %329, %v316
        %v331 = vpop.permute.xlu0 %330
        %334 = vset.pattern.permute.xlu0 0
        %335 = vperm.xlu0 %334, %v317
        %v336 = vpop.permute.xlu0 %335
        %339 = vset.pattern.permute.xlu0 0
        %340 = vperm.xlu0 %339, %v318
        %v341 = vpop.permute.xlu0 %340
        %344 = vset.pattern.permute.xlu0 0
        %345 = vperm.xlu0 %344, %v319
        %v346 = vpop.permute.xlu0 %345
        %349 = vset.pattern.permute.xlu0 0
        %350 = vperm.xlu0 %349, %v320
        %v351 = vpop.permute.xlu0 %350
        %354 = vset.pattern.permute.xlu0 0
        %355 = vperm.xlu0 %354, %v321
        %v356 = vpop.permute.xlu0 %355
        %359 = vset.pattern.permute.xlu0 0
        %360 = vperm.xlu0 %359, %v322
        %v361 = vpop.permute.xlu0 %360
        %364 = vset.pattern.permute.xlu0 0
        %365 = vperm.xlu0 %364, %v323
        %v366 = vpop.permute.xlu0 %365
        %369 = vset.pattern.permute.xlu0 0
        %370 = vperm.xlu0 %369, %v324
        %v371 = vpop.permute.xlu0 %370
        %374 = vset.pattern.permute.xlu0 0
        %375 = vperm.xlu0 %374, %v325
        %v376 = vpop.permute.xlu0 %375
        %379 = vset.pattern.permute.xlu0 0
        %380 = vperm.xlu0 %379, %v326
        %v381 = vpop.permute.xlu0 %380
        %384 = vset.pattern.permute.xlu0 0
        %385 = vperm.xlu0 %384, %v327
        %v386 = vpop.permute.xlu0 %385
        %v400 = vunpack.c.l.b16 %v296
        %v401 = vunpack.c.l.b16 %v297
        %v402 = vunpack.c.l.b16 %v298
        %v403 = vunpack.c.l.b16 %v299
        %v404 = vunpack.c.l.b16 %v300
        %v405 = vunpack.c.l.b16 %v301
        %v406 = vunpack.c.l.b16 %v302
        %v407 = vunpack.c.l.b16 %v303
        %v408 = vunpack.c.l.b16 %v304
        %v409 = vunpack.c.l.b16 %v305
        %v410 = vunpack.c.l.b16 %v306
        %v411 = vunpack.c.l.b16 %v307
        %v412 = vpack.c.b16 %v401, %v400
        %v413 = vpack.c.b16 %v403, %v402
        %v414 = vpack.c.b16 %v405, %v404
        %v415 = vpack.c.b16 %v407, %v406
        %v416 = vpack.c.b16 %v409, %v408
        %v417 = vpack.c.b16 %v411, %v410
        %v426 = vunpack.c.l.b16 %v308
        %v427 = vunpack.c.l.b16 %v309
        %v428 = vunpack.c.l.b16 %v310
        %v429 = vunpack.c.l.b16 %v311
        %v430 = vunpack.c.l.b16 %v312
        %v431 = vunpack.c.l.b16 %v313
        %v432 = vunpack.c.l.b16 %v314
        %v433 = vunpack.c.l.b16 %v315
        %v434 = vpack.c.b16 %v427, %v426
        %v435 = vpack.c.b16 %v429, %v428
        %v436 = vpack.c.b16 %v431, %v430
        %v437 = vpack.c.b16 %v433, %v432
        %vm442 = vcmask 523264
        %v444 = vsel %vm442, %v412, 0
        %v447 = vsel %vm442, %v413, 0
        %v450 = vsel %vm442, %v414, 0
        %v453 = vsel %vm442, %v415, 0
        %v456 = vsel %vm442, %v416, 0
        %v459 = vsel %vm442, %v417, 0
        %461 = vmatpush.bf16.msra.mxu0 0
        %462 = vmatpush.bf16.msra.mxu0 0
        %463 = vmatpush.bf16.msra.mxu0 0
        %464 = vmatpush.bf16.msra.mxu0 0
        %465 = vmatpush.bf16.msra.mxu0 %v437
        %466 = vmatpush.bf16.msra.mxu0 %v436
        %467 = vmatpush.bf16.msra.mxu0 %v435
        %468 = vmatpush.bf16.msra.mxu0 %v434
        %469 = vmatmul.bf16.gmra.mxu0 %v444
        %v470 = vpop.f32.mrf.mxu0
        %v471 = vadd.f32 %v331, %v470
        %v472 = vpop.f32.mrf.mxu0
        %v473 = vadd.f32 %v336, %v472
        %474 = vmatmul.bf16.gmra.mxu0 %v447
        %v475 = vpop.f32.mrf.mxu0
        %v476 = vadd.f32 %v341, %v475
        %v477 = vpop.f32.mrf.mxu0
        %v478 = vadd.f32 %v346, %v477
        %479 = vmatmul.bf16.gmra.mxu0 %v450
        %v480 = vpop.f32.mrf.mxu0
        %v481 = vadd.f32 %v351, %v480
        %v482 = vpop.f32.mrf.mxu0
        %v483 = vadd.f32 %v356, %v482
        %484 = vmatmul.bf16.gmra.mxu0 %v453
        %v485 = vpop.f32.mrf.mxu0
        %v486 = vadd.f32 %v361, %v485
        %v487 = vpop.f32.mrf.mxu0
        %v488 = vadd.f32 %v366, %v487
        %489 = vmatmul.bf16.gmra.mxu0 %v456
        %v490 = vpop.f32.mrf.mxu0
        %v491 = vadd.f32 %v371, %v490
        %v492 = vpop.f32.mrf.mxu0
        %v493 = vadd.f32 %v376, %v492
        %494 = vmatmul.bf16.gmra.mxu0 %v459
        %v495 = vpop.f32.mrf.mxu0
        %v496 = vadd.f32 %v381, %v495
        %v497 = vpop.f32.mrf.mxu0
        %v498 = vadd.f32 %v386, %v497
        %499 = vdwg.mxu0
        %v500 = vld [vmem:[%s294] sm:$0x1]
        %v502 = vperm.slane %v500, 0
        %v504 = vmul.f32 %v471, %v502
        %v505 = vmul.f32 %v473, %v502
        %v506 = vmul.f32 %v476, %v502
        %v507 = vmul.f32 %v478, %v502
        %v508 = vmul.f32 %v481, %v502
        %v509 = vmul.f32 %v483, %v502
        %v510 = vmul.f32 %v486, %v502
        %v511 = vmul.f32 %v488, %v502
        %v512 = vmul.f32 %v491, %v502
        %v513 = vmul.f32 %v493, %v502
        %v514 = vmul.f32 %v496, %v502
        %v515 = vmul.f32 %v498, %v502
        %516 = vst [vmem:[%s291] sm:$0xff] %v504
        %517 = vst [vmem:[%s291 + $0x8] sm:$0xff] %v505
        %518 = vst [vmem:[%s291 + $0x10] sm:$0xff] %v506
        %519 = vst [vmem:[%s291 + $0x18] sm:$0xff] %v507
        %s520 = scalar_lea.vmem %s291, 32 [#allocation3]
        %521 = vst [vmem:[%s520] sm:$0xff] %v508
        %522 = vst [vmem:[%s520 + $0x8] sm:$0xff] %v509
        %523 = vst [vmem:[%s520 + $0x10] sm:$0xff] %v510
        %524 = vst [vmem:[%s520 + $0x18] sm:$0xff] %v511
        %s525 = scalar_lea.vmem %s291, 64 [#allocation3]
        %526 = vst [vmem:[%s525] sm:$0xff] %v512
        %527 = vst [vmem:[%s525 + $0x8] sm:$0xff] %v513
        %528 = vst [vmem:[%s525 + $0x10] sm:$0xff] %v514
        %529 = vst [vmem:[%s525 + $0x18] sm:$0xff] %v515
        %s530 = sand.u32 %s133, 1
        %s531 = sand.u32 %s133, 1
        %s532 = smul.addr %s531, 96
        %s533 = scalar_lea.vmem [#allocation3], %s532
        // Predicated region
        $region78: #{parallel_tcns_forward.2} parent=72 // pred_check
          %p534 = pneg %p143
        $region79: #{parallel_tcns_forward.2} parent=72 // pred_check_branch
          %536 = sbr.rel (%p534) target = $region81
        $region80: #{parallel_tcns_forward.2} parent=72 // pred_region
          %s537 = smul.addr %s19, 20
          %s538 = sadd.s32 %s20, %s537
          %s539 = smul.addr %s538, 8
          %s540 = scalar_lea.vmem %s4, %s539
          // Predicated region
          $region82: #{parallel_tcns_forward.2} parent=80 // pred_check
            _
          $region83: #{parallel_tcns_forward.2} parent=80 // pred_check_branch
            %542 = sbr.rel (0) target = $region85
          $region84: #{parallel_tcns_forward.2} parent=80 // pred_region
            // Predicated region
            $region86: #{parallel_tcns_forward.2} parent=84 // pred_check
              _
            $region87: #{parallel_tcns_forward.2} parent=84 // pred_check_branch
              %544 = sbr.rel (0) target = $region89
            $region88: #{parallel_tcns_forward.2} parent=84 // pred_region
              // Predicated region
              $region101: #{parallel_tcns_forward.2} parent=88 // pred_check
                _
              $region102: #{parallel_tcns_forward.2} parent=88 // pred_check_branch
                %582 = sbr.rel (0) target = $region104
              $region103: #{parallel_tcns_forward.2} parent=88 // pred_region
                loop: start=0, step=1, limit=1
                $region105: #{parallel_tcns_forward.2} parent=103 // loop_pre_header
                  _
                $region106: #{parallel_tcns_forward.2} parent=103 // loop_header
                  %s584 = sphi 0, %s588
                  %p585 = scmp.ge.s32.totalorder %s584, 1
                  %s589 = sphi %s533, %s533
                  %s590 = sphi %s540, %s540
                $region107: #{parallel_tcns_forward.2} parent=103 // loop_header_branch
                  %587 = sbr.rel (%p585) target = $region111
                $region108: #{parallel_tcns_forward.2} parent=103 // loop_body
                  %v591 = vld [vmem:[%s589] sm:$0xff]
                  %592 = vst [vmem:[%s590] sm:$0xff] %v591
                  %v593 = vld [vmem:[%s589 + $0x8] sm:$0xff]
                  %594 = vst [vmem:[%s590 + $0x28] sm:$0xff] %v593
                  %v595 = vld [vmem:[%s589 + $0x10] sm:$0xff]
                  %596 = vst [vmem:[%s590 + $0x50] sm:$0xff] %v595
                  %v597 = vld [vmem:[%s589 + $0x18] sm:$0xff]
                  %598 = vst [vmem:[%s590 + $0x78] sm:$0xff] %v597
                  %v599 = vld [vmem:[%s589 + $0x20] sm:$0xff]
                  %600 = vst [vmem:[%s590 + $0x140] sm:$0xff] %v599
                  %v601 = vld [vmem:[%s589 + $0x28] sm:$0xff]
                  %602 = vst [vmem:[%s590 + $0x168] sm:$0xff] %v601
                  %v603 = vld [vmem:[%s589 + $0x30] sm:$0xff]
                  %604 = vst [vmem:[%s590 + $0x190] sm:$0xff] %v603
                  %v605 = vld [vmem:[%s589 + $0x38] sm:$0xff]
                  %606 = vst [vmem:[%s590 + $0x1b8] sm:$0xff] %v605
                  %v607 = vld [vmem:[%s589 + $0x40] sm:$0xff]
                  %608 = vst [vmem:[%s590 + $0x280] sm:$0xff] %v607
                  %v609 = vld [vmem:[%s589 + $0x48] sm:$0xff]
                  %610 = vst [vmem:[%s590 + $0x2a8] sm:$0xff] %v609
                  %v611 = vld [vmem:[%s589 + $0x50] sm:$0xff]
                  %612 = vst [vmem:[%s590 + $0x2d0] sm:$0xff] %v611
                  %v613 = vld [vmem:[%s589 + $0x58] sm:$0xff]
                  %614 = vst [vmem:[%s590 + $0x2f8] sm:$0xff] %v613
                $region109: #{parallel_tcns_forward.2} parent=103 // loop_footer
                  %s588 = sadd.s32 1, %s584
                $region110: #{parallel_tcns_forward.2} parent=103 // loop_footer_branch
                  %583 = sbr.rel target = $region106
                $region111: #{parallel_tcns_forward.2} parent=103 // loop_exit
                  _
              $region104: #{parallel_tcns_forward.2} parent=88 // pred_fallthru
                _
              // Predicated region
              $region112: #{parallel_tcns_forward.2} parent=88 // pred_check
                _
              $region113: #{parallel_tcns_forward.2} parent=88 // pred_check_branch
                %616 = sbr.rel target = $region115
              $region114: #{parallel_tcns_forward.2} parent=88 // pred_region
                _
              $region115: #{parallel_tcns_forward.2} parent=88 // pred_fallthru
                _
            $region89: #{parallel_tcns_forward.2} parent=84 // pred_fallthru
              _
            // Predicated region
            $region90: #{parallel_tcns_forward.2} parent=84 // pred_check
              _
            $region91: #{parallel_tcns_forward.2} parent=84 // pred_check_branch
              %546 = sbr.rel target = $region93
            $region92: #{parallel_tcns_forward.2} parent=84 // pred_region
              %s548 = ssub.s32 256, 1
              loop: start=0, step=1, limit=1
              $region94: #{parallel_tcns_forward.2} parent=92 // loop_pre_header
                _
              $region95: #{parallel_tcns_forward.2} parent=92 // loop_header
                %s550 = sphi 0, %s554
                %p551 = scmp.ge.s32.totalorder %s550, 1
                %s555 = sphi %s533, %s533
                %s556 = sphi %s540, %s540
              $region96: #{parallel_tcns_forward.2} parent=92 // loop_header_branch
                %553 = sbr.rel (%p551) target = $region100
              $region97: #{parallel_tcns_forward.2} parent=92 // loop_body
                %v557 = vld [vmem:[%s555] sm:%s548]
                %558 = vst [vmem:[%s556] sm:%s548] %v557
                %v559 = vld [vmem:[%s555 + $0x8] sm:%s548]
                %560 = vst [vmem:[%s556 + $0x28] sm:%s548] %v559
                %v561 = vld [vmem:[%s555 + $0x10] sm:%s548]
                %562 = vst [vmem:[%s556 + $0x50] sm:%s548] %v561
                %v563 = vld [vmem:[%s555 + $0x18] sm:%s548]
                %564 = vst [vmem:[%s556 + $0x78] sm:%s548] %v563
                %v565 = vld [vmem:[%s555 + $0x20] sm:%s548]
                %566 = vst [vmem:[%s556 + $0x140] sm:%s548] %v565
                %v567 = vld [vmem:[%s555 + $0x28] sm:%s548]
                %568 = vst [vmem:[%s556 + $0x168] sm:%s548] %v567
                %v569 = vld [vmem:[%s555 + $0x30] sm:%s548]
                %570 = vst [vmem:[%s556 + $0x190] sm:%s548] %v569
                %v571 = vld [vmem:[%s555 + $0x38] sm:%s548]
                %572 = vst [vmem:[%s556 + $0x1b8] sm:%s548] %v571
                %v573 = vld [vmem:[%s555 + $0x40] sm:%s548]
                %574 = vst [vmem:[%s556 + $0x280] sm:%s548] %v573
                %v575 = vld [vmem:[%s555 + $0x48] sm:%s548]
                %576 = vst [vmem:[%s556 + $0x2a8] sm:%s548] %v575
                %v577 = vld [vmem:[%s555 + $0x50] sm:%s548]
                %578 = vst [vmem:[%s556 + $0x2d0] sm:%s548] %v577
                %v579 = vld [vmem:[%s555 + $0x58] sm:%s548]
                %580 = vst [vmem:[%s556 + $0x2f8] sm:%s548] %v579
              $region98: #{parallel_tcns_forward.2} parent=92 // loop_footer
                %s554 = sadd.s32 1, %s550
              $region99: #{parallel_tcns_forward.2} parent=92 // loop_footer_branch
                %549 = sbr.rel target = $region95
              $region100: #{parallel_tcns_forward.2} parent=92 // loop_exit
                _
            $region93: #{parallel_tcns_forward.2} parent=84 // pred_fallthru
              _
          $region85: #{parallel_tcns_forward.2} parent=80 // pred_fallthru
            _
          %617 = vnop
        $region81: #{parallel_tcns_forward.2} parent=72 // pred_fallthru
          _
      $region73: #{parallel_tcns_forward.2} parent=5 // pred_fallthru
        _
      %p618 = scmp.le.s32.totalorder 2, %s10
      // Predicated region
      $region116: #{parallel_tcns_forward.2} parent=5 // pred_check
        %p619 = pneg %p618
      $region117: #{parallel_tcns_forward.2} parent=5 // pred_check_branch
        %621 = sbr.rel (%p619) target = $region119
      $region118: #{parallel_tcns_forward.2} parent=5 // pred_region
        %s622 = ssub.s32 %s10, 2
        // Predicated region
        $region120: #{parallel_tcns_forward.2} parent=118 // pred_check
          %p623 = pneg %p149
        $region121: #{parallel_tcns_forward.2} parent=118 // pred_check_branch
          %625 = sbr.rel (%p623) target = $region123
        $region122: #{parallel_tcns_forward.2} parent=118 // pred_region
          %s626 = sand.u32 %s134, 1
          %s627 = sand.u32 %s134, 1
          %s628 = smul.addr %s627, 96
          %s629 = scalar_lea.vmem [#allocation3], %s628
        $region123: #{parallel_tcns_forward.2} parent=118 // pred_fallthru
          _
      $region119: #{parallel_tcns_forward.2} parent=5 // pred_fallthru
        _
    $region6: #{parallel_tcns_forward.2} parent=1 // loop_footer
      %s14 = sadd.s32 1, %s10
    $region7: #{parallel_tcns_forward.2} parent=1 // loop_footer_branch
      %9 = sbr.rel target = $region3
    $region8: #{parallel_tcns_forward.2} parent=1 // loop_exit
      _

// kernel: parallel_tcns_forward.3
$region0: #{parallel_tcns_forward.3}
  #allocation0 [shape = 'u32[]', space=smem, size = 0x4, offset = 0x4, fixed_abs, tag = 'smem constant byte address 0x4 - core index']
  #allocation1 [shape = 'u32[72,128]{1,0:T(1,128)}', space=vmem, size = 0x9000, scoped, tag = 'internal scratch']
  #allocation2 [shape = 'f32[32,1024]{1,0:T(8,128)}', space=vmem, size = 0x20000, scoped, tag = 'scratch operand']
  #allocation3 [shape = 'f32[1,768]{1,0:T(1,128)}', space=vmem, size = 0xc00, scoped, tag = 'scratch operand']
  %s0 = inlined_call_operand.vmem [shape: f32[3,2,32,640], index: 0, kind: input, shape index: {}, may-alias: {0,1,2}]
  %s1 = inlined_call_operand.vmem [shape: f32[3,2,32,640], index: 1, kind: input, shape index: {}, may-alias: {0,1,2}]
  %s2 = inlined_call_operand.vmem [shape: f32[3,2,32,640], index: 2, kind: input, shape index: {}, may-alias: {0,1,2}]
  %s3 = inlined_call_operand.vmem [shape: f32[2,1,640], index: 3, kind: input, shape index: {}, may-alias: {3,4,5}]
  %s4 = inlined_call_operand.vmem [shape: f32[2,1,640], index: 4, kind: input, shape index: {}, may-alias: {3,4,5}]
  %s5 = inlined_call_operand.vmem [shape: f32[2,1,640], index: 5, kind: input, shape index: {}, may-alias: {3,4,5}]
  %s6 = inlined_call_operand.vmem [shape: bf16[3,9,32,32], index: 6, kind: input, shape index: {}]
  %s7 = inlined_call_operand.vmem [shape: f32[3,3,32,1], index: 7, kind: input, shape index: {}]
  %s8 = inlined_call_operand.vmem [shape: bf16[3,3,32,32], index: 8, kind: input, shape index: {}]
  %s9 = inlined_call_operand.vmem [shape: f32[3,3,32,1], index: 9, kind: input, shape index: {}]
  %s10 = inlined_call_operand.vmem [shape: bf16[3,16,32], index: 10, kind: input, shape index: {}]
  %s11 = inlined_call_operand.vmem [shape: f32[3,16,1], index: 11, kind: input, shape index: {}]
  %s12 = inlined_call_operand.vmem [shape: bf16[3,16,16], index: 12, kind: input, shape index: {}]
  %s13 = inlined_call_operand.vmem [shape: f32[3,16,1], index: 13, kind: input, shape index: {}]
  %s14 = inlined_call_operand.vmem [shape: f32[3,2,16,640], index: 14, kind: output, shape index: {}]
  %s15 = sld [smem:[#allocation0]]
  $region165: #{parallel_tcns_forward.3} parent=0
    _
  %s17 = ssub.s32 1, %s15
  %s18 = scalar_select 0, %s17, %s15
  $region1: #{parallel_tcns_forward.3} parent=0
    #allocation4 [shape = 'u8[32768]{0}', space=vmem, size = 0x8000, scoped, tag = 'input window, operand 0']
    #allocation5 [shape = 'u8[32768]{0}', space=vmem, size = 0x8000, scoped, tag = 'input window, operand 2']
    loop: start=0, step=1, limit=8
    $region2: #{parallel_tcns_forward.3} parent=1 // loop_pre_header
      _
    $region3: #{parallel_tcns_forward.3} parent=1 // loop_header
      %s20 = sphi 0, %s24
      %p21 = scmp.ge.s32.totalorder %s20, 8
      %s27 = sphi 0, %s46
      %s28 = sphi 0, %s42
      %s29 = sphi 0, %s38
      %s30 = sphi 0, %s27
      %s31 = sphi 0, %s28
      %s32 = sphi 0, %s29
      %s33 = sphi 0, %s30
      %s34 = sphi 0, %s31
      %s35 = sphi 0, %s32
      %s61 = sphi 0, %s63
      %s64 = sphi 0, %s61
      %s65 = sphi 0, %s64
      %s81 = sphi 0, %s65
      %s91 = sphi 0, %s93
      %s94 = sphi 0, %s91
      %s95 = sphi 0, %s94
      %s111 = sphi 0, %s95
      %s129 = sphi 0, %s131
      %s132 = sphi 0, %s129
      %s133 = sphi 0, %s132
      %s149 = sphi 0, %s133
      %s165 = sphi 0, %s167
      %s168 = sphi 0, %s165
      %s169 = sphi 0, %s168
      %s185 = sphi 0, %s169
      %s193 = sphi 0, %s195
      %s196 = sphi 0, %s193
      %s197 = sphi 0, %s196
      %s213 = sphi 0, %s197
      %s229 = sphi 0, %s231
      %s232 = sphi 0, %s229
      %s233 = sphi 0, %s232
      %s249 = sphi 0, %s233
      %s255 = sphi 0, %s257
      %s258 = sphi 0, %s255
      %s259 = sphi 0, %s258
      %s275 = sphi 0, %s259
      %s281 = sphi 0, %s283
      %s284 = sphi 0, %s281
      %s285 = sphi 0, %s284
      %s301 = sphi 0, %s285
      %s307 = sphi 0, %s309
      %s310 = sphi 0, %s307
      %s311 = sphi 0, %s310
      %s327 = sphi 0, %s311
      %s333 = sphi 0, %s335
      %s336 = sphi 0, %s333
      %s337 = sphi 0, %s336
      %s353 = sphi 0, %s337
      %s359 = sphi 0, %s361
      %s362 = sphi 0, %s359
      %s363 = sphi 0, %s362
      %s379 = sphi 0, %s363
      %s385 = sphi 0, %s387
      %s388 = sphi 0, %s385
      %s389 = sphi 0, %s388
      %s405 = sphi 0, %s389
      %s411 = sphi 0, %s413
      %s414 = sphi 0, %s411
      %s415 = sphi 0, %s414
      %s431 = sphi 0, %s415
      %s437 = sphi 0, %s439
      %s440 = sphi 0, %s437
      %s441 = sphi 0, %s440
      %s457 = sphi 0, %s441
      %s467 = sphi 0, %s469
      %s470 = sphi 0, %s467
      %s471 = sphi 0, %s470
      %s487 = sphi 0, %s471
    $region4: #{parallel_tcns_forward.3} parent=1 // loop_header_branch
      %23 = sbr.rel (%p21) target = $region8
    $region5: #{parallel_tcns_forward.3} parent=1 // loop_body
      %s25 = ssub.s32 %s20, 1
      %s26 = ssub.s32 %s20, 2
      %s36 = sadd.s32 1, %s29
      %p37 = scmp.ge.s32.totalorder %s36, 1
      %s38 = scalar_select %p37, 0, %s36
      %s39 = sadd.s32 1, %s28
      %s40 = scalar_select %p37, %s39, %s28
      %p41 = scmp.ge.s32.totalorder %s40, 2
      %s42 = scalar_select %p41, 0, %s40
      %s43 = sadd.s32 1, %s27
      %s44 = scalar_select %p41, %s43, %s27
      %p45 = scmp.ge.s32.totalorder %s44, 3
      %s46 = scalar_select %p45, 0, %s44
      %s47 = smul.u32 %s29, 5
      %s48 = ssub.s32 %s47, 1
      %p49 = scmp.gt.s32.totalorder %s48, 0
      %s50 = scalar_select %p49, %s48, 0
      %s51 = smul.u32 %s38, 5
      %s52 = ssub.s32 %s51, 1
      %p53 = scmp.gt.s32.totalorder %s52, 0
      %s54 = scalar_select %p53, %s52, 0
      %s55 = ssub.s32 %s27, %s46
      %s56 = ssub.s32 %s28, %s42
      %s57 = sor.u32 %s55, %s56
      %s58 = ssub.s32 %s50, %s54
      %s59 = sor.u32 %s57, %s58
      %p60 = scmp.eq.s32.totalorder %s59, 0
      %s62 = sadd.s32 %s61, 1
      %s63 = scalar_select %p60, %s61, %s62
      %p66 = pneg %p60
      %p67 = scmp.eq.s32.totalorder %s20, 5
      %p68 = por %p66, %p67
      %p69 = scmp.ne.s32.totalorder %s61, %s64
      %p70 = scmp.eq.s32.totalorder %s20, 0
      %p71 = por %p69, %p70
      %p72 = scmp.ne.s32.totalorder %s61, %s64
      %p73 = scmp.eq.s32.totalorder %s25, 5
      %p74 = por %p72, %p73
      %p75 = scmp.ne.s32.totalorder %s64, %s65
      %p76 = scmp.eq.s32.totalorder %s25, 0
      %p77 = por %p75, %p76
      %p78 = scmp.ne.s32.totalorder %s64, %s65
      %p79 = scmp.eq.s32.totalorder %s26, 5
      %p80 = por %p78, %p79
      %p82 = scmp.ne.s32.totalorder %s65, %s81
      %p83 = scmp.eq.s32.totalorder %s26, 0
      %p84 = por %p82, %p83
      %s85 = ssub.s32 %s27, %s46
      %s86 = ssub.s32 %s28, %s42
      %s87 = sor.u32 %s85, %s86
      %s88 = ssub.s32 %s29, %s38
      %s89 = sor.u32 %s87, %s88
      %p90 = scmp.eq.s32.totalorder %s89, 0
      %s92 = sadd.s32 %s91, 1
      %s93 = scalar_select %p90, %s91, %s92
      %p96 = pneg %p90
      %p97 = scmp.eq.s32.totalorder %s20, 5
      %p98 = por %p96, %p97
      %p99 = scmp.ne.s32.totalorder %s91, %s94
      %p100 = scmp.eq.s32.totalorder %s20, 0
      %p101 = por %p99, %p100
      %p102 = scmp.ne.s32.totalorder %s91, %s94
      %p103 = scmp.eq.s32.totalorder %s25, 5
      %p104 = por %p102, %p103
      %p105 = scmp.ne.s32.totalorder %s94, %s95
      %p106 = scmp.eq.s32.totalorder %s25, 0
      %p107 = por %p105, %p106
      %p108 = scmp.ne.s32.totalorder %s94, %s95
      %p109 = scmp.eq.s32.totalorder %s26, 5
      %p110 = por %p108, %p109
      %p112 = scmp.ne.s32.totalorder %s95, %s111
      %p113 = scmp.eq.s32.totalorder %s26, 0
      %p114 = por %p112, %p113
      %s115 = sadd.s32 %s29, 1
      %s116 = smul.u32 %s115, 5
      %p117 = scmp.lt.s32.totalorder %s116, 4
      %s118 = scalar_select %p117, %s116, 4
      %s119 = sadd.s32 %s38, 1
      %s120 = smul.u32 %s119, 5
      %p121 = scmp.lt.s32.totalorder %s120, 4
      %s122 = scalar_select %p121, %s120, 4
      %s123 = ssub.s32 %s27, %s46
      %s124 = ssub.s32 %s28, %s42
      %s125 = sor.u32 %s123, %s124
      %s126 = ssub.s32 %s118, %s122
      %s127 = sor.u32 %s125, %s126
      %p128 = scmp.eq.s32.totalorder %s127, 0
      %s130 = sadd.s32 %s129, 1
      %s131 = scalar_select %p128, %s129, %s130
      %p134 = pneg %p128
      %p135 = scmp.eq.s32.totalorder %s20, 5
      %p136 = por %p134, %p135
      %p137 = scmp.ne.s32.totalorder %s129, %s132
      %p138 = scmp.eq.s32.totalorder %s20, 0
      %p139 = por %p137, %p138
      %p140 = scmp.ne.s32.totalorder %s129, %s132
      %p141 = scmp.eq.s32.totalorder %s25, 5
      %p142 = por %p140, %p141
      %p143 = scmp.ne.s32.totalorder %s132, %s133
      %p144 = scmp.eq.s32.totalorder %s25, 0
      %p145 = por %p143, %p144
      %p146 = scmp.ne.s32.totalorder %s132, %s133
      %p147 = scmp.eq.s32.totalorder %s26, 5
      %p148 = por %p146, %p147
      %p150 = scmp.ne.s32.totalorder %s133, %s149
      %p151 = scmp.eq.s32.totalorder %s26, 0
      %p152 = por %p150, %p151
      %s153 = smul.u32 %s29, 5
      %s154 = ssub.s32 %s153, 1
      %p155 = scmp.gt.s32.totalorder %s154, 0
      %s156 = scalar_select %p155, %s154, 0
      %s157 = smul.u32 %s38, 5
      %s158 = ssub.s32 %s157, 1
      %p159 = scmp.gt.s32.totalorder %s158, 0
      %s160 = scalar_select %p159, %s158, 0
      %s161 = ssub.s32 %s28, %s42
      %s162 = ssub.s32 %s156, %s160
      %s163 = sor.u32 %s161, %s162
      %p164 = scmp.eq.s32.totalorder %s163, 0
      %s166 = sadd.s32 %s165, 1
      %s167 = scalar_select %p164, %s165, %s166
      %p170 = pneg %p164
      %p171 = scmp.eq.s32.totalorder %s20, 5
      %p172 = por %p170, %p171
      %p173 = scmp.ne.s32.totalorder %s165, %s168
      %p174 = scmp.eq.s32.totalorder %s20, 0
      %p175 = por %p173, %p174
      %p176 = scmp.ne.s32.totalorder %s165, %s168
      %p177 = scmp.eq.s32.totalorder %s25, 5
      %p178 = por %p176, %p177
      %p179 = scmp.ne.s32.totalorder %s168, %s169
      %p180 = scmp.eq.s32.totalorder %s25, 0
      %p181 = por %p179, %p180
      %p182 = scmp.ne.s32.totalorder %s168, %s169
      %p183 = scmp.eq.s32.totalorder %s26, 5
      %p184 = por %p182, %p183
      %p186 = scmp.ne.s32.totalorder %s169, %s185
      %p187 = scmp.eq.s32.totalorder %s26, 0
      %p188 = por %p186, %p187
      %s189 = ssub.s32 %s28, %s42
      %s190 = ssub.s32 %s29, %s38
      %s191 = sor.u32 %s189, %s190
      %p192 = scmp.eq.s32.totalorder %s191, 0
      %s194 = sadd.s32 %s193, 1
      %s195 = scalar_select %p192, %s193, %s194
      %p198 = pneg %p192
      %p199 = scmp.eq.s32.totalorder %s20, 5
      %p200 = por %p198, %p199
      %p201 = scmp.ne.s32.totalorder %s193, %s196
      %p202 = scmp.eq.s32.totalorder %s20, 0
      %p203 = por %p201, %p202
      %p204 = scmp.ne.s32.totalorder %s193, %s196
      %p205 = scmp.eq.s32.totalorder %s25, 5
      %p206 = por %p204, %p205
      %p207 = scmp.ne.s32.totalorder %s196, %s197
      %p208 = scmp.eq.s32.totalorder %s25, 0
      %p209 = por %p207, %p208
      %p210 = scmp.ne.s32.totalorder %s196, %s197
      %p211 = scmp.eq.s32.totalorder %s26, 5
      %p212 = por %p210, %p211
      %p214 = scmp.ne.s32.totalorder %s197, %s213
      %p215 = scmp.eq.s32.totalorder %s26, 0
      %p216 = por %p214, %p215
      %s217 = sadd.s32 %s29, 1
      %s218 = smul.u32 %s217, 5
      %p219 = scmp.lt.s32.totalorder %s218, 4
      %s220 = scalar_select %p219, %s218, 4
      %s221 = sadd.s32 %s38, 1
      %s222 = smul.u32 %s221, 5
      %p223 = scmp.lt.s32.totalorder %s222, 4
      %s224 = scalar_select %p223, %s222, 4
      %s225 = ssub.s32 %s28, %s42
      %s226 = ssub.s32 %s220, %s224
      %s227 = sor.u32 %s225, %s226
      %p228 = scmp.eq.s32.totalorder %s227, 0
      %s230 = sadd.s32 %s229, 1
      %s231 = scalar_select %p228, %s229, %s230
      %p234 = pneg %p228
      %p235 = scmp.eq.s32.totalorder %s20, 5
      %p236 = por %p234, %p235
      %p237 = scmp.ne.s32.totalorder %s229, %s232
      %p238 = scmp.eq.s32.totalorder %s20, 0
      %p239 = por %p237, %p238
      %p240 = scmp.ne.s32.totalorder %s229, %s232
      %p241 = scmp.eq.s32.totalorder %s25, 5
      %p242 = por %p240, %p241
      %p243 = scmp.ne.s32.totalorder %s232, %s233
      %p244 = scmp.eq.s32.totalorder %s25, 0
      %p245 = por %p243, %p244
      %p246 = scmp.ne.s32.totalorder %s232, %s233
      %p247 = scmp.eq.s32.totalorder %s26, 5
      %p248 = por %p246, %p247
      %p250 = scmp.ne.s32.totalorder %s233, %s249
      %p251 = scmp.eq.s32.totalorder %s26, 0
      %p252 = por %p250, %p251
      %s253 = ssub.s32 %s27, %s46
      %p254 = scmp.eq.s32.totalorder %s253, 0
      %s256 = sadd.s32 %s255, 1
      %s257 = scalar_select %p254, %s255, %s256
      %p260 = pneg %p254
      %p261 = scmp.eq.s32.totalorder %s20, 5
      %p262 = por %p260, %p261
      %p263 = scmp.ne.s32.totalorder %s255, %s258
      %p264 = scmp.eq.s32.totalorder %s20, 0
      %p265 = por %p263, %p264
      %p266 = scmp.ne.s32.totalorder %s255, %s258
      %p267 = scmp.eq.s32.totalorder %s25, 5
      %p268 = por %p266, %p267
      %p269 = scmp.ne.s32.totalorder %s258, %s259
      %p270 = scmp.eq.s32.totalorder %s25, 0
      %p271 = por %p269, %p270
      %p272 = scmp.ne.s32.totalorder %s258, %s259
      %p273 = scmp.eq.s32.totalorder %s26, 5
      %p274 = por %p272, %p273
      %p276 = scmp.ne.s32.totalorder %s259, %s275
      %p277 = scmp.eq.s32.totalorder %s26, 0
      %p278 = por %p276, %p277
      %s279 = ssub.s32 %s27, %s46
      %p280 = scmp.eq.s32.totalorder %s279, 0
      %s282 = sadd.s32 %s281, 1
      %s283 = scalar_select %p280, %s281, %s282
      %p286 = pneg %p280
      %p287 = scmp.eq.s32.totalorder %s20, 5
      %p288 = por %p286, %p287
      %p289 = scmp.ne.s32.totalorder %s281, %s284
      %p290 = scmp.eq.s32.totalorder %s20, 0
      %p291 = por %p289, %p290
      %p292 = scmp.ne.s32.totalorder %s281, %s284
      %p293 = scmp.eq.s32.totalorder %s25, 5
      %p294 = por %p292, %p293
      %p295 = scmp.ne.s32.totalorder %s284, %s285
      %p296 = scmp.eq.s32.totalorder %s25, 0
      %p297 = por %p295, %p296
      %p298 = scmp.ne.s32.totalorder %s284, %s285
      %p299 = scmp.eq.s32.totalorder %s26, 5
      %p300 = por %p298, %p299
      %p302 = scmp.ne.s32.totalorder %s285, %s301
      %p303 = scmp.eq.s32.totalorder %s26, 0
      %p304 = por %p302, %p303
      %s305 = ssub.s32 %s27, %s46
      %p306 = scmp.eq.s32.totalorder %s305, 0
      %s308 = sadd.s32 %s307, 1
      %s309 = scalar_select %p306, %s307, %s308
      %p312 = pneg %p306
      %p313 = scmp.eq.s32.totalorder %s20, 5
      %p314 = por %p312, %p313
      %p315 = scmp.ne.s32.totalorder %s307, %s310
      %p316 = scmp.eq.s32.totalorder %s20, 0
      %p317 = por %p315, %p316
      %p318 = scmp.ne.s32.totalorder %s307, %s310
      %p319 = scmp.eq.s32.totalorder %s25, 5
      %p320 = por %p318, %p319
      %p321 = scmp.ne.s32.totalorder %s310, %s311
      %p322 = scmp.eq.s32.totalorder %s25, 0
      %p323 = por %p321, %p322
      %p324 = scmp.ne.s32.totalorder %s310, %s311
      %p325 = scmp.eq.s32.totalorder %s26, 5
      %p326 = por %p324, %p325
      %p328 = scmp.ne.s32.totalorder %s311, %s327
      %p329 = scmp.eq.s32.totalorder %s26, 0
      %p330 = por %p328, %p329
      %s331 = ssub.s32 %s27, %s46
      %p332 = scmp.eq.s32.totalorder %s331, 0
      %s334 = sadd.s32 %s333, 1
      %s335 = scalar_select %p332, %s333, %s334
      %p338 = pneg %p332
      %p339 = scmp.eq.s32.totalorder %s20, 5
      %p340 = por %p338, %p339
      %p341 = scmp.ne.s32.totalorder %s333, %s336
      %p342 = scmp.eq.s32.totalorder %s20, 0
      %p343 = por %p341, %p342
      %p344 = scmp.ne.s32.totalorder %s333, %s336
      %p345 = scmp.eq.s32.totalorder %s25, 5
      %p346 = por %p344, %p345
      %p347 = scmp.ne.s32.totalorder %s336, %s337
      %p348 = scmp.eq.s32.totalorder %s25, 0
      %p349 = por %p347, %p348
      %p350 = scmp.ne.s32.totalorder %s336, %s337
      %p351 = scmp.eq.s32.totalorder %s26, 5
      %p352 = por %p350, %p351
      %p354 = scmp.ne.s32.totalorder %s337, %s353
      %p355 = scmp.eq.s32.totalorder %s26, 0
      %p356 = por %p354, %p355
      %s357 = ssub.s32 %s27, %s46
      %p358 = scmp.eq.s32.totalorder %s357, 0
      %s360 = sadd.s32 %s359, 1
      %s361 = scalar_select %p358, %s359, %s360
      %p364 = pneg %p358
      %p365 = scmp.eq.s32.totalorder %s20, 5
      %p366 = por %p364, %p365
      %p367 = scmp.ne.s32.totalorder %s359, %s362
      %p368 = scmp.eq.s32.totalorder %s20, 0
      %p369 = por %p367, %p368
      %p370 = scmp.ne.s32.totalorder %s359, %s362
      %p371 = scmp.eq.s32.totalorder %s25, 5
      %p372 = por %p370, %p371
      %p373 = scmp.ne.s32.totalorder %s362, %s363
      %p374 = scmp.eq.s32.totalorder %s25, 0
      %p375 = por %p373, %p374
      %p376 = scmp.ne.s32.totalorder %s362, %s363
      %p377 = scmp.eq.s32.totalorder %s26, 5
      %p378 = por %p376, %p377
      %p380 = scmp.ne.s32.totalorder %s363, %s379
      %p381 = scmp.eq.s32.totalorder %s26, 0
      %p382 = por %p380, %p381
      %s383 = ssub.s32 %s27, %s46
      %p384 = scmp.eq.s32.totalorder %s383, 0
      %s386 = sadd.s32 %s385, 1
      %s387 = scalar_select %p384, %s385, %s386
      %p390 = pneg %p384
      %p391 = scmp.eq.s32.totalorder %s20, 5
      %p392 = por %p390, %p391
      %p393 = scmp.ne.s32.totalorder %s385, %s388
      %p394 = scmp.eq.s32.totalorder %s20, 0
      %p395 = por %p393, %p394
      %p396 = scmp.ne.s32.totalorder %s385, %s388
      %p397 = scmp.eq.s32.totalorder %s25, 5
      %p398 = por %p396, %p397
      %p399 = scmp.ne.s32.totalorder %s388, %s389
      %p400 = scmp.eq.s32.totalorder %s25, 0
      %p401 = por %p399, %p400
      %p402 = scmp.ne.s32.totalorder %s388, %s389
      %p403 = scmp.eq.s32.totalorder %s26, 5
      %p404 = por %p402, %p403
      %p406 = scmp.ne.s32.totalorder %s389, %s405
      %p407 = scmp.eq.s32.totalorder %s26, 0
      %p408 = por %p406, %p407
      %s409 = ssub.s32 %s27, %s46
      %p410 = scmp.eq.s32.totalorder %s409, 0
      %s412 = sadd.s32 %s411, 1
      %s413 = scalar_select %p410, %s411, %s412
      %p416 = pneg %p410
      %p417 = scmp.eq.s32.totalorder %s20, 5
      %p418 = por %p416, %p417
      %p419 = scmp.ne.s32.totalorder %s411, %s414
      %p420 = scmp.eq.s32.totalorder %s20, 0
      %p421 = por %p419, %p420
      %p422 = scmp.ne.s32.totalorder %s411, %s414
      %p423 = scmp.eq.s32.totalorder %s25, 5
      %p424 = por %p422, %p423
      %p425 = scmp.ne.s32.totalorder %s414, %s415
      %p426 = scmp.eq.s32.totalorder %s25, 0
      %p427 = por %p425, %p426
      %p428 = scmp.ne.s32.totalorder %s414, %s415
      %p429 = scmp.eq.s32.totalorder %s26, 5
      %p430 = por %p428, %p429
      %p432 = scmp.ne.s32.totalorder %s415, %s431
      %p433 = scmp.eq.s32.totalorder %s26, 0
      %p434 = por %p432, %p433
      %s435 = ssub.s32 %s27, %s46
      %p436 = scmp.eq.s32.totalorder %s435, 0
      %s438 = sadd.s32 %s437, 1
      %s439 = scalar_select %p436, %s437, %s438
      %p442 = pneg %p436
      %p443 = scmp.eq.s32.totalorder %s20, 5
      %p444 = por %p442, %p443
      %p445 = scmp.ne.s32.totalorder %s437, %s440
      %p446 = scmp.eq.s32.totalorder %s20, 0
      %p447 = por %p445, %p446
      %p448 = scmp.ne.s32.totalorder %s437, %s440
      %p449 = scmp.eq.s32.totalorder %s25, 5
      %p450 = por %p448, %p449
      %p451 = scmp.ne.s32.totalorder %s440, %s441
      %p452 = scmp.eq.s32.totalorder %s25, 0
      %p453 = por %p451, %p452
      %p454 = scmp.ne.s32.totalorder %s440, %s441
      %p455 = scmp.eq.s32.totalorder %s26, 5
      %p456 = por %p454, %p455
      %p458 = scmp.ne.s32.totalorder %s441, %s457
      %p459 = scmp.eq.s32.totalorder %s26, 0
      %p460 = por %p458, %p459
      %s461 = ssub.s32 %s27, %s46
      %s462 = ssub.s32 %s28, %s42
      %s463 = sor.u32 %s461, %s462
      %s464 = ssub.s32 %s29, %s38
      %s465 = sor.u32 %s463, %s464
      %p466 = scmp.eq.s32.totalorder %s465, 0
      %s468 = sadd.s32 %s467, 1
      %s469 = scalar_select %p466, %s467, %s468
      %p472 = pneg %p466
      %p473 = scmp.eq.s32.totalorder %s20, 5
      %p474 = por %p472, %p473
      %p475 = scmp.ne.s32.totalorder %s467, %s470
      %p476 = scmp.eq.s32.totalorder %s20, 0
      %p477 = por %p475, %p476
      %p478 = scmp.ne.s32.totalorder %s467, %s470
      %p479 = scmp.eq.s32.totalorder %s25, 5
      %p480 = por %p478, %p479
      %p481 = scmp.ne.s32.totalorder %s470, %s471
      %p482 = scmp.eq.s32.totalorder %s25, 0
      %p483 = por %p481, %p482
      %p484 = scmp.ne.s32.totalorder %s470, %s471
      %p485 = scmp.eq.s32.totalorder %s26, 5
      %p486 = por %p484, %p485
      %p488 = scmp.ne.s32.totalorder %s471, %s487
      %p489 = scmp.eq.s32.totalorder %s26, 0
      %p490 = por %p488, %p489
      %p491 = scmp.le.s32.totalorder 1, %s20
      %p492 = scmp.lt.s32.totalorder %s20, 7
      %p493 = pnand %p491, %p492
      %p494 = pneg %p493
      // Predicated region
      $region9: #{parallel_tcns_forward.3} parent=5 // pred_check
        _
      $region10: #{parallel_tcns_forward.3} parent=5 // pred_check_branch
        %496 = sbr.rel (%p493) target = $region12
      $region11: #{parallel_tcns_forward.3} parent=5 // pred_region
        %s497 = ssub.s32 %s20, 1
      $region12: #{parallel_tcns_forward.3} parent=5 // pred_fallthru
        _
      %p498 = scmp.lt.s32.totalorder %s20, 6
      // Predicated region
      $region13: #{parallel_tcns_forward.3} parent=5 // pred_check
        %p499 = pneg %p498
      $region14: #{parallel_tcns_forward.3} parent=5 // pred_check_branch
        %501 = sbr.rel (%p499) target = $region16
      $region15: #{parallel_tcns_forward.3} parent=5 // pred_region
        // Predicated region
        $region17: #{parallel_tcns_forward.3} parent=15 // pred_check
          %p502 = pneg %p71
        $region18: #{parallel_tcns_forward.3} parent=15 // pred_check_branch
          %504 = sbr.rel (%p502) target = $region20
        $region19: #{parallel_tcns_forward.3} parent=15 // pred_region
          %s505 = sand.u32 %s61, 1
          %s506 = sand.u32 %s61, 1
          %s507 = smul.addr %s506, 32
          %s508 = scalar_lea.vmem [#allocation4], %s507
          %s509 = smul.u32 %s29, 5
          %s510 = ssub.s32 %s509, 1
          %p511 = scmp.gt.s32.totalorder %s510, 0
          %s512 = scalar_select %p511, %s510, 0
          %s513 = smul.addr %s28, 20
          %s514 = sadd.s32 %s512, %s513
          %s515 = smul.addr %s27, 40
          %s516 = sadd.s32 %s514, %s515
          %s517 = smul.addr %s516, 8
          %s518 = scalar_lea.vmem %s0, %s517
          // Predicated region
          $region21: #{parallel_tcns_forward.3} parent=19 // pred_check
            _
          $region22: #{parallel_tcns_forward.3} parent=19 // pred_check_branch
            %520 = sbr.rel (0) target = $region24
          $region23: #{parallel_tcns_forward.3} parent=19 // pred_region
            // Predicated region
            $region25: #{parallel_tcns_forward.3} parent=23 // pred_check
              _
            $region26: #{parallel_tcns_forward.3} parent=23 // pred_check_branch
              %522 = sbr.rel (0) target = $region28
            $region27: #{parallel_tcns_forward.3} parent=23 // pred_region
              // Predicated region
              $region40: #{parallel_tcns_forward.3} parent=27 // pred_check
                _
              $region41: #{parallel_tcns_forward.3} parent=27 // pred_check_branch
                %544 = sbr.rel (0) target = $region43
              $region42: #{parallel_tcns_forward.3} parent=27 // pred_region
                loop: start=0, step=1, limit=1
                $region44: #{parallel_tcns_forward.3} parent=42 // loop_pre_header
                  _
                $region45: #{parallel_tcns_forward.3} parent=42 // loop_header
                  %s546 = sphi 0, %s550
                  %p547 = scmp.ge.s32.totalorder %s546, 1
                  %s551 = sphi %s518, %s518
                  %s552 = sphi %s508, %s508
                $region46: #{parallel_tcns_forward.3} parent=42 // loop_header_branch
                  %549 = sbr.rel (%p547) target = $region50
                $region47: #{parallel_tcns_forward.3} parent=42 // loop_body
                  %v553 = vld [vmem:[%s551] sm:$0xff]
                  %554 = vst [vmem:[%s552] sm:$0xff] %v553
                  %v555 = vld [vmem:[%s551 + $0x28] sm:$0xff]
                  %556 = vst [vmem:[%s552 + $0x8] sm:$0xff] %v555
                  %v557 = vld [vmem:[%s551 + $0x50] sm:$0xff]
                  %558 = vst [vmem:[%s552 + $0x10] sm:$0xff] %v557
                  %v559 = vld [vmem:[%s551 + $0x78] sm:$0xff]
                  %560 = vst [vmem:[%s552 + $0x18] sm:$0xff] %v559
                $region48: #{parallel_tcns_forward.3} parent=42 // loop_footer
                  %s550 = sadd.s32 1, %s546
                $region49: #{parallel_tcns_forward.3} parent=42 // loop_footer_branch
                  %545 = sbr.rel target = $region45
                $region50: #{parallel_tcns_forward.3} parent=42 // loop_exit
                  _
              $region43: #{parallel_tcns_forward.3} parent=27 // pred_fallthru
                _
              // Predicated region
              $region51: #{parallel_tcns_forward.3} parent=27 // pred_check
                _
              $region52: #{parallel_tcns_forward.3} parent=27 // pred_check_branch
                %562 = sbr.rel target = $region54
              $region53: #{parallel_tcns_forward.3} parent=27 // pred_region
                _
              $region54: #{parallel_tcns_forward.3} parent=27 // pred_fallthru
                _
            $region28: #{parallel_tcns_forward.3} parent=23 // pred_fallthru
              _
            // Predicated region
            $region29: #{parallel_tcns_forward.3} parent=23 // pred_check
              _
            $region30: #{parallel_tcns_forward.3} parent=23 // pred_check_branch
              %524 = sbr.rel target = $region32
            $region31: #{parallel_tcns_forward.3} parent=23 // pred_region
              %s526 = ssub.s32 256, 1
              loop: start=0, step=1, limit=1
              $region33: #{parallel_tcns_forward.3} parent=31 // loop_pre_header
                _
              $region34: #{parallel_tcns_forward.3} parent=31 // loop_header
                %s528 = sphi 0, %s532
                %p529 = scmp.ge.s32.totalorder %s528, 1
                %s533 = sphi %s518, %s518
                %s534 = sphi %s508, %s508
              $region35: #{parallel_tcns_forward.3} parent=31 // loop_header_branch
                %531 = sbr.rel (%p529) target = $region39
              $region36: #{parallel_tcns_forward.3} parent=31 // loop_body
                %v535 = vld [vmem:[%s533] sm:%s526]
                %536 = vst [vmem:[%s534] sm:%s526] %v535
                %v537 = vld [vmem:[%s533 + $0x28] sm:%s526]
                %538 = vst [vmem:[%s534 + $0x8] sm:%s526] %v537
                %v539 = vld [vmem:[%s533 + $0x50] sm:%s526]
                %540 = vst [vmem:[%s534 + $0x10] sm:%s526] %v539
                %v541 = vld [vmem:[%s533 + $0x78] sm:%s526]
                %542 = vst [vmem:[%s534 + $0x18] sm:%s526] %v541
              $region37: #{parallel_tcns_forward.3} parent=31 // loop_footer
                %s532 = sadd.s32 1, %s528
              $region38: #{parallel_tcns_forward.3} parent=31 // loop_footer_branch
                %527 = sbr.rel target = $region34
              $region39: #{parallel_tcns_forward.3} parent=31 // loop_exit
                _
            $region32: #{parallel_tcns_forward.3} parent=23 // pred_fallthru
              _
          $region24: #{parallel_tcns_forward.3} parent=19 // pred_fallthru
            _
          %563 = vnop
        $region20: #{parallel_tcns_forward.3} parent=15 // pred_fallthru
          _
        // Predicated region
        $region55: #{parallel_tcns_forward.3} parent=15 // pred_check
          %p564 = pneg %p101
        $region56: #{parallel_tcns_forward.3} parent=15 // pred_check_branch
          %566 = sbr.rel (%p564) target = $region58
        $region57: #{parallel_tcns_forward.3} parent=15 // pred_region
          %s567 = smul.u32 5, %s29
          %p568 = scmp.lt.s32.totalorder %s27, 2
          %s569 = scalar_select %p568, %s27, 2
          %p570 = scmp.lt.s32.totalorder %s28, 1
          %s571 = scalar_select %p570, %s28, 1
          %p572 = scmp.lt.s32.totalorder %s567, 4
          %s573 = scalar_select %p572, %s567, 4
          %s574 = smul.addr %s571, 20
          %s575 = sadd.s32 %s573, %s574
          %s576 = smul.addr %s569, 40
          %s577 = sadd.s32 %s575, %s576
          %s578 = smul.addr %s577, 8
          %s579 = scalar_lea.vmem %s1, %s578
          %s580 = smul.u32 5, %s29
        $region58: #{parallel_tcns_forward.3} parent=15 // pred_fallthru
          _
        // Predicated region
        $region59: #{parallel_tcns_forward.3} parent=15 // pred_check
          %p581 = pneg %p139
        $region60: #{parallel_tcns_forward.3} parent=15 // pred_check_branch
          %583 = sbr.rel (%p581) target = $region62
        $region61: #{parallel_tcns_forward.3} parent=15 // pred_region
          %s584 = sand.u32 %s129, 1
          %s585 = sand.u32 %s129, 1
          %s586 = smul.addr %s585, 32
          %s587 = scalar_lea.vmem [#allocation5], %s586
          %s588 = sadd.s32 %s29, 1
          %s589 = smul.u32 %s588, 5
          %p590 = scmp.lt.s32.totalorder %s589, 4
          %s591 = scalar_select %p590, %s589, 4
          %s592 = smul.addr %s28, 20
          %s593 = sadd.s32 %s591, %s592
          %s594 = smul.addr %s27, 40
          %s595 = sadd.s32 %s593, %s594
          %s596 = smul.addr %s595, 8
          %s597 = scalar_lea.vmem %s2, %s596
          // Predicated region
          $region63: #{parallel_tcns_forward.3} parent=61 // pred_check
            _
          $region64: #{parallel_tcns_forward.3} parent=61 // pred_check_branch
            %599 = sbr.rel (0) target = $region66
          $region65: #{parallel_tcns_forward.3} parent=61 // pred_region
            // Predicated region
            $region67: #{parallel_tcns_forward.3} parent=65 // pred_check
              _
            $region68: #{parallel_tcns_forward.3} parent=65 // pred_check_branch
              %601 = sbr.rel (0) target = $region70
            $region69: #{parallel_tcns_forward.3} parent=65 // pred_region
              // Predicated region
              $region82: #{parallel_tcns_forward.3} parent=69 // pred_check
                _
              $region83: #{parallel_tcns_forward.3} parent=69 // pred_check_branch
                %623 = sbr.rel (0) target = $region85
              $region84: #{parallel_tcns_forward.3} parent=69 // pred_region
                loop: start=0, step=1, limit=1
                $region86: #{parallel_tcns_forward.3} parent=84 // loop_pre_header
                  _
                $region87: #{parallel_tcns_forward.3} parent=84 // loop_header
                  %s625 = sphi 0, %s629
                  %p626 = scmp.ge.s32.totalorder %s625, 1
                  %s630 = sphi %s597, %s597
                  %s631 = sphi %s587, %s587
                $region88: #{parallel_tcns_forward.3} parent=84 // loop_header_branch
                  %628 = sbr.rel (%p626) target = $region92
                $region89: #{parallel_tcns_forward.3} parent=84 // loop_body
                  %v632 = vld [vmem:[%s630] sm:$0xff]
                  %633 = vst [vmem:[%s631] sm:$0xff] %v632
                  %v634 = vld [vmem:[%s630 + $0x28] sm:$0xff]
                  %635 = vst [vmem:[%s631 + $0x8] sm:$0xff] %v634
                  %v636 = vld [vmem:[%s630 + $0x50] sm:$0xff]
                  %637 = vst [vmem:[%s631 + $0x10] sm:$0xff] %v636
                  %v638 = vld [vmem:[%s630 + $0x78] sm:$0xff]
                  %639 = vst [vmem:[%s631 + $0x18] sm:$0xff] %v638
                $region90: #{parallel_tcns_forward.3} parent=84 // loop_footer
                  %s629 = sadd.s32 1, %s625
                $region91: #{parallel_tcns_forward.3} parent=84 // loop_footer_branch
                  %624 = sbr.rel target = $region87
                $region92: #{parallel_tcns_forward.3} parent=84 // loop_exit
                  _
              $region85: #{parallel_tcns_forward.3} parent=69 // pred_fallthru
                _
              // Predicated region
              $region93: #{parallel_tcns_forward.3} parent=69 // pred_check
                _
              $region94: #{parallel_tcns_forward.3} parent=69 // pred_check_branch
                %641 = sbr.rel target = $region96
              $region95: #{parallel_tcns_forward.3} parent=69 // pred_region
                _
              $region96: #{parallel_tcns_forward.3} parent=69 // pred_fallthru
                _
            $region70: #{parallel_tcns_forward.3} parent=65 // pred_fallthru
              _
            // Predicated region
            $region71: #{parallel_tcns_forward.3} parent=65 // pred_check
              _
            $region72: #{parallel_tcns_forward.3} parent=65 // pred_check_branch
              %603 = sbr.rel target = $region74
            $region73: #{parallel_tcns_forward.3} parent=65 // pred_region
              %s605 = ssub.s32 256, 1
              loop: start=0, step=1, limit=1
              $region75: #{parallel_tcns_forward.3} parent=73 // loop_pre_header
                _
              $region76: #{parallel_tcns_forward.3} parent=73 // loop_header
                %s607 = sphi 0, %s611
                %p608 = scmp.ge.s32.totalorder %s607, 1
                %s612 = sphi %s597, %s597
                %s613 = sphi %s587, %s587
              $region77: #{parallel_tcns_forward.3} parent=73 // loop_header_branch
                %610 = sbr.rel (%p608) target = $region81
              $region78: #{parallel_tcns_forward.3} parent=73 // loop_body
                %v614 = vld [vmem:[%s612] sm:%s605]
                %615 = vst [vmem:[%s613] sm:%s605] %v614
                %v616 = vld [vmem:[%s612 + $0x28] sm:%s605]
                %617 = vst [vmem:[%s613 + $0x8] sm:%s605] %v616
                %v618 = vld [vmem:[%s612 + $0x50] sm:%s605]
                %619 = vst [vmem:[%s613 + $0x10] sm:%s605] %v618
                %v620 = vld [vmem:[%s612 + $0x78] sm:%s605]
                %621 = vst [vmem:[%s613 + $0x18] sm:%s605] %v620
              $region79: #{parallel_tcns_forward.3} parent=73 // loop_footer
                %s611 = sadd.s32 1, %s607
              $region80: #{parallel_tcns_forward.3} parent=73 // loop_footer_branch
                %606 = sbr.rel target = $region76
              $region81: #{parallel_tcns_forward.3} parent=73 // loop_exit
                _
            $region74: #{parallel_tcns_forward.3} parent=65 // pred_fallthru
              _
          $region66: #{parallel_tcns_forward.3} parent=61 // pred_fallthru
            _
          %642 = vnop
        $region62: #{parallel_tcns_forward.3} parent=15 // pred_fallthru
          _
        // Predicated region
        $region97: #{parallel_tcns_forward.3} parent=15 // pred_check
          %p643 = pneg %p175
        $region98: #{parallel_tcns_forward.3} parent=15 // pred_check_branch
          %645 = sbr.rel (%p643) target = $region100
        $region99: #{parallel_tcns_forward.3} parent=15 // pred_region
          %s646 = smul.u32 %s29, 5
          %s647 = ssub.s32 %s646, 1
          %p648 = scmp.gt.s32.totalorder %s647, 0
          %s649 = scalar_select %p648, %s647, 0
          %p650 = scmp.lt.s32.totalorder %s28, 1
          %s651 = scalar_select %p650, %s28, 1
          %p652 = scmp.lt.s32.totalorder %s649, 4
          %s653 = scalar_select %p652, %s649, 4
          %s654 = smul.addr %s651, 5
          %s655 = sadd.s32 %s653, %s654
          %s656 = scalar_lea.vmem %s3, %s655
          %s657 = smul.u32 %s29, 5
          %s658 = ssub.s32 %s657, 1
          %p659 = scmp.gt.s32.totalorder %s658, 0
          %s660 = scalar_select %p659, %s658, 0
        $region100: #{parallel_tcns_forward.3} parent=15 // pred_fallthru
          _
        // Predicated region
        $region101: #{parallel_tcns_forward.3} parent=15 // pred_check
          %p661 = pneg %p203
        $region102: #{parallel_tcns_forward.3} parent=15 // pred_check_branch
          %663 = sbr.rel (%p661) target = $region104
        $region103: #{parallel_tcns_forward.3} parent=15 // pred_region
          %s664 = smul.u32 5, %s29
          %p665 = scmp.lt.s32.totalorder %s28, 1
          %s666 = scalar_select %p665, %s28, 1
          %p667 = scmp.lt.s32.totalorder %s664, 4
          %s668 = scalar_select %p667, %s664, 4
          %s669 = smul.addr %s666, 5
          %s670 = sadd.s32 %s668, %s669
          %s671 = scalar_lea.vmem %s4, %s670
          %s672 = smul.u32 5, %s29
        $region104: #{parallel_tcns_forward.3} parent=15 // pred_fallthru
          _
        // Predicated region
        $region105: #{parallel_tcns_forward.3} parent=15 // pred_check
          %p673 = pneg %p239
        $region106: #{parallel_tcns_forward.3} parent=15 // pred_check_branch
          %675 = sbr.rel (%p673) target = $region108
        $region107: #{parallel_tcns_forward.3} parent=15 // pred_region
          %s676 = sadd.s32 %s29, 1
          %s677 = smul.u32 %s676, 5
          %p678 = scmp.lt.s32.totalorder %s677, 4
          %s679 = scalar_select %p678, %s677, 4
          %p680 = scmp.lt.s32.totalorder %s28, 1
          %s681 = scalar_select %p680, %s28, 1
          %p682 = scmp.lt.s32.totalorder %s679, 4
          %s683 = scalar_select %p682, %s679, 4
          %s684 = smul.addr %s681, 5
          %s685 = sadd.s32 %s683, %s684
          %s686 = scalar_lea.vmem %s5, %s685
          %s687 = sadd.s32 %s29, 1
          %s688 = smul.u32 %s687, 5
          %p689 = scmp.lt.s32.totalorder %s688, 4
          %s690 = scalar_select %p689, %s688, 4
        $region108: #{parallel_tcns_forward.3} parent=15 // pred_fallthru
          _
        // Predicated region
        $region109: #{parallel_tcns_forward.3} parent=15 // pred_check
          %p691 = pneg %p265
        $region110: #{parallel_tcns_forward.3} parent=15 // pred_check_branch
          %693 = sbr.rel (%p691) target = $region112
        $region111: #{parallel_tcns_forward.3} parent=15 // pred_region
          %p694 = scmp.lt.s32.totalorder %s27, 2
          %s695 = scalar_select %p694, %s27, 2
          %s696 = smul.addr %s695, 36
          %s697 = smul.addr %s696, 4
          %s698 = scalar_lea.vmem %s6, %s697
        $region112: #{parallel_tcns_forward.3} parent=15 // pred_fallthru
          _
        // Predicated region
        $region113: #{parallel_tcns_forward.3} parent=15 // pred_check
          %p699 = pneg %p291
        $region114: #{parallel_tcns_forward.3} parent=15 // pred_check_branch
          %701 = sbr.rel (%p699) target = $region116
        $region115: #{parallel_tcns_forward.3} parent=15 // pred_region
          %p702 = scmp.lt.s32.totalorder %s27, 2
          %s703 = scalar_select %p702, %s27, 2
          %s704 = smul.addr %s703, 12
          %s705 = smul.addr %s704, 8
          %s706 = scalar_lea.vmem %s7, %s705
        $region116: #{parallel_tcns_forward.3} parent=15 // pred_fallthru
          _
        // Predicated region
        $region117: #{parallel_tcns_forward.3} parent=15 // pred_check
          %p707 = pneg %p317
        $region118: #{parallel_tcns_forward.3} parent=15 // pred_check_branch
          %709 = sbr.rel (%p707) target = $region120
        $region119: #{parallel_tcns_forward.3} parent=15 // pred_region
          %p710 = scmp.lt.s32.totalorder %s27, 2
          %s711 = scalar_select %p710, %s27, 2
          %s712 = smul.addr %s711, 12
          %s713 = smul.addr %s712, 4
          %s714 = scalar_lea.vmem %s8, %s713
        $region120: #{parallel_tcns_forward.3} parent=15 // pred_fallthru
          _
        // Predicated region
        $region121: #{parallel_tcns_forward.3} parent=15 // pred_check
          %p715 = pneg %p343
        $region122: #{parallel_tcns_forward.3} parent=15 // pred_check_branch
          %717 = sbr.rel (%p715) target = $region124
        $region123: #{parallel_tcns_forward.3} parent=15 // pred_region
          %p718 = scmp.lt.s32.totalorder %s27, 2
          %s719 = scalar_select %p718, %s27, 2
          %s720 = smul.addr %s719, 12
          %s721 = smul.addr %s720, 8
          %s722 = scalar_lea.vmem %s9, %s721
        $region124: #{parallel_tcns_forward.3} parent=15 // pred_fallthru
          _
        // Predicated region
        $region125: #{parallel_tcns_forward.3} parent=15 // pred_check
          %p723 = pneg %p369
        $region126: #{parallel_tcns_forward.3} parent=15 // pred_check_branch
          %725 = sbr.rel (%p723) target = $region128
        $region127: #{parallel_tcns_forward.3} parent=15 // pred_region
          %p726 = scmp.lt.s32.totalorder %s27, 2
          %s727 = scalar_select %p726, %s27, 2
          %s728 = smul.addr %s727, 2
          %s729 = smul.addr %s728, 4
          %s730 = scalar_lea.vmem %s10, %s729
        $region128: #{parallel_tcns_forward.3} parent=15 // pred_fallthru
          _
        // Predicated region
        $region129: #{parallel_tcns_forward.3} parent=15 // pred_check
          %p731 = pneg %p395
        $region130: #{parallel_tcns_forward.3} parent=15 // pred_check_branch
          %733 = sbr.rel (%p731) target = $region132
        $region131: #{parallel_tcns_forward.3} parent=15 // pred_region
          %p734 = scmp.lt.s32.totalorder %s27, 2
          %s735 = scalar_select %p734, %s27, 2
          %s736 = smul.addr %s735, 2
          %s737 = smul.addr %s736, 8
          %s738 = scalar_lea.vmem %s11, %s737
        $region132: #{parallel_tcns_forward.3} parent=15 // pred_fallthru
          _
        // Predicated region
        $region133: #{parallel_tcns_forward.3} parent=15 // pred_check
          %p739 = pneg %p421
        $region134: #{parallel_tcns_forward.3} parent=15 // pred_check_branch
          %741 = sbr.rel (%p739) target = $region136
        $region135: #{parallel_tcns_forward.3} parent=15 // pred_region
          %p742 = scmp.lt.s32.totalorder %s27, 2
          %s743 = scalar_select %p742, %s27, 2
          %s744 = smul.addr %s743, 2
          %s745 = smul.addr %s744, 4
          %s746 = scalar_lea.vmem %s12, %s745
        $region136: #{parallel_tcns_forward.3} parent=15 // pred_fallthru
          _
        // Predicated region
        $region137: #{parallel_tcns_forward.3} parent=15 // pred_check
          %p747 = pneg %p447
        $region138: #{parallel_tcns_forward.3} parent=15 // pred_check_branch
          %749 = sbr.rel (%p747) target = $region140
        $region139: #{parallel_tcns_forward.3} parent=15 // pred_region
          %p750 = scmp.lt.s32.totalorder %s27, 2
          %s751 = scalar_select %p750, %s27, 2
          %s752 = smul.addr %s751, 2
          %s753 = smul.addr %s752, 8
          %s754 = scalar_lea.vmem %s13, %s753
        $region140: #{parallel_tcns_forward.3} parent=15 // pred_fallthru
          _
      $region16: #{parallel_tcns_forward.3} parent=5 // pred_fallthru
        _
      %p755 = scmp.le.s32.totalorder 1, %s20
      %p756 = scmp.lt.s32.totalorder %s20, 7
      %p757 = pnand %p755, %p756
      %p758 = pneg %p757
      // Predicated region
      $region141: #{parallel_tcns_forward.3} parent=5 // pred_check
        _
      $region142: #{parallel_tcns_forward.3} parent=5 // pred_check_branch
        %760 = sbr.rel (%p757) target = $region144
      $region143: #{parallel_tcns_forward.3} parent=5 // pred_region
        %s761 = ssub.s32 %s20, 1
        %s762 = sand.u32 %s64, 1
        %s763 = sand.u32 %s64, 1
        %s764 = smul.addr %s763, 32
        %s765 = scalar_lea.vmem [#allocation4], %s764
        // Predicated region
        $region145: #{parallel_tcns_forward.3} parent=143 // pred_check
          %p766 = pneg %p77
        $region146: #{parallel_tcns_forward.3} parent=143 // pred_check_branch
          %768 = sbr.rel (%p766) target = $region148
        $region147: #{parallel_tcns_forward.3} parent=143 // pred_region
          _
        $region148: #{parallel_tcns_forward.3} parent=143 // pred_fallthru
          _
        %s769 = sand.u32 %s132, 1
        %s770 = sand.u32 %s132, 1
        %s771 = smul.addr %s770, 32
        %s772 = scalar_lea.vmem [#allocation5], %s771
        // Predicated region
        $region149: #{parallel_tcns_forward.3} parent=143 // pred_check
          %p773 = pneg %p145
        $region150: #{parallel_tcns_forward.3} parent=143 // pred_check_branch
          %775 = sbr.rel (%p773) target = $region152
        $region151: #{parallel_tcns_forward.3} parent=143 // pred_region
          _
        $region152: #{parallel_tcns_forward.3} parent=143 // pred_fallthru
          _
        %s776 = sand.u32 %s64, 1
        %s777 = sand.u32 %s64, 1
        %s778 = smul.addr %s777, 32
        %s779 = scalar_lea.vmem [#allocation4], %s778
        %p780 = pneg %p77
        %p781 = pneg %p74
        %s782 = smul.u32 5, %s32
        %p783 = scmp.lt.s32.totalorder %s30, 2
        %s784 = scalar_select %p783, %s30, 2
        %p785 = scmp.lt.s32.totalorder %s31, 1
        %s786 = scalar_select %p785, %s31, 1
        %p787 = scmp.lt.s32.totalorder %s782, 4
        %s788 = scalar_select %p787, %s782, 4
        %s789 = smul.addr %s786, 20
        %s790 = sadd.s32 %s788, %s789
        %s791 = smul.addr %s784, 40
        %s792 = sadd.s32 %s790, %s791
        %s793 = smul.addr %s792, 8
        %s794 = scalar_lea.vmem %s1, %s793
        %p795 = pneg %p107
        %p796 = pneg %p104
        %s797 = sand.u32 %s132, 1
        %s798 = sand.u32 %s132, 1
        %s799 = smul.addr %s798, 32
        %s800 = scalar_lea.vmem [#allocation5], %s799
        %p801 = pneg %p145
        %p802 = pneg %p142
        %s803 = smul.u32 %s32, 5
        %s804 = ssub.s32 %s803, 1
        %p805 = scmp.gt.s32.totalorder %s804, 0
        %s806 = scalar_select %p805, %s804, 0
        %p807 = scmp.lt.s32.totalorder %s31, 1
        %s808 = scalar_select %p807, %s31, 1
        %p809 = scmp.lt.s32.totalorder %s806, 4
        %s810 = scalar_select %p809, %s806, 4
        %s811 = smul.addr %s808, 5
        %s812 = sadd.s32 %s810, %s811
        %s813 = scalar_lea.vmem %s3, %s812
        %p814 = pneg %p181
        %p815 = pneg %p178
        %s816 = smul.u32 5, %s32
        %p817 = scmp.lt.s32.totalorder %s31, 1
        %s818 = scalar_select %p817, %s31, 1
        %p819 = scmp.lt.s32.totalorder %s816, 4
        %s820 = scalar_select %p819, %s816, 4
        %s821 = smul.addr %s818, 5
        %s822 = sadd.s32 %s820, %s821
        %s823 = scalar_lea.vmem %s4, %s822
        %p824 = pneg %p209
        %p825 = pneg %p206
        %s826 = sadd.s32 %s32, 1
        %s827 = smul.u32 %s826, 5
        %p828 = scmp.lt.s32.totalorder %s827, 4
        %s829 = scalar_select %p828, %s827, 4
        %p830 = scmp.lt.s32.totalorder %s31, 1
        %s831 = scalar_select %p830, %s31, 1
        %p832 = scmp.lt.s32.totalorder %s829, 4
        %s833 = scalar_select %p832, %s829, 4
        %s834 = smul.addr %s831, 5
        %s835 = sadd.s32 %s833, %s834
        %s836 = scalar_lea.vmem %s5, %s835
        %p837 = pneg %p245
        %p838 = pneg %p242
        %p839 = scmp.lt.s32.totalorder %s30, 2
        %s840 = scalar_select %p839, %s30, 2
        %s841 = smul.addr %s840, 36
        %s842 = smul.addr %s841, 4
        %s843 = scalar_lea.vmem %s6, %s842
        %p844 = pneg %p271
        %p845 = pneg %p268
        %p846 = scmp.lt.s32.totalorder %s30, 2
        %s847 = scalar_select %p846, %s30, 2
        %s848 = smul.addr %s847, 12
        %s849 = smul.addr %s848, 8
        %s850 = scalar_lea.vmem %s7, %s849
        %p851 = pneg %p297
        %p852 = pneg %p294
        %p853 = scmp.lt.s32.totalorder %s30, 2
        %s854 = scalar_select %p853, %s30, 2
        %s855 = smul.addr %s854, 12
        %s856 = smul.addr %s855, 4
        %s857 = scalar_lea.vmem %s8, %s856
        %p858 = pneg %p323
        %p859 = pneg %p320
        %p860 = scmp.lt.s32.totalorder %s30, 2
        %s861 = scalar_select %p860, %s30, 2
        %s862 = smul.addr %s861, 12
        %s863 = smul.addr %s862, 8
        %s864 = scalar_lea.vmem %s9, %s863
        %p865 = pneg %p349
        %p866 = pneg %p346
        %p867 = scmp.lt.s32.totalorder %s30, 2
        %s868 = scalar_select %p867, %s30, 2
        %s869 = smul.addr %s868, 2
        %s870 = smul.addr %s869, 4
        %s871 = scalar_lea.vmem %s10, %s870
        %p872 = pneg %p375
        %p873 = pneg %p372
        %p874 = scmp.lt.s32.totalorder %s30, 2
        %s875 = scalar_select %p874, %s30, 2
        %s876 = smul.addr %s875, 2
        %s877 = smul.addr %s876, 8
        %s878 = scalar_lea.vmem %s11, %s877
        %p879 = pneg %p401
        %p880 = pneg %p398
        %p881 = scmp.lt.s32.totalorder %s30, 2
        %s882 = scalar_select %p881, %s30, 2
        %s883 = smul.addr %s882, 2
        %s884 = smul.addr %s883, 4
        %s885 = scalar_lea.vmem %s12, %s884
        %p886 = pneg %p427
        %p887 = pneg %p424
        %p888 = scmp.lt.s32.totalorder %s30, 2
        %s889 = scalar_select %p888, %s30, 2
        %s890 = smul.addr %s889, 2
        %s891 = smul.addr %s890, 8
        %s892 = scalar_lea.vmem %s13, %s891
        %p893 = pneg %p453
        %p894 = pneg %p450
        %p895 = pneg %p483
        %p896 = pneg %p480
        %s897 = smul.u32 5, %s32
        %p898 = scmp.lt.s32.totalorder %s30, 2
        %s899 = scalar_select %p898, %s30, 2
        %p900 = scmp.lt.s32.totalorder %s31, 1
        %s901 = scalar_select %p900, %s31, 1
        %p902 = scmp.lt.s32.totalorder %s897, 4
        %s903 = scalar_select %p902, %s897, 4
        %s904 = smul.addr %s901, 10
        %s905 = sadd.s32 %s903, %s904
        %s906 = smul.addr %s899, 20
        %s907 = sadd.s32 %s905, %s906
        %s908 = smul.addr %s907, 8
        %s909 = scalar_lea.vmem %s14, %s908
        %s910 = smul.u32 %s32, 5
        %s911 = ssub.s32 %s910, 1
        %p912 = scmp.gt.s32.totalorder %s911, 0
        %s913 = scalar_select %p912, %s911, 0
        %s914 = smul.u32 5, %s32
        %p915 = scmp.lt.s32.totalorder %s30, 2
        %s916 = scalar_select %p915, %s30, 2
        %p917 = scmp.lt.s32.totalorder %s31, 1
        %s918 = scalar_select %p917, %s31, 1
        %p919 = scmp.lt.s32.totalorder %s914, 4
        %s920 = scalar_select %p919, %s914, 4
        %s921 = smul.addr %s918, 20
        %s922 = sadd.s32 %s920, %s921
        %s923 = smul.addr %s916, 40
        %s924 = sadd.s32 %s922, %s923
        %s925 = smul.addr %s924, 8
        %s926 = scalar_lea.vmem %s1, %s925
        %s927 = smul.u32 5, %s32
        %s928 = sadd.s32 %s32, 1
        %s929 = smul.u32 %s928, 5
        %p930 = scmp.lt.s32.totalorder %s929, 4
        %s931 = scalar_select %p930, %s929, 4
        %s932 = smul.u32 %s32, 5
        %s933 = ssub.s32 %s932, 1
        %p934 = scmp.gt.s32.totalorder %s933, 0
        %s935 = scalar_select %p934, %s933, 0
        %p936 = scmp.lt.s32.totalorder %s31, 1
        %s937 = scalar_select %p936, %s31, 1
        %p938 = scmp.lt.s32.totalorder %s935, 4
        %s939 = scalar_select %p938, %s935, 4
        %s940 = smul.addr %s937, 5
        %s941 = sadd.s32 %s939, %s940
        %s942 = scalar_lea.vmem %s3, %s941
        %s943 = smul.u32 %s32, 5
        %s944 = ssub.s32 %s943, 1
        %p945 = scmp.gt.s32.totalorder %s944, 0
        %s946 = scalar_select %p945, %s944, 0
        %s947 = smul.u32 5, %s32
        %p948 = scmp.lt.s32.totalorder %s31, 1
        %s949 = scalar_select %p948, %s31, 1
        %p950 = scmp.lt.s32.totalorder %s947, 4
        %s951 = scalar_select %p950, %s947, 4
        %s952 = smul.addr %s949, 5
        %s953 = sadd.s32 %s951, %s952
        %s954 = scalar_lea.vmem %s4, %s953
        %s955 = smul.u32 5, %s32
        %s956 = sadd.s32 %s32, 1
        %s957 = smul.u32 %s956, 5
        %p958 = scmp.lt.s32.totalorder %s957, 4
        %s959 = scalar_select %p958, %s957, 4
        %p960 = scmp.lt.s32.totalorder %s31, 1
        %s961 = scalar_select %p960, %s31, 1
        %p962 = scmp.lt.s32.totalorder %s959, 4
        %s963 = scalar_select %p962, %s959, 4
        %s964 = smul.addr %s961, 5
        %s965 = sadd.s32 %s963, %s964
        %s966 = scalar_lea.vmem %s5, %s965
        %s967 = sadd.s32 %s32, 1
        %s968 = smul.u32 %s967, 5
        %p969 = scmp.lt.s32.totalorder %s968, 4
        %s970 = scalar_select %p969, %s968, 4
        %p971 = scmp.lt.s32.totalorder %s30, 2
        %s972 = scalar_select %p971, %s30, 2
        %s973 = smul.addr %s972, 36
        %s974 = smul.addr %s973, 4
        %s975 = scalar_lea.vmem %s6, %s974
        %p976 = scmp.lt.s32.totalorder %s30, 2
        %s977 = scalar_select %p976, %s30, 2
        %s978 = smul.addr %s977, 12
        %s979 = smul.addr %s978, 8
        %s980 = scalar_lea.vmem %s7, %s979
        %p981 = scmp.lt.s32.totalorder %s30, 2
        %s982 = scalar_select %p981, %s30, 2
        %s983 = smul.addr %s982, 12
        %s984 = smul.addr %s983, 4
        %s985 = scalar_lea.vmem %s8, %s984
        %p986 = scmp.lt.s32.totalorder %s30, 2
        %s987 = scalar_select %p986, %s30, 2
        %s988 = smul.addr %s987, 12
        %s989 = smul.addr %s988, 8
        %s990 = scalar_lea.vmem %s9, %s989
        %p991 = scmp.lt.s32.totalorder %s30, 2
        %s992 = scalar_select %p991, %s30, 2
        %s993 = smul.addr %s992, 2
        %s994 = smul.addr %s993, 4
        %s995 = scalar_lea.vmem %s10, %s994
        %p996 = scmp.lt.s32.totalorder %s30, 2
        %s997 = scalar_select %p996, %s30, 2
        %s998 = smul.addr %s997, 2
        %s999 = smul.addr %s998, 8
        %s1000 = scalar_lea.vmem %s11, %s999
        %p1001 = scmp.lt.s32.totalorder %s30, 2
        %s1002 = scalar_select %p1001, %s30, 2
        %s1003 = smul.addr %s1002, 2
        %s1004 = smul.addr %s1003, 4
        %s1005 = scalar_lea.vmem %s12, %s1004
        %p1006 = scmp.lt.s32.totalorder %s30, 2
        %s1007 = scalar_select %p1006, %s30, 2
        %s1008 = smul.addr %s1007, 2
        %s1009 = smul.addr %s1008, 8
        %s1010 = scalar_lea.vmem %s13, %s1009
        %s1011 = smul.u32 5, %s32
        %p1012 = scmp.lt.s32.totalorder %s30, 2
        %s1013 = scalar_select %p1012, %s30, 2
        %p1014 = scmp.lt.s32.totalorder %s31, 1
        %s1015 = scalar_select %p1014, %s31, 1
        %p1016 = scmp.lt.s32.totalorder %s1011, 4
        %s1017 = scalar_select %p1016, %s1011, 4
        %s1018 = smul.addr %s1015, 10
        %s1019 = sadd.s32 %s1017, %s1018
        %s1020 = smul.addr %s1013, 20
        %s1021 = sadd.s32 %s1019, %s1020
        %s1022 = smul.addr %s1021, 8
        %s1023 = scalar_lea.vmem %s14, %s1022
        %s1024 = smul.u32 5, %s32
        %p1026 = scmp.gt.s32.totalorder %s32, 0
        %s1027 = scalar_select %p1026, 1, 0
        %s1028 = scvt.s32.f32 %s1027
        %p1029 = scmp.lt.s32.totalorder %s32, 0
        %s1030 = scalar_select %p1029, 1, 0
        %s1031 = scvt.s32.f32 %s1030
        %vm1032 = vcmask 1048552
        %1033 = vst.msk [vmem:[#allocation2] sm:$0xff] %vm1032, 0.0
        %1034 = vst.msk [vmem:[#allocation2 + $0x40] sm:$0xff] %vm1032, 0.0
        %1035 = vst.msk [vmem:[#allocation2 + $0x80] sm:$0xff] %vm1032, 0.0
        %1036 = vst.msk [vmem:[#allocation2 + $0xc0] sm:$0xff] %vm1032, 0.0
        %vm1037 = vcmask 23552
        %1038 = vst.msk [vmem:[#allocation2 + $0x38] sm:$0xff] %vm1037, 0.0
        %1039 = vst.msk [vmem:[#allocation2 + $0x78] sm:$0xff] %vm1037, 0.0
        %1040 = vst.msk [vmem:[#allocation2 + $0xb8] sm:$0xff] %vm1037, 0.0
        %1041 = vst.msk [vmem:[#allocation2 + $0xf8] sm:$0xff] %vm1037, 0.0
        %v1042 = vld [vmem:[%s765] sm:$0xff]
        %v1043 = vld [vmem:[%s765 + $0x8] sm:$0xff]
        %v1044 = vld [vmem:[%s765 + $0x10] sm:$0xff]
        %v1045 = vld [vmem:[%s765 + $0x18] sm:$0xff]
        %v1046 = vstv %s1028
        %v1047 = vmul.f32 %v1042, %v1046
        %v1048 = vmul.f32 %v1043, %v1046
        %v1049 = vmul.f32 %v1044, %v1046
        %v1050 = vmul.f32 %v1045, %v1046
        %1055 = vrot.lane.b32.xlu0 %v1047, 6
        %v1056 = vpop.permute.xlu0 %1055
        %1057 = vrot.lane.b32.xlu0 %v1048, 6
        %v1058 = vpop.permute.xlu0 %1057
        %1059 = vrot.lane.b32.xlu0 %v1049, 6
        %v1060 = vpop.permute.xlu0 %1059
        %1061 = vrot.lane.b32.xlu0 %v1050, 6
        %v1062 = vpop.permute.xlu0 %1061
        %vm1067 = vcmask 48128
        %1068 = vst.msk [vmem:[#allocation2 + $0x8] sm:$0xff] %vm1067, %v1056
        %1069 = vst.msk [vmem:[#allocation2 + $0x48] sm:$0xff] %vm1067, %v1058
        %1070 = vst.msk [vmem:[#allocation2 + $0x88] sm:$0xff] %vm1067, %v1060
        %1071 = vst.msk [vmem:[#allocation2 + $0xc8] sm:$0xff] %vm1067, %v1062
        %v1072 = vld [vmem:[%s926] sm:$0xff]
        %v1073 = vld [vmem:[%s926 + $0x8] sm:$0xff]
        %v1074 = vld [vmem:[%s926 + $0x10] sm:$0xff]
        %v1075 = vld [vmem:[%s926 + $0x18] sm:$0xff]
        %v1076 = vld [vmem:[%s926 + $0x20] sm:$0xff]
        %v1077 = vld [vmem:[%s926 + $0x28] sm:$0xff]
        %v1078 = vld [vmem:[%s926 + $0x30] sm:$0xff]
        %v1079 = vld [vmem:[%s926 + $0x38] sm:$0xff]
        %v1080 = vld [vmem:[%s926 + $0x40] sm:$0xff]
        %v1081 = vld [vmem:[%s926 + $0x48] sm:$0xff]
        %v1082 = vld [vmem:[%s926 + $0x50] sm:$0xff]
        %v1083 = vld [vmem:[%s926 + $0x58] sm:$0xff]
        %v1084 = vld [vmem:[%s926 + $0x60] sm:$0xff]
        %v1085 = vld [vmem:[%s926 + $0x68] sm:$0xff]
        %v1086 = vld [vmem:[%s926 + $0x70] sm:$0xff]
        %v1087 = vld [vmem:[%s926 + $0x78] sm:$0xff]
        %v1088 = vld [vmem:[%s926 + $0x80] sm:$0xff]
        %v1089 = vld [vmem:[%s926 + $0x88] sm:$0xff]
        %v1090 = vld [vmem:[%s926 + $0x90] sm:$0xff]
        %v1091 = vld [vmem:[%s926 + $0x98] sm:$0xff]
        %1112 = vrot.lane.b32.xlu0 %v1072, 6
        %v1113 = vpop.permute.xlu0 %1112
        %1114 = vrot.lane.b32.xlu0 %v1073, 6
        %v1115 = vpop.permute.xlu0 %1114
        %1116 = vrot.lane.b32.xlu0 %v1074, 6
        %v1117 = vpop.permute.xlu0 %1116
        %1118 = vrot.lane.b32.xlu0 %v1075, 6
        %v1119 = vpop.permute.xlu0 %1118
        %1120 = vrot.lane.b32.xlu0 %v1076, 6
        %v1121 = vpop.permute.xlu0 %1120
        %1122 = vrot.lane.b32.xlu0 %v1077, 6
        %v1123 = vpop.permute.xlu0 %1122
        %1124 = vrot.lane.b32.xlu0 %v1078, 6
        %v1125 = vpop.permute.xlu0 %1124
        %1126 = vrot.lane.b32.xlu0 %v1079, 6
        %v1127 = vpop.permute.xlu0 %1126
        %1128 = vrot.lane.b32.xlu0 %v1080, 6
        %v1129 = vpop.permute.xlu0 %1128
        %1130 = vrot.lane.b32.xlu0 %v1081, 6
        %v1131 = vpop.permute.xlu0 %1130
        %1132 = vrot.lane.b32.xlu0 %v1082, 6
        %v1133 = vpop.permute.xlu0 %1132
        %1134 = vrot.lane.b32.xlu0 %v1083, 6
        %v1135 = vpop.permute.xlu0 %1134
        %1136 = vrot.lane.b32.xlu0 %v1084, 6
        %v1137 = vpop.permute.xlu0 %1136
        %1138 = vrot.lane.b32.xlu0 %v1085, 6
        %v1139 = vpop.permute.xlu0 %1138
        %1140 = vrot.lane.b32.xlu0 %v1086, 6
        %v1141 = vpop.permute.xlu0 %1140
        %1142 = vrot.lane.b32.xlu0 %v1087, 6
        %v1143 = vpop.permute.xlu0 %1142
        %1144 = vrot.lane.b32.xlu0 %v1088, 6
        %v1145 = vpop.permute.xlu0 %1144
        %1146 = vrot.lane.b32.xlu0 %v1089, 6
        %v1147 = vpop.permute.xlu0 %1146
        %1148 = vrot.lane.b32.xlu0 %v1090, 6
        %v1149 = vpop.permute.xlu0 %1148
        %1150 = vrot.lane.b32.xlu0 %v1091, 6
        %v1151 = vpop.permute.xlu0 %1150
        %v1152 = vsel %vm1067, %v1113, %v1115
        %v1153 = vsel %vm1067, %v1115, %v1117
        %v1154 = vsel %vm1067, %v1117, %v1119
        %v1155 = vsel %vm1067, %v1119, %v1121
        %v1156 = vsel %vm1067, %v1123, %v1125
        %v1157 = vsel %vm1067, %v1125, %v1127
        %v1158 = vsel %vm1067, %v1127, %v1129
        %v1159 = vsel %vm1067, %v1129, %v1131
        %v1160 = vsel %vm1067, %v1133, %v1135
        %v1161 = vsel %vm1067, %v1135, %v1137
        %v1162 = vsel %vm1067, %v1137, %v1139
        %v1163 = vsel %vm1067, %v1139, %v1141
        %v1164 = vsel %vm1067, %v1143, %v1145
        %v1165 = vsel %vm1067, %v1145, %v1147
        %v1166 = vsel %vm1067, %v1147, %v1149
        %v1167 = vsel %vm1067, %v1149, %v1151
        %vm1192 = vcmask 1047600
        %1193 = vst.msk [vmem:[#allocation2 + $0x8] sm:$0xff] %vm1192, %v1113
        %1194 = vst [vmem:[#allocation2 + $0x10] sm:$0xff] %v1152
        %1195 = vst [vmem:[#allocation2 + $0x18] sm:$0xff] %v1153
        %1196 = vst [vmem:[#allocation2 + $0x20] sm:$0xff] %v1154
        %1197 = vst [vmem:[#allocation2 + $0x28] sm:$0xff] %v1155
        %1198 = vst.msk [vmem:[#allocation2 + $0x30] sm:$0xff] %vm1067, %v1121
        %1199 = vst.msk [vmem:[#allocation2 + $0x48] sm:$0xff] %vm1192, %v1123
        %1200 = vst [vmem:[#allocation2 + $0x50] sm:$0xff] %v1156
        %1201 = vst [vmem:[#allocation2 + $0x58] sm:$0xff] %v1157
        %1202 = vst [vmem:[#allocation2 + $0x60] sm:$0xff] %v1158
        %1203 = vst [vmem:[#allocation2 + $0x68] sm:$0xff] %v1159
        %1204 = vst.msk [vmem:[#allocation2 + $0x70] sm:$0xff] %vm1067, %v1131
        %1205 = vst.msk [vmem:[#allocation2 + $0x88] sm:$0xff] %vm1192, %v1133
        %1206 = vst [vmem:[#allocation2 + $0x90] sm:$0xff] %v1160
        %1207 = vst [vmem:[#allocation2 + $0x98] sm:$0xff] %v1161
        %1208 = vst [vmem:[#allocation2 + $0xa0] sm:$0xff] %v1162
        %1209 = vst [vmem:[#allocation2 + $0xa8] sm:$0xff] %v1163
        %1210 = vst.msk [vmem:[#allocation2 + $0xb0] sm:$0xff] %vm1067, %v1141
        %1211 = vst.msk [vmem:[#allocation2 + $0xc8] sm:$0xff] %vm1192, %v1143
        %1212 = vst [vmem:[#allocation2 + $0xd0] sm:$0xff] %v1164
        %1213 = vst [vmem:[#allocation2 + $0xd8] sm:$0xff] %v1165
        %1214 = vst [vmem:[#allocation2 + $0xe0] sm:$0xff] %v1166
        %1215 = vst [vmem:[#allocation2 + $0xe8] sm:$0xff] %v1167
        %1216 = vst.msk [vmem:[#allocation2 + $0xf0] sm:$0xff] %vm1067, %v1151
        %v1217 = vld [vmem:[%s772] sm:$0xff]
        %v1218 = vld [vmem:[%s772 + $0x8] sm:$0xff]
        %v1219 = vld [vmem:[%s772 + $0x10] sm:$0xff]
        %v1220 = vld [vmem:[%s772 + $0x18] sm:$0xff]
        %v1221 = vstv %s1031
        %v1222 = vmul.f32 %v1217, %v1221
        %v1223 = vmul.f32 %v1218, %v1221
        %v1224 = vmul.f32 %v1219, %v1221
        %v1225 = vmul.f32 %v1220, %v1221
        %1230 = vrot.lane.b32.xlu0 %v1222, 6
        %v1231 = vpop.permute.xlu0 %1230
        %1232 = vrot.lane.b32.xlu0 %v1223, 6
        %v1233 = vpop.permute.xlu0 %1232
        %1234 = vrot.lane.b32.xlu0 %v1224, 6
        %v1235 = vpop.permute.xlu0 %1234
        %1236 = vrot.lane.b32.xlu0 %v1225, 6
        %v1237 = vpop.permute.xlu0 %1236
        %vm1242 = vcmask 97328
        %1243 = vst.msk [vmem:[#allocation2 + $0x30] sm:$0xff] %vm1242, %v1231
        %1244 = vst.msk [vmem:[#allocation2 + $0x70] sm:$0xff] %vm1242, %v1233
        %1245 = vst.msk [vmem:[#allocation2 + $0xb0] sm:$0xff] %vm1242, %v1235
        %1246 = vst.msk [vmem:[#allocation2 + $0xf0] sm:$0xff] %vm1242, %v1237
        %vm1247 = vcmask 1047648
        %1248 = vst.msk [vmem:[#allocation2 + $0x30] sm:$0xff] %vm1247, 0.0
        %1249 = vst.msk [vmem:[#allocation2 + $0x70] sm:$0xff] %vm1247, 0.0
        %1250 = vst.msk [vmem:[#allocation2 + $0xb0] sm:$0xff] %vm1247, 0.0
        %1251 = vst.msk [vmem:[#allocation2 + $0xf0] sm:$0xff] %vm1247, 0.0
        %v1252 = vld [vmem:[%s942] sm:$0x1]
        %v1253 = vmul.f32 %v1252, %v1046
        %1255 = vrot.lane.b32.xlu0 %v1253, 6
        %v1256 = vpop.permute.xlu0 %1255
        %v1258 = vlaneseq
        %vm1259 = vcmp.ge.s32.totalorder %v1258, 0
        %vm1260 = vcmp.lt.s32.totalorder %v1258, 6
        %vm1261 = vmand %vm1259, %vm1260
        %1262 = vst.msk [vmem:[#allocation3] sm:$0x1] %vm1261, %v1256
        %v1263 = vld [vmem:[%s954] sm:$0x1f]
        %1265 = vrot.lane.b32.xlu0 %v1263, 6
        %v1266 = vpop.permute.xlu0 %1265
        %v1267 = vrot.slane %v1266, 7
        %v1268 = vsel %vm1067, %v1267, %v1266
        %vm1270 = vcmp.ge.s32.totalorder %v1258, 6
        %vm1271 = vcmp.lt.s32.totalorder %v1258, 646
        %vm1272 = vmand %vm1270, %vm1271
        %1273 = vst.msk [vmem:[#allocation3] sm:$0x3f] %vm1272, %v1268
        %v1274 = vld [vmem:[%s966] sm:$0x1]
        %v1275 = vmul.f32 %v1274, %v1221
        %1277 = vrot.lane.b32.xlu0 %v1275, 6
        %v1278 = vpop.permute.xlu0 %1277
        %vm1280 = vcmp.lt.s32.totalorder %v1258, 12
        %vm1281 = vmand %vm1270, %vm1280
        %1282 = vst.msk [vmem:[#allocation3 + $0x5] sm:$0x1] %vm1281, %v1278
        %vm1283 = vcmp.ge.s32.totalorder %v1258, 12
        %vm1284 = vcmp.lt.s32.totalorder %v1258, 128
        %vm1285 = vmand %vm1283, %vm1284
        %1286 = vst.msk [vmem:[#allocation3 + $0x5] sm:$0x1] %vm1285, 0.0
        %v1287 = vld [vmem:[#allocation3] sm:$0x3f]
        %v1289 = vperm.slane %v1287, 0
        %v1290 = vperm.slane %v1287, 1
        %v1291 = vperm.slane %v1287, 2
        %v1292 = vperm.slane %v1287, 3
        %v1293 = vperm.slane %v1287, 4
        %v1294 = vperm.slane %v1287, 5
        %v1301 = vld [vmem:[#allocation2 + $0x8] sm:$0xff]
        %v1302 = vld [vmem:[#allocation2 + $0x10] sm:$0xff]
        %v1303 = vld [vmem:[#allocation2 + $0x18] sm:$0xff]
        %v1304 = vld [vmem:[#allocation2 + $0x20] sm:$0xff]
        %v1305 = vld [vmem:[#allocation2 + $0x28] sm:$0xff]
        %v1306 = vld [vmem:[#allocation2 + $0x30] sm:$0xff]
        %v1307 = vld [vmem:[#allocation2 + $0x48] sm:$0xff]
        %v1308 = vld [vmem:[#allocation2 + $0x50] sm:$0xff]
        %v1309 = vld [vmem:[#allocation2 + $0x58] sm:$0xff]
        %v1310 = vld [vmem:[#allocation2 + $0x60] sm:$0xff]
        %v1311 = vld [vmem:[#allocation2 + $0x68] sm:$0xff]
        %v1312 = vld [vmem:[#allocation2 + $0x70] sm:$0xff]
        %v1313 = vld [vmem:[#allocation2 + $0x88] sm:$0xff]
        %v1314 = vld [vmem:[#allocation2 + $0x90] sm:$0xff]
        %v1315 = vld [vmem:[#allocation2 + $0x98] sm:$0xff]
        %v1316 = vld [vmem:[#allocation2 + $0xa0] sm:$0xff]
        %v1317 = vld [vmem:[#allocation2 + $0xa8] sm:$0xff]
        %v1318 = vld [vmem:[#allocation2 + $0xb0] sm:$0xff]
        %v1319 = vld [vmem:[#allocation2 + $0xc8] sm:$0xff]
        %v1320 = vld [vmem:[#allocation2 + $0xd0] sm:$0xff]
        %v1321 = vld [vmem:[#allocation2 + $0xd8] sm:$0xff]
        %v1322 = vld [vmem:[#allocation2 + $0xe0] sm:$0xff]
        %v1323 = vld [vmem:[#allocation2 + $0xe8] sm:$0xff]
        %v1324 = vld [vmem:[#allocation2 + $0xf0] sm:$0xff]
        %v1325 = vld [vmem:[#allocation2] sm:$0xff]
        %v1326 = vld [vmem:[#allocation2 + $0x40] sm:$0xff]
        %v1327 = vld [vmem:[#allocation2 + $0x80] sm:$0xff]
        %v1328 = vld [vmem:[#allocation2 + $0xc0] sm:$0xff]
        %v1329 = vpack.c.bf16 %v1326, %v1325
        %v1330 = vpack.c.bf16 %v1307, %v1301
        %v1331 = vpack.c.bf16 %v1308, %v1302
        %v1332 = vpack.c.bf16 %v1309, %v1303
        %v1333 = vpack.c.bf16 %v1310, %v1304
        %v1334 = vpack.c.bf16 %v1311, %v1305
        %v1335 = vpack.c.bf16 %v1312, %v1306
        %v1336 = vpack.c.bf16 %v1328, %v1327
        %v1337 = vpack.c.bf16 %v1319, %v1313
        %v1338 = vpack.c.bf16 %v1320, %v1314
        %v1339 = vpack.c.bf16 %v1321, %v1315
        %v1340 = vpack.c.bf16 %v1322, %v1316
        %v1341 = vpack.c.bf16 %v1323, %v1317
        %v1342 = vpack.c.bf16 %v1324, %v1318
        %v1343 = vld [vmem:[#allocation2 + $0x8] sm:$0xff]
        %v1344 = vld [vmem:[#allocation2 + $0x10] sm:$0xff]
        %v1345 = vld [vmem:[#allocation2 + $0x18] sm:$0xff]
        %v1346 = vld [vmem:[#allocation2 + $0x20] sm:$0xff]
        %v1347 = vld [vmem:[#allocation2 + $0x28] sm:$0xff]
        %v1348 = vld [vmem:[#allocation2 + $0x30] sm:$0xff]
        %v1349 = vld [vmem:[#allocation2 + $0x38] sm:$0xff]
        %v1350 = vld [vmem:[#allocation2 + $0x48] sm:$0xff]
        %v1351 = vld [vmem:[#allocation2 + $0x50] sm:$0xff]
        %v1352 = vld [vmem:[#allocation2 + $0x58] sm:$0xff]
        %v1353 = vld [vmem:[#allocation2 + $0x60] sm:$0xff]
        %v1354 = vld [vmem:[#allocation2 + $0x68] sm:$0xff]
        %v1355 = vld [vmem:[#allocation2 + $0x70] sm:$0xff]
        %v1356 = vld [vmem:[#allocation2 + $0x78] sm:$0xff]
        %v1357 = vld [vmem:[#allocation2 + $0x88] sm:$0xff]
        %v1358 = vld [vmem:[#allocation2 + $0x90] sm:$0xff]
        %v1359 = vld [vmem:[#allocation2 + $0x98] sm:$0xff]
        %v1360 = vld [vmem:[#allocation2 + $0xa0] sm:$0xff]
        %v1361 = vld [vmem:[#allocation2 + $0xa8] sm:$0xff]
        %v1362 = vld [vmem:[#allocation2 + $0xb0] sm:$0xff]
        %v1363 = vld [vmem:[#allocation2 + $0xb8] sm:$0xff]
        %v1364 = vld [vmem:[#allocation2 + $0xc8] sm:$0xff]
        %v1365 = vld [vmem:[#allocation2 + $0xd0] sm:$0xff]
        %v1366 = vld [vmem:[#allocation2 + $0xd8] sm:$0xff]
        %v1367 = vld [vmem:[#allocation2 + $0xe0] sm:$0xff]
        %v1368 = vld [vmem:[#allocation2 + $0xe8] sm:$0xff]
        %v1369 = vld [vmem:[#allocation2 + $0xf0] sm:$0xff]
        %v1370 = vld [vmem:[#allocation2 + $0xf8] sm:$0xff]
        %v1371 = vpack.c.bf16 %v1350, %v1343
        %v1372 = vpack.c.bf16 %v1351, %v1344
        %v1373 = vpack.c.bf16 %v1352, %v1345
        %v1374 = vpack.c.bf16 %v1353, %v1346
        %v1375 = vpack.c.bf16 %v1354, %v1347
        %v1376 = vpack.c.bf16 %v1355, %v1348
        %v1377 = vpack.c.bf16 %v1356, %v1349
        %v1378 = vpack.c.bf16 %v1364, %v1357
        %v1379 = vpack.c.bf16 %v1365, %v1358
        %v1380 = vpack.c.bf16 %v1366, %v1359
        %v1381 = vpack.c.bf16 %v1367, %v1360
        %v1382 = vpack.c.bf16 %v1368, %v1361
        %v1383 = vpack.c.bf16 %v1369, %v1362
        %v1384 = vpack.c.bf16 %v1370, %v1363
        %v1385 = vld [vmem:[%s975] sm:$0xf]
        %v1386 = vld [vmem:[%s975 + $0x4] sm:$0xf]
        %v1387 = vld [vmem:[%s975 + $0x8] sm:$0xf]
        %v1388 = vld [vmem:[%s975 + $0xc] sm:$0xf]
        %s1389 = scalar_lea.vmem %s975, 16
        %v1390 = vld [vmem:[%s1389] sm:$0xf]
        %v1391 = vld [vmem:[%s1389 + $0x4] sm:$0xf]
        %v1392 = vld [vmem:[%s1389 + $0x8] sm:$0xf]
        %v1393 = vld [vmem:[%s1389 + $0xc] sm:$0xf]
        %v1398 = vunpack.c.l.b16 %v1390
        %v1399 = vunpack.c.l.b16 %v1391
        %v1400 = vunpack.c.l.b16 %v1392
        %v1401 = vunpack.c.l.b16 %v1393
        %v1402 = vpack.c.b16 %v1399, %v1398
        %v1403 = vpack.c.b16 %v1401, %v1400
        %vm1404 = vcmask 261120
        %v1406 = vsel %vm1404, %v1402, 0
        %v1409 = vsel %vm1404, %v1403, 0
        %1411 = vmatpush.bf16.msra.mxu0 0
        %1412 = vmatpush.bf16.msra.mxu0 0
        %1413 = vmatpush.bf16.msra.mxu0 0
        %1414 = vmatpush.bf16.msra.mxu0 0
        %1415 = vmatpush.bf16.msra.mxu0 0
        %1416 = vmatpush.bf16.msra.mxu0 0
        %1417 = vmatpush.bf16.msra.mxu0 %v1337
        %1418 = vmatpush.bf16.msra.mxu0 %v1330
        %1419 = vmatmul.bf16.gmra.mxu0 %v1406
        %v1420 = vpop.f32.mrf.mxu0
        %v1421 = vadd.f32 0.0, %v1420
        %v1422 = vpop.f32.mrf.mxu0
        %v1423 = vadd.f32 0.0, %v1422
        %1424 = vmatmul.bf16.gmra.mxu0 %v1409
        %v1425 = vpop.f32.mrf.mxu0
        %v1426 = vadd.f32 0.0, %v1425
        %v1427 = vpop.f32.mrf.mxu0
        %v1428 = vadd.f32 0.0, %v1427
        %1429 = vdwg.mxu0
        %1430 = vmatpush.bf16.msra.mxu0 0
        %1431 = vmatpush.bf16.msra.mxu0 0
        %1432 = vmatpush.bf16.msra.mxu0 0
        %1433 = vmatpush.bf16.msra.mxu0 0
        %1434 = vmatpush.bf16.msra.mxu0 0
        %1435 = vmatpush.bf16.msra.mxu0 0
        %1436 = vmatpush.bf16.msra.mxu0 %v1338
        %1437 = vmatpush.bf16.msra.mxu0 %v1331
        %1438 = vmatmul.bf16.gmra.mxu0 %v1406
        %v1439 = vpop.f32.mrf.mxu0
        %v1440 = vadd.f32 0.0, %v1439
        %v1441 = vpop.f32.mrf.mxu0
        %v1442 = vadd.f32 0.0, %v1441
        %1443 = vmatmul.bf16.gmra.mxu0 %v1409
        %v1444 = vpop.f32.mrf.mxu0
        %v1445 = vadd.f32 0.0, %v1444
        %v1446 = vpop.f32.mrf.mxu0
        %v1447 = vadd.f32 0.0, %v1446
        %1448 = vdwg.mxu0
        %1449 = vmatpush.bf16.msra.mxu0 0
        %1450 = vmatpush.bf16.msra.mxu0 0
        %1451 = vmatpush.bf16.msra.mxu0 0
        %1452 = vmatpush.bf16.msra.mxu0 0
        %1453 = vmatpush.bf16.msra.mxu0 0
        %1454 = vmatpush.bf16.msra.mxu0 0
        %1455 = vmatpush.bf16.msra.mxu0 %v1339
        %1456 = vmatpush.bf16.msra.mxu0 %v1332
        %1457 = vmatmul.bf16.gmra.mxu0 %v1406
        %v1458 = vpop.f32.mrf.mxu0
        %v1459 = vadd.f32 0.0, %v1458
        %v1460 = vpop.f32.mrf.mxu0
        %v1461 = vadd.f32 0.0, %v1460
        %1462 = vmatmul.bf16.gmra.mxu0 %v1409
        %v1463 = vpop.f32.mrf.mxu0
        %v1464 = vadd.f32 0.0, %v1463
        %v1465 = vpop.f32.mrf.mxu0
        %v1466 = vadd.f32 0.0, %v1465
        %1467 = vdwg.mxu0
        %1468 = vmatpush.bf16.msra.mxu0 0
        %1469 = vmatpush.bf16.msra.mxu0 0
        %1470 = vmatpush.bf16.msra.mxu0 0
        %1471 = vmatpush.bf16.msra.mxu0 0
        %1472 = vmatpush.bf16.msra.mxu0 0
        %1473 = vmatpush.bf16.msra.mxu0 0
        %1474 = vmatpush.bf16.msra.mxu0 %v1340
        %1475 = vmatpush.bf16.msra.mxu0 %v1333
        %1476 = vmatmul.bf16.gmra.mxu0 %v1406
        %v1477 = vpop.f32.mrf.mxu0
        %v1478 = vadd.f32 0.0, %v1477
        %v1479 = vpop.f32.mrf.mxu0
        %v1480 = vadd.f32 0.0, %v1479
        %1481 = vmatmul.bf16.gmra.mxu0 %v1409
        %v1482 = vpop.f32.mrf.mxu0
        %v1483 = vadd.f32 0.0, %v1482
        %v1484 = vpop.f32.mrf.mxu0
        %v1485 = vadd.f32 0.0, %v1484
        %1486 = vdwg.mxu0
        %1487 = vmatpush.bf16.msra.mxu0 0
        %1488 = vmatpush.bf16.msra.mxu0 0
        %1489 = vmatpush.bf16.msra.mxu0 0
        %1490 = vmatpush.bf16.msra.mxu0 0
        %1491 = vmatpush.bf16.msra.mxu0 0
        %1492 = vmatpush.bf16.msra.mxu0 0
        %1493 = vmatpush.bf16.msra.mxu0 %v1341
        %1494 = vmatpush.bf16.msra.mxu0 %v1334
        %1495 = vmatmul.bf16.gmra.mxu0 %v1406
        %v1496 = vpop.f32.mrf.mxu0
        %v1497 = vadd.f32 0.0, %v1496
        %v1498 = vpop.f32.mrf.mxu0
        %v1499 = vadd.f32 0.0, %v1498
        %1500 = vmatmul.bf16.gmra.mxu0 %v1409
        %v1501 = vpop.f32.mrf.mxu0
        %v1502 = vadd.f32 0.0, %v1501
        %v1503 = vpop.f32.mrf.mxu0
        %v1504 = vadd.f32 0.0, %v1503
        %1505 = vdwg.mxu0
        %1506 = vmatpush.bf16.msra.mxu0 0
        %1507 = vmatpush.bf16.msra.mxu0 0
        %1508 = vmatpush.bf16.msra.mxu0 0
        %1509 = vmatpush.bf16.msra.mxu0 0
        %1510 = vmatpush.bf16.msra.mxu0 0
        %1511 = vmatpush.bf16.msra.mxu0 0
        %1512 = vmatpush.bf16.msra.mxu0 %v1342
        %1513 = vmatpush.bf16.msra.mxu0 %v1335
        %1514 = vmatmul.bf16.gmra.mxu0 %v1406
        %v1515 = vpop.f32.mrf.mxu0
        %v1516 = vadd.f32 0.0, %v1515
        %v1517 = vpop.f32.mrf.mxu0
        %v1518 = vadd.f32 0.0, %v1517
        %1519 = vmatmul.bf16.gmra.mxu0 %v1409
        %v1520 = vpop.f32.mrf.mxu0
        %v1521 = vadd.f32 0.0, %v1520
        %v1522 = vpop.f32.mrf.mxu0
        %v1523 = vadd.f32 0.0, %v1522
        %1524 = vdwg.mxu0
        %v1529 = vunpack.c.l.b16 %v1385
        %v1530 = vunpack.c.l.b16 %v1386
        %v1531 = vunpack.c.l.b16 %v1387
        %v1532 = vunpack.c.l.b16 %v1388
        %v1533 = vpack.c.b16 %v1530, %v1529
        %v1534 = vpack.c.b16 %v1532, %v1531
        %1549 = vrot.lane.b32.xlu0 %v1329, 1
        %v1550 = vpop.permute.xlu0 %1549
        %1551 = vrot.lane.b32.xlu0 %v1330, 1
        %v1552 = vpop.permute.xlu0 %1551
        %1553 = vrot.lane.b32.xlu0 %v1331, 1
        %v1554 = vpop.permute.xlu0 %1553
        %1555 = vrot.lane.b32.xlu0 %v1332, 1
        %v1556 = vpop.permute.xlu0 %1555
        %1557 = vrot.lane.b32.xlu0 %v1333, 1
        %v1558 = vpop.permute.xlu0 %1557
        %1559 = vrot.lane.b32.xlu0 %v1334, 1
        %v1560 = vpop.permute.xlu0 %1559
        %1561 = vrot.lane.b32.xlu0 %v1335, 1
        %v1562 = vpop.permute.xlu0 %1561
        %1563 = vrot.lane.b32.xlu0 %v1336, 1
        %v1564 = vpop.permute.xlu0 %1563
        %1565 = vrot.lane.b32.xlu0 %v1337, 1
        %v1566 = vpop.permute.xlu0 %1565
        %1567 = vrot.lane.b32.xlu0 %v1338, 1
        %v1568 = vpop.permute.xlu0 %1567
        %1569 = vrot.lane.b32.xlu0 %v1339, 1
        %v1570 = vpop.permute.xlu0 %1569
        %1571 = vrot.lane.b32.xlu0 %v1340, 1
        %v1572 = vpop.permute.xlu0 %1571
        %1573 = vrot.lane.b32.xlu0 %v1341, 1
        %v1574 = vpop.permute.xlu0 %1573
        %1575 = vrot.lane.b32.xlu0 %v1342, 1
        %v1576 = vpop.permute.xlu0 %1575
        %vm1577 = vcmask 7168
        %v1578 = vsel %vm1577, %v1550, %v1552
        %v1579 = vsel %vm1577, %v1552, %v1554
        %v1580 = vsel %vm1577, %v1554, %v1556
        %v1581 = vsel %vm1577, %v1556, %v1558
        %v1582 = vsel %vm1577, %v1558, %v1560
        %v1583 = vsel %vm1577, %v1560, %v1562
        %v1584 = vsel %vm1577, %v1564, %v1566
        %v1585 = vsel %vm1577, %v1566, %v1568
        %v1586 = vsel %vm1577, %v1568, %v1570
        %v1587 = vsel %vm1577, %v1570, %v1572
        %v1588 = vsel %vm1577, %v1572, %v1574
        %v1589 = vsel %vm1577, %v1574, %v1576
        %v1603 = vsel %vm1404, %v1533, 0
        %v1606 = vsel %vm1404, %v1534, 0
        %1608 = vmatpush.bf16.msra.mxu0 0
        %1609 = vmatpush.bf16.msra.mxu0 0
        %1610 = vmatpush.bf16.msra.mxu0 0
        %1611 = vmatpush.bf16.msra.mxu0 0
        %1612 = vmatpush.bf16.msra.mxu0 0
        %1613 = vmatpush.bf16.msra.mxu0 0
        %1614 = vmatpush.bf16.msra.mxu0 %v1584
        %1615 = vmatpush.bf16.msra.mxu0 %v1578
        %1616 = vmatmul.bf16.gmra.mxu0 %v1603
        %v1617 = vpop.f32.mrf.mxu0
        %v1618 = vadd.f32 %v1421, %v1617
        %v1619 = vpop.f32.mrf.mxu0
        %v1620 = vadd.f32 %v1423, %v1619
        %1621 = vmatmul.bf16.gmra.mxu0 %v1606
        %v1622 = vpop.f32.mrf.mxu0
        %v1623 = vadd.f32 %v1426, %v1622
        %v1624 = vpop.f32.mrf.mxu0
        %v1625 = vadd.f32 %v1428, %v1624
        %1626 = vdwg.mxu0
        %1627 = vmatpush.bf16.msra.mxu0 0
        %1628 = vmatpush.bf16.msra.mxu0 0
        %1629 = vmatpush.bf16.msra.mxu0 0
        %1630 = vmatpush.bf16.msra.mxu0 0
        %1631 = vmatpush.bf16.msra.mxu0 0
        %1632 = vmatpush.bf16.msra.mxu0 0
        %1633 = vmatpush.bf16.msra.mxu0 %v1585
        %1634 = vmatpush.bf16.msra.mxu0 %v1579
        %1635 = vmatmul.bf16.gmra.mxu0 %v1603
        %v1636 = vpop.f32.mrf.mxu0
        %v1637 = vadd.f32 %v1440, %v1636
        %v1638 = vpop.f32.mrf.mxu0
        %v1639 = vadd.f32 %v1442, %v1638
        %1640 = vmatmul.bf16.gmra.mxu0 %v1606
        %v1641 = vpop.f32.mrf.mxu0
        %v1642 = vadd.f32 %v1445, %v1641
        %v1643 = vpop.f32.mrf.mxu0
        %v1644 = vadd.f32 %v1447, %v1643
        %1645 = vdwg.mxu0
        %1646 = vmatpush.bf16.msra.mxu0 0
        %1647 = vmatpush.bf16.msra.mxu0 0
        %1648 = vmatpush.bf16.msra.mxu0 0
        %1649 = vmatpush.bf16.msra.mxu0 0
        %1650 = vmatpush.bf16.msra.mxu0 0
        %1651 = vmatpush.bf16.msra.mxu0 0
        %1652 = vmatpush.bf16.msra.mxu0 %v1586
        %1653 = vmatpush.bf16.msra.mxu0 %v1580
        %1654 = vmatmul.bf16.gmra.mxu0 %v1603
        %v1655 = vpop.f32.mrf.mxu0
        %v1656 = vadd.f32 %v1459, %v1655
        %v1657 = vpop.f32.mrf.mxu0
        %v1658 = vadd.f32 %v1461, %v1657
        %1659 = vmatmul.bf16.gmra.mxu0 %v1606
        %v1660 = vpop.f32.mrf.mxu0
        %v1661 = vadd.f32 %v1464, %v1660
        %v1662 = vpop.f32.mrf.mxu0
        %v1663 = vadd.f32 %v1466, %v1662
        %1664 = vdwg.mxu0
        %1665 = vmatpush.bf16.msra.mxu0 0
        %1666 = vmatpush.bf16.msra.mxu0 0
        %1667 = vmatpush.bf16.msra.mxu0 0
        %1668 = vmatpush.bf16.msra.mxu0 0
        %1669 = vmatpush.bf16.msra.mxu0 0
        %1670 = vmatpush.bf16.msra.mxu0 0
        %1671 = vmatpush.bf16.msra.mxu0 %v1587
        %1672 = vmatpush.bf16.msra.mxu0 %v1581
        %1673 = vmatmul.bf16.gmra.mxu0 %v1603
        %v1674 = vpop.f32.mrf.mxu0
        %v1675 = vadd.f32 %v1478, %v1674
        %v1676 = vpop.f32.mrf.mxu0
        %v1677 = vadd.f32 %v1480, %v1676
        %1678 = vmatmul.bf16.gmra.mxu0 %v1606
        %v1679 = vpop.f32.mrf.mxu0
        %v1680 = vadd.f32 %v1483, %v1679
        %v1681 = vpop.f32.mrf.mxu0
        %v1682 = vadd.f32 %v1485, %v1681
        %1683 = vdwg.mxu0
        %1684 = vmatpush.bf16.msra.mxu0 0
        %1685 = vmatpush.bf16.msra.mxu0 0
        %1686 = vmatpush.bf16.msra.mxu0 0
        %1687 = vmatpush.bf16.msra.mxu0 0
        %1688 = vmatpush.bf16.msra.mxu0 0
        %1689 = vmatpush.bf16.msra.mxu0 0
        %1690 = vmatpush.bf16.msra.mxu0 %v1588
        %1691 = vmatpush.bf16.msra.mxu0 %v1582
        %1692 = vmatmul.bf16.gmra.mxu0 %v1603
        %v1693 = vpop.f32.mrf.mxu0
        %v1694 = vadd.f32 %v1497, %v1693
        %v1695 = vpop.f32.mrf.mxu0
        %v1696 = vadd.f32 %v1499, %v1695
        %1697 = vmatmul.bf16.gmra.mxu0 %v1606
        %v1698 = vpop.f32.mrf.mxu0
        %v1699 = vadd.f32 %v1502, %v1698
        %v1700 = vpop.f32.mrf.mxu0
        %v1701 = vadd.f32 %v1504, %v1700
        %1702 = vdwg.mxu0
        %1703 = vmatpush.bf16.msra.mxu0 0
        %1704 = vmatpush.bf16.msra.mxu0 0
        %1705 = vmatpush.bf16.msra.mxu0 0
        %1706 = vmatpush.bf16.msra.mxu0 0
        %1707 = vmatpush.bf16.msra.mxu0 0
        %1708 = vmatpush.bf16.msra.mxu0 0
        %1709 = vmatpush.bf16.msra.mxu0 %v1589
        %1710 = vmatpush.bf16.msra.mxu0 %v1583
        %1711 = vmatmul.bf16.gmra.mxu0 %v1603
        %v1712 = vpop.f32.mrf.mxu0
        %v1713 = vadd.f32 %v1516, %v1712
        %v1714 = vpop.f32.mrf.mxu0
        %v1715 = vadd.f32 %v1518, %v1714
        %1716 = vmatmul.bf16.gmra.mxu0 %v1606
        %v1717 = vpop.f32.mrf.mxu0
        %v1718 = vadd.f32 %v1521, %v1717
        %v1719 = vpop.f32.mrf.mxu0
        %v1720 = vadd.f32 %v1523, %v1719
        %1721 = vdwg.mxu0
        %s1722 = scalar_lea.vmem %s975, 32
        %v1723 = vld [vmem:[%s1722] sm:$0xf]
        %v1724 = vld [vmem:[%s1722 + $0x4] sm:$0xf]
        %v1725 = vld [vmem:[%s1722 + $0x8] sm:$0xf]
        %v1726 = vld [vmem:[%s1722 + $0xc] sm:$0xf]
        %v1731 = vunpack.c.l.b16 %v1723
        %v1732 = vunpack.c.l.b16 %v1724
        %v1733 = vunpack.c.l.b16 %v1725
        %v1734 = vunpack.c.l.b16 %v1726
        %v1735 = vpack.c.b16 %v1732, %v1731
        %v1736 = vpack.c.b16 %v1734, %v1733
        %1751 = vrot.lane.b32.xlu0 %v1371, 127
        %v1752 = vpop.permute.xlu0 %1751
        %1753 = vrot.lane.b32.xlu0 %v1372, 127
        %v1754 = vpop.permute.xlu0 %1753
        %1755 = vrot.lane.b32.xlu0 %v1373, 127
        %v1756 = vpop.permute.xlu0 %1755
        %1757 = vrot.lane.b32.xlu0 %v1374, 127
        %v1758 = vpop.permute.xlu0 %1757
        %1759 = vrot.lane.b32.xlu0 %v1375, 127
        %v1760 = vpop.permute.xlu0 %1759
        %1761 = vrot.lane.b32.xlu0 %v1376, 127
        %v1762 = vpop.permute.xlu0 %1761
        %1763 = vrot.lane.b32.xlu0 %v1377, 127
        %v1764 = vpop.permute.xlu0 %1763
        %1765 = vrot.lane.b32.xlu0 %v1378, 127
        %v1766 = vpop.permute.xlu0 %1765
        %1767 = vrot.lane.b32.xlu0 %v1379, 127
        %v1768 = vpop.permute.xlu0 %1767
        %1769 = vrot.lane.b32.xlu0 %v1380, 127
        %v1770 = vpop.permute.xlu0 %1769
        %1771 = vrot.lane.b32.xlu0 %v1381, 127
        %v1772 = vpop.permute.xlu0 %1771
        %1773 = vrot.lane.b32.xlu0 %v1382, 127
        %v1774 = vpop.permute.xlu0 %1773
        %1775 = vrot.lane.b32.xlu0 %v1383, 127
        %v1776 = vpop.permute.xlu0 %1775
        %1777 = vrot.lane.b32.xlu0 %v1384, 127
        %v1778 = vpop.permute.xlu0 %1777
        %vm1779 = vcmask 1039360
        %v1780 = vsel %vm1779, %v1752, %v1754
        %v1781 = vsel %vm1779, %v1754, %v1756
        %v1782 = vsel %vm1779, %v1756, %v1758
        %v1783 = vsel %vm1779, %v1758, %v1760
        %v1784 = vsel %vm1779, %v1760, %v1762
        %v1785 = vsel %vm1779, %v1762, %v1764
        %v1786 = vsel %vm1779, %v1766, %v1768
        %v1787 = vsel %vm1779, %v1768, %v1770
        %v1788 = vsel %vm1779, %v1770, %v1772
        %v1789 = vsel %vm1779, %v1772, %v1774
        %v1790 = vsel %vm1779, %v1774, %v1776
        %v1791 = vsel %vm1779, %v1776, %v1778
        %v1805 = vsel %vm1404, %v1735, 0
        %v1808 = vsel %vm1404, %v1736, 0
        %1810 = vmatpush.bf16.msra.mxu0 0
        %1811 = vmatpush.bf16.msra.mxu0 0
        %1812 = vmatpush.bf16.msra.mxu0 0
        %1813 = vmatpush.bf16.msra.mxu0 0
        %1814 = vmatpush.bf16.msra.mxu0 0
        %1815 = vmatpush.bf16.msra.mxu0 0
        %1816 = vmatpush.bf16.msra.mxu0 %v1786
        %1817 = vmatpush.bf16.msra.mxu0 %v1780
        %1818 = vmatmul.bf16.gmra.mxu0 %v1805
        %v1819 = vpop.f32.mrf.mxu0
        %v1820 = vadd.f32 0.0, %v1819
        %v1821 = vpop.f32.mrf.mxu0
        %v1822 = vadd.f32 0.0, %v1821
        %1823 = vmatmul.bf16.gmra.mxu0 %v1808
        %v1824 = vpop.f32.mrf.mxu0
        %v1825 = vadd.f32 0.0, %v1824
        %v1826 = vpop.f32.mrf.mxu0
        %v1827 = vadd.f32 0.0, %v1826
        %1828 = vdwg.mxu0
        %1829 = vmatpush.bf16.msra.mxu0 0
        %1830 = vmatpush.bf16.msra.mxu0 0
        %1831 = vmatpush.bf16.msra.mxu0 0
        %1832 = vmatpush.bf16.msra.mxu0 0
        %1833 = vmatpush.bf16.msra.mxu0 0
        %1834 = vmatpush.bf16.msra.mxu0 0
        %1835 = vmatpush.bf16.msra.mxu0 %v1787
        %1836 = vmatpush.bf16.msra.mxu0 %v1781
        %1837 = vmatmul.bf16.gmra.mxu0 %v1805
        %v1838 = vpop.f32.mrf.mxu0
        %v1839 = vadd.f32 0.0, %v1838
        %v1840 = vpop.f32.mrf.mxu0
        %v1841 = vadd.f32 0.0, %v1840
        %1842 = vmatmul.bf16.gmra.mxu0 %v1808
        %v1843 = vpop.f32.mrf.mxu0
        %v1844 = vadd.f32 0.0, %v1843
        %v1845 = vpop.f32.mrf.mxu0
        %v1846 = vadd.f32 0.0, %v1845
        %1847 = vdwg.mxu0
        %1848 = vmatpush.bf16.msra.mxu0 0
        %1849 = vmatpush.bf16.msra.mxu0 0
        %1850 = vmatpush.bf16.msra.mxu0 0
        %1851 = vmatpush.bf16.msra.mxu0 0
        %1852 = vmatpush.bf16.msra.mxu0 0
        %1853 = vmatpush.bf16.msra.mxu0 0
        %1854 = vmatpush.bf16.msra.mxu0 %v1788
        %1855 = vmatpush.bf16.msra.mxu0 %v1782
        %1856 = vmatmul.bf16.gmra.mxu0 %v1805
        %v1857 = vpop.f32.mrf.mxu0
        %v1858 = vadd.f32 0.0, %v1857
        %v1859 = vpop.f32.mrf.mxu0
        %v1860 = vadd.f32 0.0, %v1859
        %1861 = vmatmul.bf16.gmra.mxu0 %v1808
        %v1862 = vpop.f32.mrf.mxu0
        %v1863 = vadd.f32 0.0, %v1862
        %v1864 = vpop.f32.mrf.mxu0
        %v1865 = vadd.f32 0.0, %v1864
        %1866 = vdwg.mxu0
        %1867 = vmatpush.bf16.msra.mxu0 0
        %1868 = vmatpush.bf16.msra.mxu0 0
        %1869 = vmatpush.bf16.msra.mxu0 0
        %1870 = vmatpush.bf16.msra.mxu0 0
        %1871 = vmatpush.bf16.msra.mxu0 0
        %1872 = vmatpush.bf16.msra.mxu0 0
        %1873 = vmatpush.bf16.msra.mxu0 %v1789
        %1874 = vmatpush.bf16.msra.mxu0 %v1783
        %1875 = vmatmul.bf16.gmra.mxu0 %v1805
        %v1876 = vpop.f32.mrf.mxu0
        %v1877 = vadd.f32 0.0, %v1876
        %v1878 = vpop.f32.mrf.mxu0
        %v1879 = vadd.f32 0.0, %v1878
        %1880 = vmatmul.bf16.gmra.mxu0 %v1808
        %v1881 = vpop.f32.mrf.mxu0
        %v1882 = vadd.f32 0.0, %v1881
        %v1883 = vpop.f32.mrf.mxu0
        %v1884 = vadd.f32 0.0, %v1883
        %1885 = vdwg.mxu0
        %1886 = vmatpush.bf16.msra.mxu0 0
        %1887 = vmatpush.bf16.msra.mxu0 0
        %1888 = vmatpush.bf16.msra.mxu0 0
        %1889 = vmatpush.bf16.msra.mxu0 0
        %1890 = vmatpush.bf16.msra.mxu0 0
        %1891 = vmatpush.bf16.msra.mxu0 0
        %1892 = vmatpush.bf16.msra.mxu0 %v1790
        %1893 = vmatpush.bf16.msra.mxu0 %v1784
        %1894 = vmatmul.bf16.gmra.mxu0 %v1805
        %v1895 = vpop.f32.mrf.mxu0
        %v1896 = vadd.f32 0.0, %v1895
        %v1897 = vpop.f32.mrf.mxu0
        %v1898 = vadd.f32 0.0, %v1897
        %1899 = vmatmul.bf16.gmra.mxu0 %v1808
        %v1900 = vpop.f32.mrf.mxu0
        %v1901 = vadd.f32 0.0, %v1900
        %v1902 = vpop.f32.mrf.mxu0
        %v1903 = vadd.f32 0.0, %v1902
        %1904 = vdwg.mxu0
        %1905 = vmatpush.bf16.msra.mxu0 0
        %1906 = vmatpush.bf16.msra.mxu0 0
        %1907 = vmatpush.bf16.msra.mxu0 0
        %1908 = vmatpush.bf16.msra.mxu0 0
        %1909 = vmatpush.bf16.msra.mxu0 0
        %1910 = vmatpush.bf16.msra.mxu0 0
        %1911 = vmatpush.bf16.msra.mxu0 %v1791
        %1912 = vmatpush.bf16.msra.mxu0 %v1785
        %1913 = vmatmul.bf16.gmra.mxu0 %v1805
        %v1914 = vpop.f32.mrf.mxu0
        %v1915 = vadd.f32 0.0, %v1914
        %v1916 = vpop.f32.mrf.mxu0
        %v1917 = vadd.f32 0.0, %v1916
        %1918 = vmatmul.bf16.gmra.mxu0 %v1808
        %v1919 = vpop.f32.mrf.mxu0
        %v1920 = vadd.f32 0.0, %v1919
        %v1921 = vpop.f32.mrf.mxu0
        %v1922 = vadd.f32 0.0, %v1921
        %1923 = vdwg.mxu0
        %v1924 = vadd.f32 %v1618, %v1820
        %v1925 = vadd.f32 %v1637, %v1839
        %v1926 = vadd.f32 %v1656, %v1858
        %v1927 = vadd.f32 %v1675, %v1877
        %v1928 = vadd.f32 %v1694, %v1896
        %v1929 = vadd.f32 %v1713, %v1915
        %v1930 = vadd.f32 %v1620, %v1822
        %v1931 = vadd.f32 %v1639, %v1841
        %v1932 = vadd.f32 %v1658, %v1860
        %v1933 = vadd.f32 %v1677, %v1879
        %v1934 = vadd.f32 %v1696, %v1898
        %v1935 = vadd.f32 %v1715, %v1917
        %v1936 = vadd.f32 %v1623, %v1825
        %v1937 = vadd.f32 %v1642, %v1844
        %v1938 = vadd.f32 %v1661, %v1863
        %v1939 = vadd.f32 %v1680, %v1882
        %v1940 = vadd.f32 %v1699, %v1901
        %v1941 = vadd.f32 %v1718, %v1920
        %v1942 = vadd.f32 %v1625, %v1827
        %v1943 = vadd.f32 %v1644, %v1846
        %v1944 = vadd.f32 %v1663, %v1865
        %v1945 = vadd.f32 %v1682, %v1884
        %v1946 = vadd.f32 %v1701, %v1903
        %v1947 = vadd.f32 %v1720, %v1922
        %v1948 = vld [vmem:[%s980] sm:$0xff]
        %v1949 = vld [vmem:[%s980 + $0x8] sm:$0xff]
        %v1950 = vld [vmem:[%s980 + $0x10] sm:$0xff]
        %v1951 = vld [vmem:[%s980 + $0x18] sm:$0xff]
        %1953 = vset.pattern.permute.xlu0 0
        %1954 = vperm.xlu0 %1953, %v1948
        %v1955 = vpop.permute.xlu0 %1954
        %1958 = vset.pattern.permute.xlu0 0
        %1959 = vperm.xlu0 %1958, %v1949
        %v1960 = vpop.permute.xlu0 %1959
        %1963 = vset.pattern.permute.xlu0 0
        %1964 = vperm.xlu0 %1963, %v1950
        %v1965 = vpop.permute.xlu0 %1964
        %1968 = vset.pattern.permute.xlu0 0
        %1969 = vperm.xlu0 %1968, %v1951
        %v1970 = vpop.permute.xlu0 %1969
        %v1972 = vadd.f32 %v1924, %v1955
        %v1973 = vadd.f32 %v1925, %v1955
        %v1974 = vadd.f32 %v1926, %v1955
        %v1975 = vadd.f32 %v1927, %v1955
        %v1976 = vadd.f32 %v1928, %v1955
        %v1977 = vadd.f32 %v1929, %v1955
        %v1978 = vadd.f32 %v1930, %v1960
        %v1979 = vadd.f32 %v1931, %v1960
        %v1980 = vadd.f32 %v1932, %v1960
        %v1981 = vadd.f32 %v1933, %v1960
        %v1982 = vadd.f32 %v1934, %v1960
        %v1983 = vadd.f32 %v1935, %v1960
        %v1984 = vadd.f32 %v1936, %v1965
        %v1985 = vadd.f32 %v1937, %v1965
        %v1986 = vadd.f32 %v1938, %v1965
        %v1987 = vadd.f32 %v1939, %v1965
        %v1988 = vadd.f32 %v1940, %v1965
        %v1989 = vadd.f32 %v1941, %v1965
        %v1990 = vadd.f32 %v1942, %v1970
        %v1991 = vadd.f32 %v1943, %v1970
        %v1992 = vadd.f32 %v1944, %v1970
        %v1993 = vadd.f32 %v1945, %v1970
        %v1994 = vadd.f32 %v1946, %v1970
        %v1995 = vadd.f32 %v1947, %v1970
        %v1996 = vmax.f32 %v1972, 0.0
        %v1997 = vmax.f32 %v1973, 0.0
        %v1998 = vmax.f32 %v1974, 0.0
        %v1999 = vmax.f32 %v1975, 0.0
        %v2000 = vmax.f32 %v1976, 0.0
        %v2001 = vmax.f32 %v1977, 0.0
        %v2002 = vmax.f32 %v1978, 0.0
        %v2003 = vmax.f32 %v1979, 0.0
        %v2004 = vmax.f32 %v1980, 0.0
        %v2005 = vmax.f32 %v1981, 0.0
        %v2006 = vmax.f32 %v1982, 0.0
        %v2007 = vmax.f32 %v1983, 0.0
        %v2008 = vmax.f32 %v1984, 0.0
        %v2009 = vmax.f32 %v1985, 0.0
        %v2010 = vmax.f32 %v1986, 0.0
        %v2011 = vmax.f32 %v1987, 0.0
        %v2012 = vmax.f32 %v1988, 0.0
        %v2013 = vmax.f32 %v1989, 0.0
        %v2014 = vmax.f32 %v1990, 0.0
        %v2015 = vmax.f32 %v1991, 0.0
        %v2016 = vmax.f32 %v1992, 0.0
        %v2017 = vmax.f32 %v1993, 0.0
        %v2018 = vmax.f32 %v1994, 0.0
        %v2019 = vmax.f32 %v1995, 0.0
        %v2020 = vpack.c.bf16 %v2002, %v1996
        %v2021 = vpack.c.bf16 %v2003, %v1997
        %v2022 = vpack.c.bf16 %v2004, %v1998
        %v2023 = vpack.c.bf16 %v2005, %v1999
        %v2024 = vpack.c.bf16 %v2006, %v2000
        %v2025 = vpack.c.bf16 %v2007, %v2001
        %v2026 = vpack.c.bf16 %v2014, %v2008
        %v2027 = vpack.c.bf16 %v2015, %v2009
        %v2028 = vpack.c.bf16 %v2016, %v2010
        %v2029 = vpack.c.bf16 %v2017, %v2011
        %v2030 = vpack.c.bf16 %v2018, %v2012
        %v2031 = vpack.c.bf16 %v2019, %v2013
        %v2032 = vld [vmem:[%s985] sm:$0xf]
        %v2033 = vld [vmem:[%s985 + $0x4] sm:$0xf]
        %v2034 = vld [vmem:[%s985 + $0x8] sm:$0xf]
        %v2035 = vld [vmem:[%s985 + $0xc] sm:$0xf]
        %v2036 = vld [vmem:[%s990] sm:$0xff]
        %v2037 = vld [vmem:[%s990 + $0x8] sm:$0xff]
        %v2038 = vld [vmem:[%s990 + $0x10] sm:$0xff]
        %v2039 = vld [vmem:[%s990 + $0x18] sm:$0xff]
        %2041 = vset.pattern.permute.xlu0 0
        %2042 = vperm.xlu0 %2041, %v2036
        %v2043 = vpop.permute.xlu0 %2042
        %2046 = vset.pattern.permute.xlu0 0
        %2047 = vperm.xlu0 %2046, %v2037
        %v2048 = vpop.permute.xlu0 %2047
        %2051 = vset.pattern.permute.xlu0 0
        %2052 = vperm.xlu0 %2051, %v2038
        %v2053 = vpop.permute.xlu0 %2052
        %2056 = vset.pattern.permute.xlu0 0
        %2057 = vperm.xlu0 %2056, %v2039
        %v2058 = vpop.permute.xlu0 %2057
        %v2064 = vunpack.c.l.b16 %v2032
        %v2065 = vunpack.c.l.b16 %v2033
        %v2066 = vunpack.c.l.b16 %v2034
        %v2067 = vunpack.c.l.b16 %v2035
        %v2068 = vpack.c.b16 %v2065, %v2064
        %v2069 = vpack.c.b16 %v2067, %v2066
        %v2071 = vsel %vm1404, %v2068, 0
        %v2074 = vsel %vm1404, %v2069, 0
        %2076 = vmatpush.bf16.msra.mxu0 0
        %2077 = vmatpush.bf16.msra.mxu0 0
        %2078 = vmatpush.bf16.msra.mxu0 0
        %2079 = vmatpush.bf16.msra.mxu0 0
        %2080 = vmatpush.bf16.msra.mxu0 0
        %2081 = vmatpush.bf16.msra.mxu0 0
        %2082 = vmatpush.bf16.msra.mxu0 %v2026
        %2083 = vmatpush.bf16.msra.mxu0 %v2020
        %2084 = vmatmul.bf16.gmra.mxu0 %v2071
        %v2085 = vpop.f32.mrf.mxu0
        %v2086 = vadd.f32 %v2043, %v2085
        %v2087 = vpop.f32.mrf.mxu0
        %v2088 = vadd.f32 %v2048, %v2087
        %2089 = vmatmul.bf16.gmra.mxu0 %v2074
        %v2090 = vpop.f32.mrf.mxu0
        %v2091 = vadd.f32 %v2053, %v2090
        %v2092 = vpop.f32.mrf.mxu0
        %v2093 = vadd.f32 %v2058, %v2092
        %2094 = vdwg.mxu0
        %2095 = vmatpush.bf16.msra.mxu0 0
        %2096 = vmatpush.bf16.msra.mxu0 0
        %2097 = vmatpush.bf16.msra.mxu0 0
        %2098 = vmatpush.bf16.msra.mxu0 0
        %2099 = vmatpush.bf16.msra.mxu0 0
        %2100 = vmatpush.bf16.msra.mxu0 0
        %2101 = vmatpush.bf16.msra.mxu0 %v2027
        %2102 = vmatpush.bf16.msra.mxu0 %v2021
        %2103 = vmatmul.bf16.gmra.mxu0 %v2071
        %v2104 = vpop.f32.mrf.mxu0
        %v2105 = vadd.f32 %v2043, %v2104
        %v2106 = vpop.f32.mrf.mxu0
        %v2107 = vadd.f32 %v2048, %v2106
        %2108 = vmatmul.bf16.gmra.mxu0 %v2074
        %v2109 = vpop.f32.mrf.mxu0
        %v2110 = vadd.f32 %v2053, %v2109
        %v2111 = vpop.f32.mrf.mxu0
        %v2112 = vadd.f32 %v2058, %v2111
        %2113 = vdwg.mxu0
        %2114 = vmatpush.bf16.msra.mxu0 0
        %2115 = vmatpush.bf16.msra.mxu0 0
        %2116 = vmatpush.bf16.msra.mxu0 0
        %2117 = vmatpush.bf16.msra.mxu0 0
        %2118 = vmatpush.bf16.msra.mxu0 0
        %2119 = vmatpush.bf16.msra.mxu0 0
        %2120 = vmatpush.bf16.msra.mxu0 %v2028
        %2121 = vmatpush.bf16.msra.mxu0 %v2022
        %2122 = vmatmul.bf16.gmra.mxu0 %v2071
        %v2123 = vpop.f32.mrf.mxu0
        %v2124 = vadd.f32 %v2043, %v2123
        %v2125 = vpop.f32.mrf.mxu0
        %v2126 = vadd.f32 %v2048, %v2125
        %2127 = vmatmul.bf16.gmra.mxu0 %v2074
        %v2128 = vpop.f32.mrf.mxu0
        %v2129 = vadd.f32 %v2053, %v2128
        %v2130 = vpop.f32.mrf.mxu0
        %v2131 = vadd.f32 %v2058, %v2130
        %2132 = vdwg.mxu0
        %2133 = vmatpush.bf16.msra.mxu0 0
        %2134 = vmatpush.bf16.msra.mxu0 0
        %2135 = vmatpush.bf16.msra.mxu0 0
        %2136 = vmatpush.bf16.msra.mxu0 0
        %2137 = vmatpush.bf16.msra.mxu0 0
        %2138 = vmatpush.bf16.msra.mxu0 0
        %2139 = vmatpush.bf16.msra.mxu0 %v2029
        %2140 = vmatpush.bf16.msra.mxu0 %v2023
        %2141 = vmatmul.bf16.gmra.mxu0 %v2071
        %v2142 = vpop.f32.mrf.mxu0
        %v2143 = vadd.f32 %v2043, %v2142
        %v2144 = vpop.f32.mrf.mxu0
        %v2145 = vadd.f32 %v2048, %v2144
        %2146 = vmatmul.bf16.gmra.mxu0 %v2074
        %v2147 = vpop.f32.mrf.mxu0
        %v2148 = vadd.f32 %v2053, %v2147
        %v2149 = vpop.f32.mrf.mxu0
        %v2150 = vadd.f32 %v2058, %v2149
        %2151 = vdwg.mxu0
        %2152 = vmatpush.bf16.msra.mxu0 0
        %2153 = vmatpush.bf16.msra.mxu0 0
        %2154 = vmatpush.bf16.msra.mxu0 0
        %2155 = vmatpush.bf16.msra.mxu0 0
        %2156 = vmatpush.bf16.msra.mxu0 0
        %2157 = vmatpush.bf16.msra.mxu0 0
        %2158 = vmatpush.bf16.msra.mxu0 %v2030
        %2159 = vmatpush.bf16.msra.mxu0 %v2024
        %2160 = vmatmul.bf16.gmra.mxu0 %v2071
        %v2161 = vpop.f32.mrf.mxu0
        %v2162 = vadd.f32 %v2043, %v2161
        %v2163 = vpop.f32.mrf.mxu0
        %v2164 = vadd.f32 %v2048, %v2163
        %2165 = vmatmul.bf16.gmra.mxu0 %v2074
        %v2166 = vpop.f32.mrf.mxu0
        %v2167 = vadd.f32 %v2053, %v2166
        %v2168 = vpop.f32.mrf.mxu0
        %v2169 = vadd.f32 %v2058, %v2168
        %2170 = vdwg.mxu0
        %2171 = vmatpush.bf16.msra.mxu0 0
        %2172 = vmatpush.bf16.msra.mxu0 0
        %2173 = vmatpush.bf16.msra.mxu0 0
        %2174 = vmatpush.bf16.msra.mxu0 0
        %2175 = vmatpush.bf16.msra.mxu0 0
        %2176 = vmatpush.bf16.msra.mxu0 0
        %2177 = vmatpush.bf16.msra.mxu0 %v2031
        %2178 = vmatpush.bf16.msra.mxu0 %v2025
        %2179 = vmatmul.bf16.gmra.mxu0 %v2071
        %v2180 = vpop.f32.mrf.mxu0
        %v2181 = vadd.f32 %v2043, %v2180
        %v2182 = vpop.f32.mrf.mxu0
        %v2183 = vadd.f32 %v2048, %v2182
        %2184 = vmatmul.bf16.gmra.mxu0 %v2074
        %v2185 = vpop.f32.mrf.mxu0
        %v2186 = vadd.f32 %v2053, %v2185
        %v2187 = vpop.f32.mrf.mxu0
        %v2188 = vadd.f32 %v2058, %v2187
        %2189 = vdwg.mxu0
        %v2190 = vadd.f32 %v2086, %v1301
        %v2191 = vadd.f32 %v2105, %v1302
        %v2192 = vadd.f32 %v2124, %v1303
        %v2193 = vadd.f32 %v2143, %v1304
        %v2194 = vadd.f32 %v2162, %v1305
        %v2195 = vadd.f32 %v2181, %v1306
        %v2196 = vadd.f32 %v2088, %v1307
        %v2197 = vadd.f32 %v2107, %v1308
        %v2198 = vadd.f32 %v2126, %v1309
        %v2199 = vadd.f32 %v2145, %v1310
        %v2200 = vadd.f32 %v2164, %v1311
        %v2201 = vadd.f32 %v2183, %v1312
        %v2202 = vadd.f32 %v2091, %v1313
        %v2203 = vadd.f32 %v2110, %v1314
        %v2204 = vadd.f32 %v2129, %v1315
        %v2205 = vadd.f32 %v2148, %v1316
        %v2206 = vadd.f32 %v2167, %v1317
        %v2207 = vadd.f32 %v2186, %v1318
        %v2208 = vadd.f32 %v2093, %v1319
        %v2209 = vadd.f32 %v2112, %v1320
        %v2210 = vadd.f32 %v2131, %v1321
        %v2211 = vadd.f32 %v2150, %v1322
        %v2212 = vadd.f32 %v2169, %v1323
        %v2213 = vadd.f32 %v2188, %v1324
        %v2214 = vmul.f32 %v2190, %v1289
        %v2215 = vmul.f32 %v2191, %v1290
        %v2216 = vmul.f32 %v2192, %v1291
        %v2217 = vmul.f32 %v2193, %v1292
        %v2218 = vmul.f32 %v2194, %v1293
        %v2219 = vmul.f32 %v2195, %v1294
        %v2220 = vmul.f32 %v2196, %v1289
        %v2221 = vmul.f32 %v2197, %v1290
        %v2222 = vmul.f32 %v2198, %v1291
        %v2223 = vmul.f32 %v2199, %v1292
        %v2224 = vmul.f32 %v2200, %v1293
        %v2225 = vmul.f32 %v2201, %v1294
        %v2226 = vmul.f32 %v2202, %v1289
        %v2227 = vmul.f32 %v2203, %v1290
        %v2228 = vmul.f32 %v2204, %v1291
        %v2229 = vmul.f32 %v2205, %v1292
        %v2230 = vmul.f32 %v2206, %v1293
        %v2231 = vmul.f32 %v2207, %v1294
        %v2232 = vmul.f32 %v2208, %v1289
        %v2233 = vmul.f32 %v2209, %v1290
        %v2234 = vmul.f32 %v2210, %v1291
        %v2235 = vmul.f32 %v2211, %v1292
        %v2236 = vmul.f32 %v2212, %v1293
        %v2237 = vmul.f32 %v2213, %v1294
        %2238 = vst [vmem:[#allocation2 + $0x8] sm:$0xff] %v2214
        %2239 = vst [vmem:[#allocation2 + $0x10] sm:$0xff] %v2215
        %2240 = vst [vmem:[#allocation2 + $0x18] sm:$0xff] %v2216
        %2241 = vst [vmem:[#allocation2 + $0x20] sm:$0xff] %v2217
        %2242 = vst [vmem:[#allocation2 + $0x28] sm:$0xff] %v2218
        %2243 = vst [vmem:[#allocation2 + $0x30] sm:$0xff] %v2219
        %2244 = vst [vmem:[#allocation2 + $0x48] sm:$0xff] %v2220
        %2245 = vst [vmem:[#allocation2 + $0x50] sm:$0xff] %v2221
        %2246 = vst [vmem:[#allocation2 + $0x58] sm:$0xff] %v2222
        %2247 = vst [vmem:[#allocation2 + $0x60] sm:$0xff] %v2223
        %2248 = vst [vmem:[#allocation2 + $0x68] sm:$0xff] %v2224
        %2249 = vst [vmem:[#allocation2 + $0x70] sm:$0xff] %v2225
        %2250 = vst [vmem:[#allocation2 + $0x88] sm:$0xff] %v2226
        %2251 = vst [vmem:[#allocation2 + $0x90] sm:$0xff] %v2227
        %2252 = vst [vmem:[#allocation2 + $0x98] sm:$0xff] %v2228
        %2253 = vst [vmem:[#allocation2 + $0xa0] sm:$0xff] %v2229
        %2254 = vst [vmem:[#allocation2 + $0xa8] sm:$0xff] %v2230
        %2255 = vst [vmem:[#allocation2 + $0xb0] sm:$0xff] %v2231
        %2256 = vst [vmem:[#allocation2 + $0xc8] sm:$0xff] %v2232
        %2257 = vst [vmem:[#allocation2 + $0xd0] sm:$0xff] %v2233
        %2258 = vst [vmem:[#allocation2 + $0xd8] sm:$0xff] %v2234
        %2259 = vst [vmem:[#allocation2 + $0xe0] sm:$0xff] %v2235
        %2260 = vst [vmem:[#allocation2 + $0xe8] sm:$0xff] %v2236
        %2261 = vst [vmem:[#allocation2 + $0xf0] sm:$0xff] %v2237
        %v2262 = vld [vmem:[#allocation2 + $0x8] sm:$0xff]
        %v2263 = vld [vmem:[#allocation2 + $0x10] sm:$0xff]
        %v2264 = vld [vmem:[#allocation2 + $0x18] sm:$0xff]
        %v2265 = vld [vmem:[#allocation2 + $0x20] sm:$0xff]
        %v2266 = vld [vmem:[#allocation2 + $0x28] sm:$0xff]
        %v2267 = vld [vmem:[#allocation2 + $0x30] sm:$0xff]
        %v2268 = vld [vmem:[#allocation2 + $0x48] sm:$0xff]
        %v2269 = vld [vmem:[#allocation2 + $0x50] sm:$0xff]
        %v2270 = vld [vmem:[#allocation2 + $0x58] sm:$0xff]
        %v2271 = vld [vmem:[#allocation2 + $0x60] sm:$0xff]
        %v2272 = vld [vmem:[#allocation2 + $0x68] sm:$0xff]
        %v2273 = vld [vmem:[#allocation2 + $0x70] sm:$0xff]
        %v2274 = vld [vmem:[#allocation2 + $0x88] sm:$0xff]
        %v2275 = vld [vmem:[#allocation2 + $0x90] sm:$0xff]
        %v2276 = vld [vmem:[#allocation2 + $0x98] sm:$0xff]
        %v2277 = vld [vmem:[#allocation2 + $0xa0] sm:$0xff]
        %v2278 = vld [vmem:[#allocation2 + $0xa8] sm:$0xff]
        %v2279 = vld [vmem:[#allocation2 + $0xb0] sm:$0xff]
        %v2280 = vld [vmem:[#allocation2 + $0xc8] sm:$0xff]
        %v2281 = vld [vmem:[#allocation2 + $0xd0] sm:$0xff]
        %v2282 = vld [vmem:[#allocation2 + $0xd8] sm:$0xff]
        %v2283 = vld [vmem:[#allocation2 + $0xe0] sm:$0xff]
        %v2284 = vld [vmem:[#allocation2 + $0xe8] sm:$0xff]
        %v2285 = vld [vmem:[#allocation2 + $0xf0] sm:$0xff]
        %v2286 = vld [vmem:[#allocation2] sm:$0xff]
        %v2287 = vld [vmem:[#allocation2 + $0x40] sm:$0xff]
        %v2288 = vld [vmem:[#allocation2 + $0x80] sm:$0xff]
        %v2289 = vld [vmem:[#allocation2 + $0xc0] sm:$0xff]
        %v2290 = vpack.c.bf16 %v2287, %v2286
        %v2291 = vpack.c.bf16 %v2268, %v2262
        %v2292 = vpack.c.bf16 %v2269, %v2263
        %v2293 = vpack.c.bf16 %v2270, %v2264
        %v2294 = vpack.c.bf16 %v2271, %v2265
        %v2295 = vpack.c.bf16 %v2272, %v2266
        %v2296 = vpack.c.bf16 %v2273, %v2267
        %v2297 = vpack.c.bf16 %v2289, %v2288
        %v2298 = vpack.c.bf16 %v2280, %v2274
        %v2299 = vpack.c.bf16 %v2281, %v2275
        %v2300 = vpack.c.bf16 %v2282, %v2276
        %v2301 = vpack.c.bf16 %v2283, %v2277
        %v2302 = vpack.c.bf16 %v2284, %v2278
        %v2303 = vpack.c.bf16 %v2285, %v2279
        %v2304 = vld [vmem:[#allocation2 + $0x8] sm:$0xff]
        %v2305 = vld [vmem:[#allocation2 + $0x10] sm:$0xff]
        %v2306 = vld [vmem:[#allocation2 + $0x18] sm:$0xff]
        %v2307 = vld [vmem:[#allocation2 + $0x20] sm:$0xff]
        %v2308 = vld [vmem:[#allocation2 + $0x28] sm:$0xff]
        %v2309 = vld [vmem:[#allocation2 + $0x30] sm:$0xff]
        %v2310 = vld [vmem:[#allocation2 + $0x38] sm:$0xff]
        %v2311 = vld [vmem:[#allocation2 + $0x48] sm:$0xff]
        %v2312 = vld [vmem:[#allocation2 + $0x50] sm:$0xff]
        %v2313 = vld [vmem:[#allocation2 + $0x58] sm:$0xff]
        %v2314 = vld [vmem:[#allocation2 + $0x60] sm:$0xff]
        %v2315 = vld [vmem:[#allocation2 + $0x68] sm:$0xff]
        %v2316 = vld [vmem:[#allocation2 + $0x70] sm:$0xff]
        %v2317 = vld [vmem:[#allocation2 + $0x78] sm:$0xff]
        %v2318 = vld [vmem:[#allocation2 + $0x88] sm:$0xff]
        %v2319 = vld [vmem:[#allocation2 + $0x90] sm:$0xff]
        %v2320 = vld [vmem:[#allocation2 + $0x98] sm:$0xff]
        %v2321 = vld [vmem:[#allocation2 + $0xa0] sm:$0xff]
        %v2322 = vld [vmem:[#allocation2 + $0xa8] sm:$0xff]
        %v2323 = vld [vmem:[#allocation2 + $0xb0] sm:$0xff]
        %v2324 = vld [vmem:[#allocation2 + $0xb8] sm:$0xff]
        %v2325 = vld [vmem:[#allocation2 + $0xc8] sm:$0xff]
        %v2326 = vld [vmem:[#allocation2 + $0xd0] sm:$0xff]
        %v2327 = vld [vmem:[#allocation2 + $0xd8] sm:$0xff]
        %v2328 = vld [vmem:[#allocation2 + $0xe0] sm:$0xff]
        %v2329 = vld [vmem:[#allocation2 + $0xe8] sm:$0xff]
        %v2330 = vld [vmem:[#allocation2 + $0xf0] sm:$0xff]
        %v2331 = vld [vmem:[#allocation2 + $0xf8] sm:$0xff]
        %v2332 = vpack.c.bf16 %v2311, %v2304
        %v2333 = vpack.c.bf16 %v2312, %v2305
        %v2334 = vpack.c.bf16 %v2313, %v2306
        %v2335 = vpack.c.bf16 %v2314, %v2307
        %v2336 = vpack.c.bf16 %v2315, %v2308
        %v2337 = vpack.c.bf16 %v2316, %v2309
        %v2338 = vpack.c.bf16 %v2317, %v2310
        %v2339 = vpack.c.bf16 %v2325, %v2318
        %v2340 = vpack.c.bf16 %v2326, %v2319
        %v2341 = vpack.c.bf16 %v2327, %v2320
        %v2342 = vpack.c.bf16 %v2328, %v2321
        %v2343 = vpack.c.bf16 %v2329, %v2322
        %v2344 = vpack.c.bf16 %v2330, %v2323
        %v2345 = vpack.c.bf16 %v2331, %v2324
        %s2346 = scalar_lea.vmem %s975, 48
        %v2347 = vld [vmem:[%s2346] sm:$0xf]
        %v2348 = vld [vmem:[%s2346 + $0x4] sm:$0xf]
        %v2349 = vld [vmem:[%s2346 + $0x8] sm:$0xf]
        %v2350 = vld [vmem:[%s2346 + $0xc] sm:$0xf]
        %s2351 = scalar_lea.vmem %s975, 64
        %v2352 = vld [vmem:[%s2351] sm:$0xf]
        %v2353 = vld [vmem:[%s2351 + $0x4] sm:$0xf]
        %v2354 = vld [vmem:[%s2351 + $0x8] sm:$0xf]
        %v2355 = vld [vmem:[%s2351 + $0xc] sm:$0xf]
        %v2360 = vunpack.c.l.b16 %v2352
        %v2361 = vunpack.c.l.b16 %v2353
        %v2362 = vunpack.c.l.b16 %v2354
        %v2363 = vunpack.c.l.b16 %v2355
        %v2364 = vpack.c.b16 %v2361, %v2360
        %v2365 = vpack.c.b16 %v2363, %v2362
        %v2367 = vsel %vm1404, %v2364, 0
        %v2370 = vsel %vm1404, %v2365, 0
        %2372 = vmatpush.bf16.msra.mxu0 0
        %2373 = vmatpush.bf16.msra.mxu0 0
        %2374 = vmatpush.bf16.msra.mxu0 0
        %2375 = vmatpush.bf16.msra.mxu0 0
        %2376 = vmatpush.bf16.msra.mxu0 0
        %2377 = vmatpush.bf16.msra.mxu0 0
        %2378 = vmatpush.bf16.msra.mxu0 %v2298
        %2379 = vmatpush.bf16.msra.mxu0 %v2291
        %2380 = vmatmul.bf16.gmra.mxu0 %v2367
        %v2381 = vpop.f32.mrf.mxu0
        %v2382 = vadd.f32 0.0, %v2381
        %v2383 = vpop.f32.mrf.mxu0
        %v2384 = vadd.f32 0.0, %v2383
        %2385 = vmatmul.bf16.gmra.mxu0 %v2370
        %v2386 = vpop.f32.mrf.mxu0
        %v2387 = vadd.f32 0.0, %v2386
        %v2388 = vpop.f32.mrf.mxu0
        %v2389 = vadd.f32 0.0, %v2388
        %2390 = vdwg.mxu0
        %2391 = vmatpush.bf16.msra.mxu0 0
        %2392 = vmatpush.bf16.msra.mxu0 0
        %2393 = vmatpush.bf16.msra.mxu0 0
        %2394 = vmatpush.bf16.msra.mxu0 0
        %2395 = vmatpush.bf16.msra.mxu0 0
        %2396 = vmatpush.bf16.msra.mxu0 0
        %2397 = vmatpush.bf16.msra.mxu0 %v2299
        %2398 = vmatpush.bf16.msra.mxu0 %v2292
        %2399 = vmatmul.bf16.gmra.mxu0 %v2367
        %v2400 = vpop.f32.mrf.mxu0
        %v2401 = vadd.f32 0.0, %v2400
        %v2402 = vpop.f32.mrf.mxu0
        %v2403 = vadd.f32 0.0, %v2402
        %2404 = vmatmul.bf16.gmra.mxu0 %v2370
        %v2405 = vpop.f32.mrf.mxu0
        %v2406 = vadd.f32 0.0, %v2405
        %v2407 = vpop.f32.mrf.mxu0
        %v2408 = vadd.f32 0.0, %v2407
        %2409 = vdwg.mxu0
        %2410 = vmatpush.bf16.msra.mxu0 0
        %2411 = vmatpush.bf16.msra.mxu0 0
        %2412 = vmatpush.bf16.msra.mxu0 0
        %2413 = vmatpush.bf16.msra.mxu0 0
        %2414 = vmatpush.bf16.msra.mxu0 0
        %2415 = vmatpush.bf16.msra.mxu0 0
        %2416 = vmatpush.bf16.msra.mxu0 %v2300
        %2417 = vmatpush.bf16.msra.mxu0 %v2293
        %2418 = vmatmul.bf16.gmra.mxu0 %v2367
        %v2419 = vpop.f32.mrf.mxu0
        %v2420 = vadd.f32 0.0, %v2419
        %v2421 = vpop.f32.mrf.mxu0
        %v2422 = vadd.f32 0.0, %v2421
        %2423 = vmatmul.bf16.gmra.mxu0 %v2370
        %v2424 = vpop.f32.mrf.mxu0
        %v2425 = vadd.f32 0.0, %v2424
        %v2426 = vpop.f32.mrf.mxu0
        %v2427 = vadd.f32 0.0, %v2426
        %2428 = vdwg.mxu0
        %2429 = vmatpush.bf16.msra.mxu0 0
        %2430 = vmatpush.bf16.msra.mxu0 0
        %2431 = vmatpush.bf16.msra.mxu0 0
        %2432 = vmatpush.bf16.msra.mxu0 0
        %2433 = vmatpush.bf16.msra.mxu0 0
        %2434 = vmatpush.bf16.msra.mxu0 0
        %2435 = vmatpush.bf16.msra.mxu0 %v2301
        %2436 = vmatpush.bf16.msra.mxu0 %v2294
        %2437 = vmatmul.bf16.gmra.mxu0 %v2367
        %v2438 = vpop.f32.mrf.mxu0
        %v2439 = vadd.f32 0.0, %v2438
        %v2440 = vpop.f32.mrf.mxu0
        %v2441 = vadd.f32 0.0, %v2440
        %2442 = vmatmul.bf16.gmra.mxu0 %v2370
        %v2443 = vpop.f32.mrf.mxu0
        %v2444 = vadd.f32 0.0, %v2443
        %v2445 = vpop.f32.mrf.mxu0
        %v2446 = vadd.f32 0.0, %v2445
        %2447 = vdwg.mxu0
        %2448 = vmatpush.bf16.msra.mxu0 0
        %2449 = vmatpush.bf16.msra.mxu0 0
        %2450 = vmatpush.bf16.msra.mxu0 0
        %2451 = vmatpush.bf16.msra.mxu0 0
        %2452 = vmatpush.bf16.msra.mxu0 0
        %2453 = vmatpush.bf16.msra.mxu0 0
        %2454 = vmatpush.bf16.msra.mxu0 %v2302
        %2455 = vmatpush.bf16.msra.mxu0 %v2295
        %2456 = vmatmul.bf16.gmra.mxu0 %v2367
        %v2457 = vpop.f32.mrf.mxu0
        %v2458 = vadd.f32 0.0, %v2457
        %v2459 = vpop.f32.mrf.mxu0
        %v2460 = vadd.f32 0.0, %v2459
        %2461 = vmatmul.bf16.gmra.mxu0 %v2370
        %v2462 = vpop.f32.mrf.mxu0
        %v2463 = vadd.f32 0.0, %v2462
        %v2464 = vpop.f32.mrf.mxu0
        %v2465 = vadd.f32 0.0, %v2464
        %2466 = vdwg.mxu0
        %2467 = vmatpush.bf16.msra.mxu0 0
        %2468 = vmatpush.bf16.msra.mxu0 0
        %2469 = vmatpush.bf16.msra.mxu0 0
        %2470 = vmatpush.bf16.msra.mxu0 0
        %2471 = vmatpush.bf16.msra.mxu0 0
        %2472 = vmatpush.bf16.msra.mxu0 0
        %2473 = vmatpush.bf16.msra.mxu0 %v2303
        %2474 = vmatpush.bf16.msra.mxu0 %v2296
        %2475 = vmatmul.bf16.gmra.mxu0 %v2367
        %v2476 = vpop.f32.mrf.mxu0
        %v2477 = vadd.f32 0.0, %v2476
        %v2478 = vpop.f32.mrf.mxu0
        %v2479 = vadd.f32 0.0, %v2478
        %2480 = vmatmul.bf16.gmra.mxu0 %v2370
        %v2481 = vpop.f32.mrf.mxu0
        %v2482 = vadd.f32 0.0, %v2481
        %v2483 = vpop.f32.mrf.mxu0
        %v2484 = vadd.f32 0.0, %v2483
        %2485 = vdwg.mxu0
        %v2490 = vunpack.c.l.b16 %v2347
        %v2491 = vunpack.c.l.b16 %v2348
        %v2492 = vunpack.c.l.b16 %v2349
        %v2493 = vunpack.c.l.b16 %v2350
        %v2494 = vpack.c.b16 %v2491, %v2490
        %v2495 = vpack.c.b16 %v2493, %v2492
        %2510 = vrot.lane.b32.xlu0 %v2290, 2
        %v2511 = vpop.permute.xlu0 %2510
        %2512 = vrot.lane.b32.xlu0 %v2291, 2
        %v2513 = vpop.permute.xlu0 %2512
        %2514 = vrot.lane.b32.xlu0 %v2292, 2
        %v2515 = vpop.permute.xlu0 %2514
        %2516 = vrot.lane.b32.xlu0 %v2293, 2
        %v2517 = vpop.permute.xlu0 %2516
        %2518 = vrot.lane.b32.xlu0 %v2294, 2
        %v2519 = vpop.permute.xlu0 %2518
        %2520 = vrot.lane.b32.xlu0 %v2295, 2
        %v2521 = vpop.permute.xlu0 %2520
        %2522 = vrot.lane.b32.xlu0 %v2296, 2
        %v2523 = vpop.permute.xlu0 %2522
        %2524 = vrot.lane.b32.xlu0 %v2297, 2
        %v2525 = vpop.permute.xlu0 %2524
        %2526 = vrot.lane.b32.xlu0 %v2298, 2
        %v2527 = vpop.permute.xlu0 %2526
        %2528 = vrot.lane.b32.xlu0 %v2299, 2
        %v2529 = vpop.permute.xlu0 %2528
        %2530 = vrot.lane.b32.xlu0 %v2300, 2
        %v2531 = vpop.permute.xlu0 %2530
        %2532 = vrot.lane.b32.xlu0 %v2301, 2
        %v2533 = vpop.permute.xlu0 %2532
        %2534 = vrot.lane.b32.xlu0 %v2302, 2
        %v2535 = vpop.permute.xlu0 %2534
        %2536 = vrot.lane.b32.xlu0 %v2303, 2
        %v2537 = vpop.permute.xlu0 %2536
        %vm2538 = vcmask 15360
        %v2539 = vsel %vm2538, %v2511, %v2513
        %v2540 = vsel %vm2538, %v2513, %v2515
        %v2541 = vsel %vm2538, %v2515, %v2517
        %v2542 = vsel %vm2538, %v2517, %v2519
        %v2543 = vsel %vm2538, %v2519, %v2521
        %v2544 = vsel %vm2538, %v2521, %v2523
        %v2545 = vsel %vm2538, %v2525, %v2527
        %v2546 = vsel %vm2538, %v2527, %v2529
        %v2547 = vsel %vm2538, %v2529, %v2531
        %v2548 = vsel %vm2538, %v2531, %v2533
        %v2549 = vsel %vm2538, %v2533, %v2535
        %v2550 = vsel %vm2538, %v2535, %v2537
        %v2564 = vsel %vm1404, %v2494, 0
        %v2567 = vsel %vm1404, %v2495, 0
        %2569 = vmatpush.bf16.msra.mxu0 0
        %2570 = vmatpush.bf16.msra.mxu0 0
        %2571 = vmatpush.bf16.msra.mxu0 0
        %2572 = vmatpush.bf16.msra.mxu0 0
        %2573 = vmatpush.bf16.msra.mxu0 0
        %2574 = vmatpush.bf16.msra.mxu0 0
        %2575 = vmatpush.bf16.msra.mxu0 %v2545
        %2576 = vmatpush.bf16.msra.mxu0 %v2539
        %2577 = vmatmul.bf16.gmra.mxu0 %v2564
        %v2578 = vpop.f32.mrf.mxu0
        %v2579 = vadd.f32 %v2382, %v2578
        %v2580 = vpop.f32.mrf.mxu0
        %v2581 = vadd.f32 %v2384, %v2580
        %2582 = vmatmul.bf16.gmra.mxu0 %v2567
        %v2583 = vpop.f32.mrf.mxu0
        %v2584 = vadd.f32 %v2387, %v2583
        %v2585 = vpop.f32.mrf.mxu0
        %v2586 = vadd.f32 %v2389, %v2585
        %2587 = vdwg.mxu0
        %2588 = vmatpush.bf16.msra.mxu0 0
        %2589 = vmatpush.bf16.msra.mxu0 0
        %2590 = vmatpush.bf16.msra.mxu0 0
        %2591 = vmatpush.bf16.msra.mxu0 0
        %2592 = vmatpush.bf16.msra.mxu0 0
        %2593 = vmatpush.bf16.msra.mxu0 0
        %2594 = vmatpush.bf16.msra.mxu0 %v2546
        %2595 = vmatpush.bf16.msra.mxu0 %v2540
        %2596 = vmatmul.bf16.gmra.mxu0 %v2564
        %v2597 = vpop.f32.mrf.mxu0
        %v2598 = vadd.f32 %v2401, %v2597
        %v2599 = vpop.f32.mrf.mxu0
        %v2600 = vadd.f32 %v2403, %v2599
        %2601 = vmatmul.bf16.gmra.mxu0 %v2567
        %v2602 = vpop.f32.mrf.mxu0
        %v2603 = vadd.f32 %v2406, %v2602
        %v2604 = vpop.f32.mrf.mxu0
        %v2605 = vadd.f32 %v2408, %v2604
        %2606 = vdwg.mxu0
        %2607 = vmatpush.bf16.msra.mxu0 0
        %2608 = vmatpush.bf16.msra.mxu0 0
        %2609 = vmatpush.bf16.msra.mxu0 0
        %2610 = vmatpush.bf16.msra.mxu0 0
        %2611 = vmatpush.bf16.msra.mxu0 0
        %2612 = vmatpush.bf16.msra.mxu0 0
        %2613 = vmatpush.bf16.msra.mxu0 %v2547
        %2614 = vmatpush.bf16.msra.mxu0 %v2541
        %2615 = vmatmul.bf16.gmra.mxu0 %v2564
        %v2616 = vpop.f32.mrf.mxu0
        %v2617 = vadd.f32 %v2420, %v2616
        %v2618 = vpop.f32.mrf.mxu0
        %v2619 = vadd.f32 %v2422, %v2618
        %2620 = vmatmul.bf16.gmra.mxu0 %v2567
        %v2621 = vpop.f32.mrf.mxu0
        %v2622 = vadd.f32 %v2425, %v2621
        %v2623 = vpop.f32.mrf.mxu0
        %v2624 = vadd.f32 %v2427, %v2623
        %2625 = vdwg.mxu0
        %2626 = vmatpush.bf16.msra.mxu0 0
        %2627 = vmatpush.bf16.msra.mxu0 0
        %2628 = vmatpush.bf16.msra.mxu0 0
        %2629 = vmatpush.bf16.msra.mxu0 0
        %2630 = vmatpush.bf16.msra.mxu0 0
        %2631 = vmatpush.bf16.msra.mxu0 0
        %2632 = vmatpush.bf16.msra.mxu0 %v2548
        %2633 = vmatpush.bf16.msra.mxu0 %v2542
        %2634 = vmatmul.bf16.gmra.mxu0 %v2564
        %v2635 = vpop.f32.mrf.mxu0
        %v2636 = vadd.f32 %v2439, %v2635
        %v2637 = vpop.f32.mrf.mxu0
        %v2638 = vadd.f32 %v2441, %v2637
        %2639 = vmatmul.bf16.gmra.mxu0 %v2567
        %v2640 = vpop.f32.mrf.mxu0
        %v2641 = vadd.f32 %v2444, %v2640
        %v2642 = vpop.f32.mrf.mxu0
        %v2643 = vadd.f32 %v2446, %v2642
        %2644 = vdwg.mxu0
        %2645 = vmatpush.bf16.msra.mxu0 0
        %2646 = vmatpush.bf16.msra.mxu0 0
        %2647 = vmatpush.bf16.msra.mxu0 0
        %2648 = vmatpush.bf16.msra.mxu0 0
        %2649 = vmatpush.bf16.msra.mxu0 0
        %2650 = vmatpush.bf16.msra.mxu0 0
        %2651 = vmatpush.bf16.msra.mxu0 %v2549
        %2652 = vmatpush.bf16.msra.mxu0 %v2543
        %2653 = vmatmul.bf16.gmra.mxu0 %v2564
        %v2654 = vpop.f32.mrf.mxu0
        %v2655 = vadd.f32 %v2458, %v2654
        %v2656 = vpop.f32.mrf.mxu0
        %v2657 = vadd.f32 %v2460, %v2656
        %2658 = vmatmul.bf16.gmra.mxu0 %v2567
        %v2659 = vpop.f32.mrf.mxu0
        %v2660 = vadd.f32 %v2463, %v2659
        %v2661 = vpop.f32.mrf.mxu0
        %v2662 = vadd.f32 %v2465, %v2661
        %2663 = vdwg.mxu0
        %2664 = vmatpush.bf16.msra.mxu0 0
        %2665 = vmatpush.bf16.msra.mxu0 0
        %2666 = vmatpush.bf16.msra.mxu0 0
        %2667 = vmatpush.bf16.msra.mxu0 0
        %2668 = vmatpush.bf16.msra.mxu0 0
        %2669 = vmatpush.bf16.msra.mxu0 0
        %2670 = vmatpush.bf16.msra.mxu0 %v2550
        %2671 = vmatpush.bf16.msra.mxu0 %v2544
        %2672 = vmatmul.bf16.gmra.mxu0 %v2564
        %v2673 = vpop.f32.mrf.mxu0
        %v2674 = vadd.f32 %v2477, %v2673
        %v2675 = vpop.f32.mrf.mxu0
        %v2676 = vadd.f32 %v2479, %v2675
        %2677 = vmatmul.bf16.gmra.mxu0 %v2567
        %v2678 = vpop.f32.mrf.mxu0
        %v2679 = vadd.f32 %v2482, %v2678
        %v2680 = vpop.f32.mrf.mxu0
        %v2681 = vadd.f32 %v2484, %v2680
        %2682 = vdwg.mxu0
        %s2683 = scalar_lea.vmem %s975, 80
        %v2684 = vld [vmem:[%s2683] sm:$0xf]
        %v2685 = vld [vmem:[%s2683 + $0x4] sm:$0xf]
        %v2686 = vld [vmem:[%s2683 + $0x8] sm:$0xf]
        %v2687 = vld [vmem:[%s2683 + $0xc] sm:$0xf]
        %v2692 = vunpack.c.l.b16 %v2684
        %v2693 = vunpack.c.l.b16 %v2685
        %v2694 = vunpack.c.l.b16 %v2686
        %v2695 = vunpack.c.l.b16 %v2687
        %v2696 = vpack.c.b16 %v2693, %v2692
        %v2697 = vpack.c.b16 %v2695, %v2694
        %2712 = vrot.lane.b32.xlu0 %v2332, 126
        %v2713 = vpop.permute.xlu0 %2712
        %2714 = vrot.lane.b32.xlu0 %v2333, 126
        %v2715 = vpop.permute.xlu0 %2714
        %2716 = vrot.lane.b32.xlu0 %v2334, 126
        %v2717 = vpop.permute.xlu0 %2716
        %2718 = vrot.lane.b32.xlu0 %v2335, 126
        %v2719 = vpop.permute.xlu0 %2718
        %2720 = vrot.lane.b32.xlu0 %v2336, 126
        %v2721 = vpop.permute.xlu0 %2720
        %2722 = vrot.lane.b32.xlu0 %v2337, 126
        %v2723 = vpop.permute.xlu0 %2722
        %2724 = vrot.lane.b32.xlu0 %v2338, 126
        %v2725 = vpop.permute.xlu0 %2724
        %2726 = vrot.lane.b32.xlu0 %v2339, 126
        %v2727 = vpop.permute.xlu0 %2726
        %2728 = vrot.lane.b32.xlu0 %v2340, 126
        %v2729 = vpop.permute.xlu0 %2728
        %2730 = vrot.lane.b32.xlu0 %v2341, 126
        %v2731 = vpop.permute.xlu0 %2730
        %2732 = vrot.lane.b32.xlu0 %v2342, 126
        %v2733 = vpop.permute.xlu0 %2732
        %2734 = vrot.lane.b32.xlu0 %v2343, 126
        %v2735 = vpop.permute.xlu0 %2734
        %2736 = vrot.lane.b32.xlu0 %v2344, 126
        %v2737 = vpop.permute.xlu0 %2736
        %2738 = vrot.lane.b32.xlu0 %v2345, 126
        %v2739 = vpop.permute.xlu0 %2738
        %vm2740 = vcmask 1031168
        %v2741 = vsel %vm2740, %v2713, %v2715
        %v2742 = vsel %vm2740, %v2715, %v2717
        %v2743 = vsel %vm2740, %v2717, %v2719
        %v2744 = vsel %vm2740, %v2719, %v2721
        %v2745 = vsel %vm2740, %v2721, %v2723
        %v2746 = vsel %vm2740, %v2723, %v2725
        %v2747 = vsel %vm2740, %v2727, %v2729
        %v2748 = vsel %vm2740, %v2729, %v2731
        %v2749 = vsel %vm2740, %v2731, %v2733
        %v2750 = vsel %vm2740, %v2733, %v2735
        %v2751 = vsel %vm2740, %v2735, %v2737
        %v2752 = vsel %vm2740, %v2737, %v2739
        %v2766 = vsel %vm1404, %v2696, 0
        %v2769 = vsel %vm1404, %v2697, 0
        %2771 = vmatpush.bf16.msra.mxu0 0
        %2772 = vmatpush.bf16.msra.mxu0 0
        %2773 = vmatpush.bf16.msra.mxu0 0
        %2774 = vmatpush.bf16.msra.mxu0 0
        %2775 = vmatpush.bf16.msra.mxu0 0
        %2776 = vmatpush.bf16.msra.mxu0 0
        %2777 = vmatpush.bf16.msra.mxu0 %v2747
        %2778 = vmatpush.bf16.msra.mxu0 %v2741
        %2779 = vmatmul.bf16.gmra.mxu0 %v2766
        %v2780 = vpop.f32.mrf.mxu0
        %v2781 = vadd.f32 0.0, %v2780
        %v2782 = vpop.f32.mrf.mxu0
        %v2783 = vadd.f32 0.0, %v2782
        %2784 = vmatmul.bf16.gmra.mxu0 %v2769
        %v2785 = vpop.f32.mrf.mxu0
        %v2786 = vadd.f32 0.0, %v2785
        %v2787 = vpop.f32.mrf.mxu0
        %v2788 = vadd.f32 0.0, %v2787
        %2789 = vdwg.mxu0
        %2790 = vmatpush.bf16.msra.mxu0 0
        %2791 = vmatpush.bf16.msra.mxu0 0
        %2792 = vmatpush.bf16.msra.mxu0 0
        %2793 = vmatpush.bf16.msra.mxu0 0
        %2794 = vmatpush.bf16.msra.mxu0 0
        %2795 = vmatpush.bf16.msra.mxu0 0
        %2796 = vmatpush.bf16.msra.mxu0 %v2748
        %2797 = vmatpush.bf16.msra.mxu0 %v2742
        %2798 = vmatmul.bf16.gmra.mxu0 %v2766
        %v2799 = vpop.f32.mrf.mxu0
        %v2800 = vadd.f32 0.0, %v2799
        %v2801 = vpop.f32.mrf.mxu0
        %v2802 = vadd.f32 0.0, %v2801
        %2803 = vmatmul.bf16.gmra.mxu0 %v2769
        %v2804 = vpop.f32.mrf.mxu0
        %v2805 = vadd.f32 0.0, %v2804
        %v2806 = vpop.f32.mrf.mxu0
        %v2807 = vadd.f32 0.0, %v2806
        %2808 = vdwg.mxu0
        %2809 = vmatpush.bf16.msra.mxu0 0
        %2810 = vmatpush.bf16.msra.mxu0 0
        %2811 = vmatpush.bf16.msra.mxu0 0
        %2812 = vmatpush.bf16.msra.mxu0 0
        %2813 = vmatpush.bf16.msra.mxu0 0
        %2814 = vmatpush.bf16.msra.mxu0 0
        %2815 = vmatpush.bf16.msra.mxu0 %v2749
        %2816 = vmatpush.bf16.msra.mxu0 %v2743
        %2817 = vmatmul.bf16.gmra.mxu0 %v2766
        %v2818 = vpop.f32.mrf.mxu0
        %v2819 = vadd.f32 0.0, %v2818
        %v2820 = vpop.f32.mrf.mxu0
        %v2821 = vadd.f32 0.0, %v2820
        %2822 = vmatmul.bf16.gmra.mxu0 %v2769
        %v2823 = vpop.f32.mrf.mxu0
        %v2824 = vadd.f32 0.0, %v2823
        %v2825 = vpop.f32.mrf.mxu0
        %v2826 = vadd.f32 0.0, %v2825
        %2827 = vdwg.mxu0
        %2828 = vmatpush.bf16.msra.mxu0 0
        %2829 = vmatpush.bf16.msra.mxu0 0
        %2830 = vmatpush.bf16.msra.mxu0 0
        %2831 = vmatpush.bf16.msra.mxu0 0
        %2832 = vmatpush.bf16.msra.mxu0 0
        %2833 = vmatpush.bf16.msra.mxu0 0
        %2834 = vmatpush.bf16.msra.mxu0 %v2750
        %2835 = vmatpush.bf16.msra.mxu0 %v2744
        %2836 = vmatmul.bf16.gmra.mxu0 %v2766
        %v2837 = vpop.f32.mrf.mxu0
        %v2838 = vadd.f32 0.0, %v2837
        %v2839 = vpop.f32.mrf.mxu0
        %v2840 = vadd.f32 0.0, %v2839
        %2841 = vmatmul.bf16.gmra.mxu0 %v2769
        %v2842 = vpop.f32.mrf.mxu0
        %v2843 = vadd.f32 0.0, %v2842
        %v2844 = vpop.f32.mrf.mxu0
        %v2845 = vadd.f32 0.0, %v2844
        %2846 = vdwg.mxu0
        %2847 = vmatpush.bf16.msra.mxu0 0
        %2848 = vmatpush.bf16.msra.mxu0 0
        %2849 = vmatpush.bf16.msra.mxu0 0
        %2850 = vmatpush.bf16.msra.mxu0 0
        %2851 = vmatpush.bf16.msra.mxu0 0
        %2852 = vmatpush.bf16.msra.mxu0 0
        %2853 = vmatpush.bf16.msra.mxu0 %v2751
        %2854 = vmatpush.bf16.msra.mxu0 %v2745
        %2855 = vmatmul.bf16.gmra.mxu0 %v2766
        %v2856 = vpop.f32.mrf.mxu0
        %v2857 = vadd.f32 0.0, %v2856
        %v2858 = vpop.f32.mrf.mxu0
        %v2859 = vadd.f32 0.0, %v2858
        %2860 = vmatmul.bf16.gmra.mxu0 %v2769
        %v2861 = vpop.f32.mrf.mxu0
        %v2862 = vadd.f32 0.0, %v2861
        %v2863 = vpop.f32.mrf.mxu0
        %v2864 = vadd.f32 0.0, %v2863
        %2865 = vdwg.mxu0
        %2866 = vmatpush.bf16.msra.mxu0 0
        %2867 = vmatpush.bf16.msra.mxu0 0
        %2868 = vmatpush.bf16.msra.mxu0 0
        %2869 = vmatpush.bf16.msra.mxu0 0
        %2870 = vmatpush.bf16.msra.mxu0 0
        %2871 = vmatpush.bf16.msra.mxu0 0
        %2872 = vmatpush.bf16.msra.mxu0 %v2752
        %2873 = vmatpush.bf16.msra.mxu0 %v2746
        %2874 = vmatmul.bf16.gmra.mxu0 %v2766
        %v2875 = vpop.f32.mrf.mxu0
        %v2876 = vadd.f32 0.0, %v2875
        %v2877 = vpop.f32.mrf.mxu0
        %v2878 = vadd.f32 0.0, %v2877
        %2879 = vmatmul.bf16.gmra.mxu0 %v2769
        %v2880 = vpop.f32.mrf.mxu0
        %v2881 = vadd.f32 0.0, %v2880
        %v2882 = vpop.f32.mrf.mxu0
        %v2883 = vadd.f32 0.0, %v2882
        %2884 = vdwg.mxu0
        %v2885 = vadd.f32 %v2579, %v2781
        %v2886 = vadd.f32 %v2598, %v2800
        %v2887 = vadd.f32 %v2617, %v2819
        %v2888 = vadd.f32 %v2636, %v2838
        %v2889 = vadd.f32 %v2655, %v2857
        %v2890 = vadd.f32 %v2674, %v2876
        %v2891 = vadd.f32 %v2581, %v2783
        %v2892 = vadd.f32 %v2600, %v2802
        %v2893 = vadd.f32 %v2619, %v2821
        %v2894 = vadd.f32 %v2638, %v2840
        %v2895 = vadd.f32 %v2657, %v2859
        %v2896 = vadd.f32 %v2676, %v2878
        %v2897 = vadd.f32 %v2584, %v2786
        %v2898 = vadd.f32 %v2603, %v2805
        %v2899 = vadd.f32 %v2622, %v2824
        %v2900 = vadd.f32 %v2641, %v2843
        %v2901 = vadd.f32 %v2660, %v2862
        %v2902 = vadd.f32 %v2679, %v2881
        %v2903 = vadd.f32 %v2586, %v2788
        %v2904 = vadd.f32 %v2605, %v2807
        %v2905 = vadd.f32 %v2624, %v2826
        %v2906 = vadd.f32 %v2643, %v2845
        %v2907 = vadd.f32 %v2662, %v2864
        %v2908 = vadd.f32 %v2681, %v2883
        %s2909 = scalar_lea.vmem %s980, 32
        %v2910 = vld [vmem:[%s2909] sm:$0xff]
        %v2911 = vld [vmem:[%s2909 + $0x8] sm:$0xff]
        %v2912 = vld [vmem:[%s2909 + $0x10] sm:$0xff]
        %v2913 = vld [vmem:[%s2909 + $0x18] sm:$0xff]
        %2915 = vset.pattern.permute.xlu0 0
        %2916 = vperm.xlu0 %2915, %v2910
        %v2917 = vpop.permute.xlu0 %2916
        %2920 = vset.pattern.permute.xlu0 0
        %2921 = vperm.xlu0 %2920, %v2911
        %v2922 = vpop.permute.xlu0 %2921
        %2925 = vset.pattern.permute.xlu0 0
        %2926 = vperm.xlu0 %2925, %v2912
        %v2927 = vpop.permute.xlu0 %2926
        %2930 = vset.pattern.permute.xlu0 0
        %2931 = vperm.xlu0 %2930, %v2913
        %v2932 = vpop.permute.xlu0 %2931
        %v2934 = vadd.f32 %v2885, %v2917
        %v2935 = vadd.f32 %v2886, %v2917
        %v2936 = vadd.f32 %v2887, %v2917
        %v2937 = vadd.f32 %v2888, %v2917
        %v2938 = vadd.f32 %v2889, %v2917
        %v2939 = vadd.f32 %v2890, %v2917
        %v2940 = vadd.f32 %v2891, %v2922
        %v2941 = vadd.f32 %v2892, %v2922
        %v2942 = vadd.f32 %v2893, %v2922
        %v2943 = vadd.f32 %v2894, %v2922
        %v2944 = vadd.f32 %v2895, %v2922
        %v2945 = vadd.f32 %v2896, %v2922
        %v2946 = vadd.f32 %v2897, %v2927
        %v2947 = vadd.f32 %v2898, %v2927
        %v2948 = vadd.f32 %v2899, %v2927
        %v2949 = vadd.f32 %v2900, %v2927
        %v2950 = vadd.f32 %v2901, %v2927
        %v2951 = vadd.f32 %v2902, %v2927
        %v2952 = vadd.f32 %v2903, %v2932
        %v2953 = vadd.f32 %v2904, %v2932
        %v2954 = vadd.f32 %v2905, %v2932
        %v2955 = vadd.f32 %v2906, %v2932
        %v2956 = vadd.f32 %v2907, %v2932
        %v2957 = vadd.f32 %v2908, %v2932
        %v2958 = vmax.f32 %v2934, 0.0
        %v2959 = vmax.f32 %v2935, 0.0
        %v2960 = vmax.f32 %v2936, 0.0
        %v2961 = vmax.f32 %v2937, 0.0
        %v2962 = vmax.f32 %v2938, 0.0
        %v2963 = vmax.f32 %v2939, 0.0
        %v2964 = vmax.f32 %v2940, 0.0
        %v2965 = vmax.f32 %v2941, 0.0
        %v2966 = vmax.f32 %v2942, 0.0
        %v2967 = vmax.f32 %v2943, 0.0
        %v2968 = vmax.f32 %v2944, 0.0
        %v2969 = vmax.f32 %v2945, 0.0
        %v2970 = vmax.f32 %v2946, 0.0
        %v2971 = vmax.f32 %v2947, 0.0
        %v2972 = vmax.f32 %v2948, 0.0
        %v2973 = vmax.f32 %v2949, 0.0
        %v2974 = vmax.f32 %v2950, 0.0
        %v2975 = vmax.f32 %v2951, 0.0
        %v2976 = vmax.f32 %v2952, 0.0
        %v2977 = vmax.f32 %v2953, 0.0
        %v2978 = vmax.f32 %v2954, 0.0
        %v2979 = vmax.f32 %v2955, 0.0
        %v2980 = vmax.f32 %v2956, 0.0
        %v2981 = vmax.f32 %v2957, 0.0
        %v2982 = vpack.c.bf16 %v2964, %v2958
        %v2983 = vpack.c.bf16 %v2965, %v2959
        %v2984 = vpack.c.bf16 %v2966, %v2960
        %v2985 = vpack.c.bf16 %v2967, %v2961
        %v2986 = vpack.c.bf16 %v2968, %v2962
        %v2987 = vpack.c.bf16 %v2969, %v2963
        %v2988 = vpack.c.bf16 %v2976, %v2970
        %v2989 = vpack.c.bf16 %v2977, %v2971
        %v2990 = vpack.c.bf16 %v2978, %v2972
        %v2991 = vpack.c.bf16 %v2979, %v2973
        %v2992 = vpack.c.bf16 %v2980, %v2974
        %v2993 = vpack.c.bf16 %v2981, %v2975
        %s2994 = scalar_lea.vmem %s985, 16
        %v2995 = vld [vmem:[%s2994] sm:$0xf]
        %v2996 = vld [vmem:[%s2994 + $0x4] sm:$0xf]
        %v2997 = vld [vmem:[%s2994 + $0x8] sm:$0xf]
        %v2998 = vld [vmem:[%s2994 + $0xc] sm:$0xf]
        %s2999 = scalar_lea.vmem %s990, 32
        %v3000 = vld [vmem:[%s2999] sm:$0xff]
        %v3001 = vld [vmem:[%s2999 + $0x8] sm:$0xff]
        %v3002 = vld [vmem:[%s2999 + $0x10] sm:$0xff]
        %v3003 = vld [vmem:[%s2999 + $0x18] sm:$0xff]
        %3005 = vset.pattern.permute.xlu0 0
        %3006 = vperm.xlu0 %3005, %v3000
        %v3007 = vpop.permute.xlu0 %3006
        %3010 = vset.pattern.permute.xlu0 0
        %3011 = vperm.xlu0 %3010, %v3001
        %v3012 = vpop.permute.xlu0 %3011
        %3015 = vset.pattern.permute.xlu0 0
        %3016 = vperm.xlu0 %3015, %v3002
        %v3017 = vpop.permute.xlu0 %3016
        %3020 = vset.pattern.permute.xlu0 0
        %3021 = vperm.xlu0 %3020, %v3003
        %v3022 = vpop.permute.xlu0 %3021
        %v3028 = vunpack.c.l.b16 %v2995
        %v3029 = vunpack.c.l.b16 %v2996
        %v3030 = vunpack.c.l.b16 %v2997
        %v3031 = vunpack.c.l.b16 %v2998
        %v3032 = vpack.c.b16 %v3029, %v3028
        %v3033 = vpack.c.b16 %v3031, %v3030
        %v3035 = vsel %vm1404, %v3032, 0
        %v3038 = vsel %vm1404, %v3033, 0
        %3040 = vmatpush.bf16.msra.mxu0 0
        %3041 = vmatpush.bf16.msra.mxu0 0
        %3042 = vmatpush.bf16.msra.mxu0 0
        %3043 = vmatpush.bf16.msra.mxu0 0
        %3044 = vmatpush.bf16.msra.mxu0 0
        %3045 = vmatpush.bf16.msra.mxu0 0
        %3046 = vmatpush.bf16.msra.mxu0 %v2988
        %3047 = vmatpush.bf16.msra.mxu0 %v2982
        %3048 = vmatmul.bf16.gmra.mxu0 %v3035
        %v3049 = vpop.f32.mrf.mxu0
        %v3050 = vadd.f32 %v3007, %v3049
        %v3051 = vpop.f32.mrf.mxu0
        %v3052 = vadd.f32 %v3012, %v3051
        %3053 = vmatmul.bf16.gmra.mxu0 %v3038
        %v3054 = vpop.f32.mrf.mxu0
        %v3055 = vadd.f32 %v3017, %v3054
        %v3056 = vpop.f32.mrf.mxu0
        %v3057 = vadd.f32 %v3022, %v3056
        %3058 = vdwg.mxu0
        %3059 = vmatpush.bf16.msra.mxu0 0
        %3060 = vmatpush.bf16.msra.mxu0 0
        %3061 = vmatpush.bf16.msra.mxu0 0
        %3062 = vmatpush.bf16.msra.mxu0 0
        %3063 = vmatpush.bf16.msra.mxu0 0
        %3064 = vmatpush.bf16.msra.mxu0 0
        %3065 = vmatpush.bf16.msra.mxu0 %v2989
        %3066 = vmatpush.bf16.msra.mxu0 %v2983
        %3067 = vmatmul.bf16.gmra.mxu0 %v3035
        %v3068 = vpop.f32.mrf.mxu0
        %v3069 = vadd.f32 %v3007, %v3068
        %v3070 = vpop.f32.mrf.mxu0
        %v3071 = vadd.f32 %v3012, %v3070
        %3072 = vmatmul.bf16.gmra.mxu0 %v3038
        %v3073 = vpop.f32.mrf.mxu0
        %v3074 = vadd.f32 %v3017, %v3073
        %v3075 = vpop.f32.mrf.mxu0
        %v3076 = vadd.f32 %v3022, %v3075
        %3077 = vdwg.mxu0
        %3078 = vmatpush.bf16.msra.mxu0 0
        %3079 = vmatpush.bf16.msra.mxu0 0
        %3080 = vmatpush.bf16.msra.mxu0 0
        %3081 = vmatpush.bf16.msra.mxu0 0
        %3082 = vmatpush.bf16.msra.mxu0 0
        %3083 = vmatpush.bf16.msra.mxu0 0
        %3084 = vmatpush.bf16.msra.mxu0 %v2990
        %3085 = vmatpush.bf16.msra.mxu0 %v2984
        %3086 = vmatmul.bf16.gmra.mxu0 %v3035
        %v3087 = vpop.f32.mrf.mxu0
        %v3088 = vadd.f32 %v3007, %v3087
        %v3089 = vpop.f32.mrf.mxu0
        %v3090 = vadd.f32 %v3012, %v3089
        %3091 = vmatmul.bf16.gmra.mxu0 %v3038
        %v3092 = vpop.f32.mrf.mxu0
        %v3093 = vadd.f32 %v3017, %v3092
        %v3094 = vpop.f32.mrf.mxu0
        %v3095 = vadd.f32 %v3022, %v3094
        %3096 = vdwg.mxu0
        %3097 = vmatpush.bf16.msra.mxu0 0
        %3098 = vmatpush.bf16.msra.mxu0 0
        %3099 = vmatpush.bf16.msra.mxu0 0
        %3100 = vmatpush.bf16.msra.mxu0 0
        %3101 = vmatpush.bf16.msra.mxu0 0
        %3102 = vmatpush.bf16.msra.mxu0 0
        %3103 = vmatpush.bf16.msra.mxu0 %v2991
        %3104 = vmatpush.bf16.msra.mxu0 %v2985
        %3105 = vmatmul.bf16.gmra.mxu0 %v3035
        %v3106 = vpop.f32.mrf.mxu0
        %v3107 = vadd.f32 %v3007, %v3106
        %v3108 = vpop.f32.mrf.mxu0
        %v3109 = vadd.f32 %v3012, %v3108
        %3110 = vmatmul.bf16.gmra.mxu0 %v3038
        %v3111 = vpop.f32.mrf.mxu0
        %v3112 = vadd.f32 %v3017, %v3111
        %v3113 = vpop.f32.mrf.mxu0
        %v3114 = vadd.f32 %v3022, %v3113
        %3115 = vdwg.mxu0
        %3116 = vmatpush.bf16.msra.mxu0 0
        %3117 = vmatpush.bf16.msra.mxu0 0
        %3118 = vmatpush.bf16.msra.mxu0 0
        %3119 = vmatpush.bf16.msra.mxu0 0
        %3120 = vmatpush.bf16.msra.mxu0 0
        %3121 = vmatpush.bf16.msra.mxu0 0
        %3122 = vmatpush.bf16.msra.mxu0 %v2992
        %3123 = vmatpush.bf16.msra.mxu0 %v2986
        %3124 = vmatmul.bf16.gmra.mxu0 %v3035
        %v3125 = vpop.f32.mrf.mxu0
        %v3126 = vadd.f32 %v3007, %v3125
        %v3127 = vpop.f32.mrf.mxu0
        %v3128 = vadd.f32 %v3012, %v3127
        %3129 = vmatmul.bf16.gmra.mxu0 %v3038
        %v3130 = vpop.f32.mrf.mxu0
        %v3131 = vadd.f32 %v3017, %v3130
        %v3132 = vpop.f32.mrf.mxu0
        %v3133 = vadd.f32 %v3022, %v3132
        %3134 = vdwg.mxu0
        %3135 = vmatpush.bf16.msra.mxu0 0
        %3136 = vmatpush.bf16.msra.mxu0 0
        %3137 = vmatpush.bf16.msra.mxu0 0
        %3138 = vmatpush.bf16.msra.mxu0 0
        %3139 = vmatpush.bf16.msra.mxu0 0
        %3140 = vmatpush.bf16.msra.mxu0 0
        %3141 = vmatpush.bf16.msra.mxu0 %v2993
        %3142 = vmatpush.bf16.msra.mxu0 %v2987
        %3143 = vmatmul.bf16.gmra.mxu0 %v3035
        %v3144 = vpop.f32.mrf.mxu0
        %v3145 = vadd.f32 %v3007, %v3144
        %v3146 = vpop.f32.mrf.mxu0
        %v3147 = vadd.f32 %v3012, %v3146
        %3148 = vmatmul.bf16.gmra.mxu0 %v3038
        %v3149 = vpop.f32.mrf.mxu0
        %v3150 = vadd.f32 %v3017, %v3149
        %v3151 = vpop.f32.mrf.mxu0
        %v3152 = vadd.f32 %v3022, %v3151
        %3153 = vdwg.mxu0
        %v3154 = vadd.f32 %v3050, %v2262
        %v3155 = vadd.f32 %v3069, %v2263
        %v3156 = vadd.f32 %v3088, %v2264
        %v3157 = vadd.f32 %v3107, %v2265
        %v3158 = vadd.f32 %v3126, %v2266
        %v3159 = vadd.f32 %v3145, %v2267
        %v3160 = vadd.f32 %v3052, %v2268
        %v3161 = vadd.f32 %v3071, %v2269
        %v3162 = vadd.f32 %v3090, %v2270
        %v3163 = vadd.f32 %v3109, %v2271
        %v3164 = vadd.f32 %v3128, %v2272
        %v3165 = vadd.f32 %v3147, %v2273
        %v3166 = vadd.f32 %v3055, %v2274
        %v3167 = vadd.f32 %v3074, %v2275
        %v3168 = vadd.f32 %v3093, %v2276
        %v3169 = vadd.f32 %v3112, %v2277
        %v3170 = vadd.f32 %v3131, %v2278
        %v3171 = vadd.f32 %v3150, %v2279
        %v3172 = vadd.f32 %v3057, %v2280
        %v3173 = vadd.f32 %v3076, %v2281
        %v3174 = vadd.f32 %v3095, %v2282
        %v3175 = vadd.f32 %v3114, %v2283
        %v3176 = vadd.f32 %v3133, %v2284
        %v3177 = vadd.f32 %v3152, %v2285
        %v3178 = vmul.f32 %v3154, %v1289
        %v3179 = vmul.f32 %v3155, %v1290
        %v3180 = vmul.f32 %v3156, %v1291
        %v3181 = vmul.f32 %v3157, %v1292
        %v3182 = vmul.f32 %v3158, %v1293
        %v3183 = vmul.f32 %v3159, %v1294
        %v3184 = vmul.f32 %v3160, %v1289
        %v3185 = vmul.f32 %v3161, %v1290
        %v3186 = vmul.f32 %v3162, %v1291
        %v3187 = vmul.f32 %v3163, %v1292
        %v3188 = vmul.f32 %v3164, %v1293
        %v3189 = vmul.f32 %v3165, %v1294
        %v3190 = vmul.f32 %v3166, %v1289
        %v3191 = vmul.f32 %v3167, %v1290
        %v3192 = vmul.f32 %v3168, %v1291
        %v3193 = vmul.f32 %v3169, %v1292
        %v3194 = vmul.f32 %v3170, %v1293
        %v3195 = vmul.f32 %v3171, %v1294
        %v3196 = vmul.f32 %v3172, %v1289
        %v3197 = vmul.f32 %v3173, %v1290
        %v3198 = vmul.f32 %v3174, %v1291
        %v3199 = vmul.f32 %v3175, %v1292
        %v3200 = vmul.f32 %v3176, %v1293
        %v3201 = vmul.f32 %v3177, %v1294
        %3202 = vst [vmem:[#allocation2 + $0x8] sm:$0xff] %v3178
        %3203 = vst [vmem:[#allocation2 + $0x10] sm:$0xff] %v3179
        %3204 = vst [vmem:[#allocation2 + $0x18] sm:$0xff] %v3180
        %3205 = vst [vmem:[#allocation2 + $0x20] sm:$0xff] %v3181
        %3206 = vst [vmem:[#allocation2 + $0x28] sm:$0xff] %v3182
        %3207 = vst [vmem:[#allocation2 + $0x30] sm:$0xff] %v3183
        %3208 = vst [vmem:[#allocation2 + $0x48] sm:$0xff] %v3184
        %3209 = vst [vmem:[#allocation2 + $0x50] sm:$0xff] %v3185
        %3210 = vst [vmem:[#allocation2 + $0x58] sm:$0xff] %v3186
        %3211 = vst [vmem:[#allocation2 + $0x60] sm:$0xff] %v3187
        %3212 = vst [vmem:[#allocation2 + $0x68] sm:$0xff] %v3188
        %3213 = vst [vmem:[#allocation2 + $0x70] sm:$0xff] %v3189
        %3214 = vst [vmem:[#allocation2 + $0x88] sm:$0xff] %v3190
        %3215 = vst [vmem:[#allocation2 + $0x90] sm:$0xff] %v3191
        %3216 = vst [vmem:[#allocation2 + $0x98] sm:$0xff] %v3192
        %3217 = vst [vmem:[#allocation2 + $0xa0] sm:$0xff] %v3193
        %3218 = vst [vmem:[#allocation2 + $0xa8] sm:$0xff] %v3194
        %3219 = vst [vmem:[#allocation2 + $0xb0] sm:$0xff] %v3195
        %3220 = vst [vmem:[#allocation2 + $0xc8] sm:$0xff] %v3196
        %3221 = vst [vmem:[#allocation2 + $0xd0] sm:$0xff] %v3197
        %3222 = vst [vmem:[#allocation2 + $0xd8] sm:$0xff] %v3198
        %3223 = vst [vmem:[#allocation2 + $0xe0] sm:$0xff] %v3199
        %3224 = vst [vmem:[#allocation2 + $0xe8] sm:$0xff] %v3200
        %3225 = vst [vmem:[#allocation2 + $0xf0] sm:$0xff] %v3201
        %v3226 = vld [vmem:[#allocation2 + $0x8] sm:$0xff]
        %v3227 = vld [vmem:[#allocation2 + $0x10] sm:$0xff]
        %v3228 = vld [vmem:[#allocation2 + $0x18] sm:$0xff]
        %v3229 = vld [vmem:[#allocation2 + $0x20] sm:$0xff]
        %v3230 = vld [vmem:[#allocation2 + $0x28] sm:$0xff]
        %v3231 = vld [vmem:[#allocation2 + $0x30] sm:$0xff]
        %v3232 = vld [vmem:[#allocation2 + $0x48] sm:$0xff]
        %v3233 = vld [vmem:[#allocation2 + $0x50] sm:$0xff]
        %v3234 = vld [vmem:[#allocation2 + $0x58] sm:$0xff]
        %v3235 = vld [vmem:[#allocation2 + $0x60] sm:$0xff]
        %v3236 = vld [vmem:[#allocation2 + $0x68] sm:$0xff]
        %v3237 = vld [vmem:[#allocation2 + $0x70] sm:$0xff]
        %v3238 = vld [vmem:[#allocation2 + $0x88] sm:$0xff]
        %v3239 = vld [vmem:[#allocation2 + $0x90] sm:$0xff]
        %v3240 = vld [vmem:[#allocation2 + $0x98] sm:$0xff]
        %v3241 = vld [vmem:[#allocation2 + $0xa0] sm:$0xff]
        %v3242 = vld [vmem:[#allocation2 + $0xa8] sm:$0xff]
        %v3243 = vld [vmem:[#allocation2 + $0xb0] sm:$0xff]
        %v3244 = vld [vmem:[#allocation2 + $0xc8] sm:$0xff]
        %v3245 = vld [vmem:[#allocation2 + $0xd0] sm:$0xff]
        %v3246 = vld [vmem:[#allocation2 + $0xd8] sm:$0xff]
        %v3247 = vld [vmem:[#allocation2 + $0xe0] sm:$0xff]
        %v3248 = vld [vmem:[#allocation2 + $0xe8] sm:$0xff]
        %v3249 = vld [vmem:[#allocation2 + $0xf0] sm:$0xff]
        %v3250 = vld [vmem:[#allocation2] sm:$0xff]
        %v3251 = vld [vmem:[#allocation2 + $0x40] sm:$0xff]
        %v3252 = vld [vmem:[#allocation2 + $0x80] sm:$0xff]
        %v3253 = vld [vmem:[#allocation2 + $0xc0] sm:$0xff]
        %v3254 = vpack.c.bf16 %v3251, %v3250
        %v3255 = vpack.c.bf16 %v3232, %v3226
        %v3256 = vpack.c.bf16 %v3233, %v3227
        %v3257 = vpack.c.bf16 %v3234, %v3228
        %v3258 = vpack.c.bf16 %v3235, %v3229
        %v3259 = vpack.c.bf16 %v3236, %v3230
        %v3260 = vpack.c.bf16 %v3237, %v3231
        %v3261 = vpack.c.bf16 %v3253, %v3252
        %v3262 = vpack.c.bf16 %v3244, %v3238
        %v3263 = vpack.c.bf16 %v3245, %v3239
        %v3264 = vpack.c.bf16 %v3246, %v3240
        %v3265 = vpack.c.bf16 %v3247, %v3241
        %v3266 = vpack.c.bf16 %v3248, %v3242
        %v3267 = vpack.c.bf16 %v3249, %v3243
        %v3268 = vld [vmem:[#allocation2 + $0x8] sm:$0xff]
        %v3269 = vld [vmem:[#allocation2 + $0x10] sm:$0xff]
        %v3270 = vld [vmem:[#allocation2 + $0x18] sm:$0xff]
        %v3271 = vld [vmem:[#allocation2 + $0x20] sm:$0xff]
        %v3272 = vld [vmem:[#allocation2 + $0x28] sm:$0xff]
        %v3273 = vld [vmem:[#allocation2 + $0x30] sm:$0xff]
        %v3274 = vld [vmem:[#allocation2 + $0x38] sm:$0xff]
        %v3275 = vld [vmem:[#allocation2 + $0x48] sm:$0xff]
        %v3276 = vld [vmem:[#allocation2 + $0x50] sm:$0xff]
        %v3277 = vld [vmem:[#allocation2 + $0x58] sm:$0xff]
        %v3278 = vld [vmem:[#allocation2 + $0x60] sm:$0xff]
        %v3279 = vld [vmem:[#allocation2 + $0x68] sm:$0xff]
        %v3280 = vld [vmem:[#allocation2 + $0x70] sm:$0xff]
        %v3281 = vld [vmem:[#allocation2 + $0x78] sm:$0xff]
        %v3282 = vld [vmem:[#allocation2 + $0x88] sm:$0xff]
        %v3283 = vld [vmem:[#allocation2 + $0x90] sm:$0xff]
        %v3284 = vld [vmem:[#allocation2 + $0x98] sm:$0xff]
        %v3285 = vld [vmem:[#allocation2 + $0xa0] sm:$0xff]
        %v3286 = vld [vmem:[#allocation2 + $0xa8] sm:$0xff]
        %v3287 = vld [vmem:[#allocation2 + $0xb0] sm:$0xff]
        %v3288 = vld [vmem:[#allocation2 + $0xb8] sm:$0xff]
        %v3289 = vld [vmem:[#allocation2 + $0xc8] sm:$0xff]
        %v3290 = vld [vmem:[#allocation2 + $0xd0] sm:$0xff]
        %v3291 = vld [vmem:[#allocation2 + $0xd8] sm:$0xff]
        %v3292 = vld [vmem:[#allocation2 + $0xe0] sm:$0xff]
        %v3293 = vld [vmem:[#allocation2 + $0xe8] sm:$0xff]
        %v3294 = vld [vmem:[#allocation2 + $0xf0] sm:$0xff]
        %v3295 = vld [vmem:[#allocation2 + $0xf8] sm:$0xff]
        %v3296 = vpack.c.bf16 %v3275, %v3268
        %v3297 = vpack.c.bf16 %v3276, %v3269
        %v3298 = vpack.c.bf16 %v3277, %v3270
        %v3299 = vpack.c.bf16 %v3278, %v3271
        %v3300 = vpack.c.bf16 %v3279, %v3272
        %v3301 = vpack.c.bf16 %v3280, %v3273
        %v3302 = vpack.c.bf16 %v3281, %v3274
        %v3303 = vpack.c.bf16 %v3289, %v3282
        %v3304 = vpack.c.bf16 %v3290, %v3283
        %v3305 = vpack.c.bf16 %v3291, %v3284
        %v3306 = vpack.c.bf16 %v3292, %v3285
        %v3307 = vpack.c.bf16 %v3293, %v3286
        %v3308 = vpack.c.bf16 %v3294, %v3287
        %v3309 = vpack.c.bf16 %v3295, %v3288
        %s3310 = scalar_lea.vmem %s975, 96
        %v3311 = vld [vmem:[%s3310] sm:$0xf]
        %v3312 = vld [vmem:[%s3310 + $0x4] sm:$0xf]
        %v3313 = vld [vmem:[%s3310 + $0x8] sm:$0xf]
        %v3314 = vld [vmem:[%s3310 + $0xc] sm:$0xf]
        %s3315 = scalar_lea.vmem %s975, 112
        %v3316 = vld [vmem:[%s3315] sm:$0xf]
        %v3317 = vld [vmem:[%s3315 + $0x4] sm:$0xf]
        %v3318 = vld [vmem:[%s3315 + $0x8] sm:$0xf]
        %v3319 = vld [vmem:[%s3315 + $0xc] sm:$0xf]
        %v3324 = vunpack.c.l.b16 %v3316
        %v3325 = vunpack.c.l.b16 %v3317
        %v3326 = vunpack.c.l.b16 %v3318
        %v3327 = vunpack.c.l.b16 %v3319
        %v3328 = vpack.c.b16 %v3325, %v3324
        %v3329 = vpack.c.b16 %v3327, %v3326
        %v3331 = vsel %vm1404, %v3328, 0
        %v3334 = vsel %vm1404, %v3329, 0
        %3336 = vmatpush.bf16.msra.mxu0 0
        %3337 = vmatpush.bf16.msra.mxu0 0
        %3338 = vmatpush.bf16.msra.mxu0 0
        %3339 = vmatpush.bf16.msra.mxu0 0
        %3340 = vmatpush.bf16.msra.mxu0 0
        %3341 = vmatpush.bf16.msra.mxu0 0
        %3342 = vmatpush.bf16.msra.mxu0 %v3262
        %3343 = vmatpush.bf16.msra.mxu0 %v3255
        %3344 = vmatmul.bf16.gmra.mxu0 %v3331
        %v3345 = vpop.f32.mrf.mxu0
        %v3346 = vadd.f32 0.0, %v3345
        %v3347 = vpop.f32.mrf.mxu0
        %v3348 = vadd.f32 0.0, %v3347
        %3349 = vmatmul.bf16.gmra.mxu0 %v3334
        %v3350 = vpop.f32.mrf.mxu0
        %v3351 = vadd.f32 0.0, %v3350
        %v3352 = vpop.f32.mrf.mxu0
        %v3353 = vadd.f32 0.0, %v3352
        %3354 = vdwg.mxu0
        %3355 = vmatpush.bf16.msra.mxu0 0
        %3356 = vmatpush.bf16.msra.mxu0 0
        %3357 = vmatpush.bf16.msra.mxu0 0
        %3358 = vmatpush.bf16.msra.mxu0 0
        %3359 = vmatpush.bf16.msra.mxu0 0
        %3360 = vmatpush.bf16.msra.mxu0 0
        %3361 = vmatpush.bf16.msra.mxu0 %v3263
        %3362 = vmatpush.bf16.msra.mxu0 %v3256
        %3363 = vmatmul.bf16.gmra.mxu0 %v3331
        %v3364 = vpop.f32.mrf.mxu0
        %v3365 = vadd.f32 0.0, %v3364
        %v3366 = vpop.f32.mrf.mxu0
        %v3367 = vadd.f32 0.0, %v3366
        %3368 = vmatmul.bf16.gmra.mxu0 %v3334
        %v3369 = vpop.f32.mrf.mxu0
        %v3370 = vadd.f32 0.0, %v3369
        %v3371 = vpop.f32.mrf.mxu0
        %v3372 = vadd.f32 0.0, %v3371
        %3373 = vdwg.mxu0
        %3374 = vmatpush.bf16.msra.mxu0 0
        %3375 = vmatpush.bf16.msra.mxu0 0
        %3376 = vmatpush.bf16.msra.mxu0 0
        %3377 = vmatpush.bf16.msra.mxu0 0
        %3378 = vmatpush.bf16.msra.mxu0 0
        %3379 = vmatpush.bf16.msra.mxu0 0
        %3380 = vmatpush.bf16.msra.mxu0 %v3264
        %3381 = vmatpush.bf16.msra.mxu0 %v3257
        %3382 = vmatmul.bf16.gmra.mxu0 %v3331
        %v3383 = vpop.f32.mrf.mxu0
        %v3384 = vadd.f32 0.0, %v3383
        %v3385 = vpop.f32.mrf.mxu0
        %v3386 = vadd.f32 0.0, %v3385
        %3387 = vmatmul.bf16.gmra.mxu0 %v3334
        %v3388 = vpop.f32.mrf.mxu0
        %v3389 = vadd.f32 0.0, %v3388
        %v3390 = vpop.f32.mrf.mxu0
        %v3391 = vadd.f32 0.0, %v3390
        %3392 = vdwg.mxu0
        %3393 = vmatpush.bf16.msra.mxu0 0
        %3394 = vmatpush.bf16.msra.mxu0 0
        %3395 = vmatpush.bf16.msra.mxu0 0
        %3396 = vmatpush.bf16.msra.mxu0 0
        %3397 = vmatpush.bf16.msra.mxu0 0
        %3398 = vmatpush.bf16.msra.mxu0 0
        %3399 = vmatpush.bf16.msra.mxu0 %v3265
        %3400 = vmatpush.bf16.msra.mxu0 %v3258
        %3401 = vmatmul.bf16.gmra.mxu0 %v3331
        %v3402 = vpop.f32.mrf.mxu0
        %v3403 = vadd.f32 0.0, %v3402
        %v3404 = vpop.f32.mrf.mxu0
        %v3405 = vadd.f32 0.0, %v3404
        %3406 = vmatmul.bf16.gmra.mxu0 %v3334
        %v3407 = vpop.f32.mrf.mxu0
        %v3408 = vadd.f32 0.0, %v3407
        %v3409 = vpop.f32.mrf.mxu0
        %v3410 = vadd.f32 0.0, %v3409
        %3411 = vdwg.mxu0
        %3412 = vmatpush.bf16.msra.mxu0 0
        %3413 = vmatpush.bf16.msra.mxu0 0
        %3414 = vmatpush.bf16.msra.mxu0 0
        %3415 = vmatpush.bf16.msra.mxu0 0
        %3416 = vmatpush.bf16.msra.mxu0 0
        %3417 = vmatpush.bf16.msra.mxu0 0
        %3418 = vmatpush.bf16.msra.mxu0 %v3266
        %3419 = vmatpush.bf16.msra.mxu0 %v3259
        %3420 = vmatmul.bf16.gmra.mxu0 %v3331
        %v3421 = vpop.f32.mrf.mxu0
        %v3422 = vadd.f32 0.0, %v3421
        %v3423 = vpop.f32.mrf.mxu0
        %v3424 = vadd.f32 0.0, %v3423
        %3425 = vmatmul.bf16.gmra.mxu0 %v3334
        %v3426 = vpop.f32.mrf.mxu0
        %v3427 = vadd.f32 0.0, %v3426
        %v3428 = vpop.f32.mrf.mxu0
        %v3429 = vadd.f32 0.0, %v3428
        %3430 = vdwg.mxu0
        %3431 = vmatpush.bf16.msra.mxu0 0
        %3432 = vmatpush.bf16.msra.mxu0 0
        %3433 = vmatpush.bf16.msra.mxu0 0
        %3434 = vmatpush.bf16.msra.mxu0 0
        %3435 = vmatpush.bf16.msra.mxu0 0
        %3436 = vmatpush.bf16.msra.mxu0 0
        %3437 = vmatpush.bf16.msra.mxu0 %v3267
        %3438 = vmatpush.bf16.msra.mxu0 %v3260
        %3439 = vmatmul.bf16.gmra.mxu0 %v3331
        %v3440 = vpop.f32.mrf.mxu0
        %v3441 = vadd.f32 0.0, %v3440
        %v3442 = vpop.f32.mrf.mxu0
        %v3443 = vadd.f32 0.0, %v3442
        %3444 = vmatmul.bf16.gmra.mxu0 %v3334
        %v3445 = vpop.f32.mrf.mxu0
        %v3446 = vadd.f32 0.0, %v3445
        %v3447 = vpop.f32.mrf.mxu0
        %v3448 = vadd.f32 0.0, %v3447
        %3449 = vdwg.mxu0
        %v3454 = vunpack.c.l.b16 %v3311
        %v3455 = vunpack.c.l.b16 %v3312
        %v3456 = vunpack.c.l.b16 %v3313
        %v3457 = vunpack.c.l.b16 %v3314
        %v3458 = vpack.c.b16 %v3455, %v3454
        %v3459 = vpack.c.b16 %v3457, %v3456
        %3474 = vrot.lane.b32.xlu0 %v3254, 3
        %v3475 = vpop.permute.xlu0 %3474
        %3476 = vrot.lane.b32.xlu0 %v3255, 3
        %v3477 = vpop.permute.xlu0 %3476
        %3478 = vrot.lane.b32.xlu0 %v3256, 3
        %v3479 = vpop.permute.xlu0 %3478
        %3480 = vrot.lane.b32.xlu0 %v3257, 3
        %v3481 = vpop.permute.xlu0 %3480
        %3482 = vrot.lane.b32.xlu0 %v3258, 3
        %v3483 = vpop.permute.xlu0 %3482
        %3484 = vrot.lane.b32.xlu0 %v3259, 3
        %v3485 = vpop.permute.xlu0 %3484
        %3486 = vrot.lane.b32.xlu0 %v3260, 3
        %v3487 = vpop.permute.xlu0 %3486
        %3488 = vrot.lane.b32.xlu0 %v3261, 3
        %v3489 = vpop.permute.xlu0 %3488
        %3490 = vrot.lane.b32.xlu0 %v3262, 3
        %v3491 = vpop.permute.xlu0 %3490
        %3492 = vrot.lane.b32.xlu0 %v3263, 3
        %v3493 = vpop.permute.xlu0 %3492
        %3494 = vrot.lane.b32.xlu0 %v3264, 3
        %v3495 = vpop.permute.xlu0 %3494
        %3496 = vrot.lane.b32.xlu0 %v3265, 3
        %v3497 = vpop.permute.xlu0 %3496
        %3498 = vrot.lane.b32.xlu0 %v3266, 3
        %v3499 = vpop.permute.xlu0 %3498
        %3500 = vrot.lane.b32.xlu0 %v3267, 3
        %v3501 = vpop.permute.xlu0 %3500
        %vm3502 = vcmask 23552
        %v3503 = vsel %vm3502, %v3475, %v3477
        %v3504 = vsel %vm3502, %v3477, %v3479
        %v3505 = vsel %vm3502, %v3479, %v3481
        %v3506 = vsel %vm3502, %v3481, %v3483
        %v3507 = vsel %vm3502, %v3483, %v3485
        %v3508 = vsel %vm3502, %v3485, %v3487
        %v3509 = vsel %vm3502, %v3489, %v3491
        %v3510 = vsel %vm3502, %v3491, %v3493
        %v3511 = vsel %vm3502, %v3493, %v3495
        %v3512 = vsel %vm3502, %v3495, %v3497
        %v3513 = vsel %vm3502, %v3497, %v3499
        %v3514 = vsel %vm3502, %v3499, %v3501
        %v3528 = vsel %vm1404, %v3458, 0
        %v3531 = vsel %vm1404, %v3459, 0
        %3533 = vmatpush.bf16.msra.mxu0 0
        %3534 = vmatpush.bf16.msra.mxu0 0
        %3535 = vmatpush.bf16.msra.mxu0 0
        %3536 = vmatpush.bf16.msra.mxu0 0
        %3537 = vmatpush.bf16.msra.mxu0 0
        %3538 = vmatpush.bf16.msra.mxu0 0
        %3539 = vmatpush.bf16.msra.mxu0 %v3509
        %3540 = vmatpush.bf16.msra.mxu0 %v3503
        %3541 = vmatmul.bf16.gmra.mxu0 %v3528
        %v3542 = vpop.f32.mrf.mxu0
        %v3543 = vadd.f32 %v3346, %v3542
        %v3544 = vpop.f32.mrf.mxu0
        %v3545 = vadd.f32 %v3348, %v3544
        %3546 = vmatmul.bf16.gmra.mxu0 %v3531
        %v3547 = vpop.f32.mrf.mxu0
        %v3548 = vadd.f32 %v3351, %v3547
        %v3549 = vpop.f32.mrf.mxu0
        %v3550 = vadd.f32 %v3353, %v3549
        %3551 = vdwg.mxu0
        %3552 = vmatpush.bf16.msra.mxu0 0
        %3553 = vmatpush.bf16.msra.mxu0 0
        %3554 = vmatpush.bf16.msra.mxu0 0
        %3555 = vmatpush.bf16.msra.mxu0 0
        %3556 = vmatpush.bf16.msra.mxu0 0
        %3557 = vmatpush.bf16.msra.mxu0 0
        %3558 = vmatpush.bf16.msra.mxu0 %v3510
        %3559 = vmatpush.bf16.msra.mxu0 %v3504
        %3560 = vmatmul.bf16.gmra.mxu0 %v3528
        %v3561 = vpop.f32.mrf.mxu0
        %v3562 = vadd.f32 %v3365, %v3561
        %v3563 = vpop.f32.mrf.mxu0
        %v3564 = vadd.f32 %v3367, %v3563
        %3565 = vmatmul.bf16.gmra.mxu0 %v3531
        %v3566 = vpop.f32.mrf.mxu0
        %v3567 = vadd.f32 %v3370, %v3566
        %v3568 = vpop.f32.mrf.mxu0
        %v3569 = vadd.f32 %v3372, %v3568
        %3570 = vdwg.mxu0
        %3571 = vmatpush.bf16.msra.mxu0 0
        %3572 = vmatpush.bf16.msra.mxu0 0
        %3573 = vmatpush.bf16.msra.mxu0 0
        %3574 = vmatpush.bf16.msra.mxu0 0
        %3575 = vmatpush.bf16.msra.mxu0 0
        %3576 = vmatpush.bf16.msra.mxu0 0
        %3577 = vmatpush.bf16.msra.mxu0 %v3511
        %3578 = vmatpush.bf16.msra.mxu0 %v3505
        %3579 = vmatmul.bf16.gmra.mxu0 %v3528
        %v3580 = vpop.f32.mrf.mxu0
        %v3581 = vadd.f32 %v3384, %v3580
        %v3582 = vpop.f32.mrf.mxu0
        %v3583 = vadd.f32 %v3386, %v3582
        %3584 = vmatmul.bf16.gmra.mxu0 %v3531
        %v3585 = vpop.f32.mrf.mxu0
        %v3586 = vadd.f32 %v3389, %v3585
        %v3587 = vpop.f32.mrf.mxu0
        %v3588 = vadd.f32 %v3391, %v3587
        %3589 = vdwg.mxu0
        %3590 = vmatpush.bf16.msra.mxu0 0
        %3591 = vmatpush.bf16.msra.mxu0 0
        %3592 = vmatpush.bf16.msra.mxu0 0
        %3593 = vmatpush.bf16.msra.mxu0 0
        %3594 = vmatpush.bf16.msra.mxu0 0
        %3595 = vmatpush.bf16.msra.mxu0 0
        %3596 = vmatpush.bf16.msra.mxu0 %v3512
        %3597 = vmatpush.bf16.msra.mxu0 %v3506
        %3598 = vmatmul.bf16.gmra.mxu0 %v3528
        %v3599 = vpop.f32.mrf.mxu0
        %v3600 = vadd.f32 %v3403, %v3599
        %v3601 = vpop.f32.mrf.mxu0
        %v3602 = vadd.f32 %v3405, %v3601
        %3603 = vmatmul.bf16.gmra.mxu0 %v3531
        %v3604 = vpop.f32.mrf.mxu0
        %v3605 = vadd.f32 %v3408, %v3604
        %v3606 = vpop.f32.mrf.mxu0
        %v3607 = vadd.f32 %v3410, %v3606
        %3608 = vdwg.mxu0
        %3609 = vmatpush.bf16.msra.mxu0 0
        %3610 = vmatpush.bf16.msra.mxu0 0
        %3611 = vmatpush.bf16.msra.mxu0 0
        %3612 = vmatpush.bf16.msra.mxu0 0
        %3613 = vmatpush.bf16.msra.mxu0 0
        %3614 = vmatpush.bf16.msra.mxu0 0
        %3615 = vmatpush.bf16.msra.mxu0 %v3513
        %3616 = vmatpush.bf16.msra.mxu0 %v3507
        %3617 = vmatmul.bf16.gmra.mxu0 %v3528
        %v3618 = vpop.f32.mrf.mxu0
        %v3619 = vadd.f32 %v3422, %v3618
        %v3620 = vpop.f32.mrf.mxu0
        %v3621 = vadd.f32 %v3424, %v3620
        %3622 = vmatmul.bf16.gmra.mxu0 %v3531
        %v3623 = vpop.f32.mrf.mxu0
        %v3624 = vadd.f32 %v3427, %v3623
        %v3625 = vpop.f32.mrf.mxu0
        %v3626 = vadd.f32 %v3429, %v3625
        %3627 = vdwg.mxu0
        %3628 = vmatpush.bf16.msra.mxu0 0
        %3629 = vmatpush.bf16.msra.mxu0 0
        %3630 = vmatpush.bf16.msra.mxu0 0
        %3631 = vmatpush.bf16.msra.mxu0 0
        %3632 = vmatpush.bf16.msra.mxu0 0
        %3633 = vmatpush.bf16.msra.mxu0 0
        %3634 = vmatpush.bf16.msra.mxu0 %v3514
        %3635 = vmatpush.bf16.msra.mxu0 %v3508
        %3636 = vmatmul.bf16.gmra.mxu0 %v3528
        %v3637 = vpop.f32.mrf.mxu0
        %v3638 = vadd.f32 %v3441, %v3637
        %v3639 = vpop.f32.mrf.mxu0
        %v3640 = vadd.f32 %v3443, %v3639
        %3641 = vmatmul.bf16.gmra.mxu0 %v3531
        %v3642 = vpop.f32.mrf.mxu0
        %v3643 = vadd.f32 %v3446, %v3642
        %v3644 = vpop.f32.mrf.mxu0
        %v3645 = vadd.f32 %v3448, %v3644
        %3646 = vdwg.mxu0
        %s3647 = scalar_lea.vmem %s975, 128
        %v3648 = vld [vmem:[%s3647] sm:$0xf]
        %v3649 = vld [vmem:[%s3647 + $0x4] sm:$0xf]
        %v3650 = vld [vmem:[%s3647 + $0x8] sm:$0xf]
        %v3651 = vld [vmem:[%s3647 + $0xc] sm:$0xf]
        %v3656 = vunpack.c.l.b16 %v3648
        %v3657 = vunpack.c.l.b16 %v3649
        %v3658 = vunpack.c.l.b16 %v3650
        %v3659 = vunpack.c.l.b16 %v3651
        %v3660 = vpack.c.b16 %v3657, %v3656
        %v3661 = vpack.c.b16 %v3659, %v3658
        %3676 = vrot.lane.b32.xlu0 %v3296, 125
        %v3677 = vpop.permute.xlu0 %3676
        %3678 = vrot.lane.b32.xlu0 %v3297, 125
        %v3679 = vpop.permute.xlu0 %3678
        %3680 = vrot.lane.b32.xlu0 %v3298, 125
        %v3681 = vpop.permute.xlu0 %3680
        %3682 = vrot.lane.b32.xlu0 %v3299, 125
        %v3683 = vpop.permute.xlu0 %3682
        %3684 = vrot.lane.b32.xlu0 %v3300, 125
        %v3685 = vpop.permute.xlu0 %3684
        %3686 = vrot.lane.b32.xlu0 %v3301, 125
        %v3687 = vpop.permute.xlu0 %3686
        %3688 = vrot.lane.b32.xlu0 %v3302, 125
        %v3689 = vpop.permute.xlu0 %3688
        %3690 = vrot.lane.b32.xlu0 %v3303, 125
        %v3691 = vpop.permute.xlu0 %3690
        %3692 = vrot.lane.b32.xlu0 %v3304, 125
        %v3693 = vpop.permute.xlu0 %3692
        %3694 = vrot.lane.b32.xlu0 %v3305, 125
        %v3695 = vpop.permute.xlu0 %3694
        %3696 = vrot.lane.b32.xlu0 %v3306, 125
        %v3697 = vpop.permute.xlu0 %3696
        %3698 = vrot.lane.b32.xlu0 %v3307, 125
        %v3699 = vpop.permute.xlu0 %3698
        %3700 = vrot.lane.b32.xlu0 %v3308, 125
        %v3701 = vpop.permute.xlu0 %3700
        %3702 = vrot.lane.b32.xlu0 %v3309, 125
        %v3703 = vpop.permute.xlu0 %3702
        %vm3704 = vcmask 1022976
        %v3705 = vsel %vm3704, %v3677, %v3679
        %v3706 = vsel %vm3704, %v3679, %v3681
        %v3707 = vsel %vm3704, %v3681, %v3683
        %v3708 = vsel %vm3704, %v3683, %v3685
        %v3709 = vsel %vm3704, %v3685, %v3687
        %v3710 = vsel %vm3704, %v3687, %v3689
        %v3711 = vsel %vm3704, %v3691, %v3693
        %v3712 = vsel %vm3704, %v3693, %v3695
        %v3713 = vsel %vm3704, %v3695, %v3697
        %v3714 = vsel %vm3704, %v3697, %v3699
        %v3715 = vsel %vm3704, %v3699, %v3701
        %v3716 = vsel %vm3704, %v3701, %v3703
        %v3730 = vsel %vm1404, %v3660, 0
        %v3733 = vsel %vm1404, %v3661, 0
        %3735 = vmatpush.bf16.msra.mxu0 0
        %3736 = vmatpush.bf16.msra.mxu0 0
        %3737 = vmatpush.bf16.msra.mxu0 0
        %3738 = vmatpush.bf16.msra.mxu0 0
        %3739 = vmatpush.bf16.msra.mxu0 0
        %3740 = vmatpush.bf16.msra.mxu0 0
        %3741 = vmatpush.bf16.msra.mxu0 %v3711
        %3742 = vmatpush.bf16.msra.mxu0 %v3705
        %3743 = vmatmul.bf16.gmra.mxu0 %v3730
        %v3744 = vpop.f32.mrf.mxu0
        %v3745 = vadd.f32 0.0, %v3744
        %v3746 = vpop.f32.mrf.mxu0
        %v3747 = vadd.f32 0.0, %v3746
        %3748 = vmatmul.bf16.gmra.mxu0 %v3733
        %v3749 = vpop.f32.mrf.mxu0
        %v3750 = vadd.f32 0.0, %v3749
        %v3751 = vpop.f32.mrf.mxu0
        %v3752 = vadd.f32 0.0, %v3751
        %3753 = vdwg.mxu0
        %3754 = vmatpush.bf16.msra.mxu0 0
        %3755 = vmatpush.bf16.msra.mxu0 0
        %3756 = vmatpush.bf16.msra.mxu0 0
        %3757 = vmatpush.bf16.msra.mxu0 0
        %3758 = vmatpush.bf16.msra.mxu0 0
        %3759 = vmatpush.bf16.msra.mxu0 0
        %3760 = vmatpush.bf16.msra.mxu0 %v3712
        %3761 = vmatpush.bf16.msra.mxu0 %v3706
        %3762 = vmatmul.bf16.gmra.mxu0 %v3730
        %v3763 = vpop.f32.mrf.mxu0
        %v3764 = vadd.f32 0.0, %v3763
        %v3765 = vpop.f32.mrf.mxu0
        %v3766 = vadd.f32 0.0, %v3765
        %3767 = vmatmul.bf16.gmra.mxu0 %v3733
        %v3768 = vpop.f32.mrf.mxu0
        %v3769 = vadd.f32 0.0, %v3768
        %v3770 = vpop.f32.mrf.mxu0
        %v3771 = vadd.f32 0.0, %v3770
        %3772 = vdwg.mxu0
        %3773 = vmatpush.bf16.msra.mxu0 0
        %3774 = vmatpush.bf16.msra.mxu0 0
        %3775 = vmatpush.bf16.msra.mxu0 0
        %3776 = vmatpush.bf16.msra.mxu0 0
        %3777 = vmatpush.bf16.msra.mxu0 0
        %3778 = vmatpush.bf16.msra.mxu0 0
        %3779 = vmatpush.bf16.msra.mxu0 %v3713
        %3780 = vmatpush.bf16.msra.mxu0 %v3707
        %3781 = vmatmul.bf16.gmra.mxu0 %v3730
        %v3782 = vpop.f32.mrf.mxu0
        %v3783 = vadd.f32 0.0, %v3782
        %v3784 = vpop.f32.mrf.mxu0
        %v3785 = vadd.f32 0.0, %v3784
        %3786 = vmatmul.bf16.gmra.mxu0 %v3733
        %v3787 = vpop.f32.mrf.mxu0
        %v3788 = vadd.f32 0.0, %v3787
        %v3789 = vpop.f32.mrf.mxu0
        %v3790 = vadd.f32 0.0, %v3789
        %3791 = vdwg.mxu0
        %3792 = vmatpush.bf16.msra.mxu0 0
        %3793 = vmatpush.bf16.msra.mxu0 0
        %3794 = vmatpush.bf16.msra.mxu0 0
        %3795 = vmatpush.bf16.msra.mxu0 0
        %3796 = vmatpush.bf16.msra.mxu0 0
        %3797 = vmatpush.bf16.msra.mxu0 0
        %3798 = vmatpush.bf16.msra.mxu0 %v3714
        %3799 = vmatpush.bf16.msra.mxu0 %v3708
        %3800 = vmatmul.bf16.gmra.mxu0 %v3730
        %v3801 = vpop.f32.mrf.mxu0
        %v3802 = vadd.f32 0.0, %v3801
        %v3803 = vpop.f32.mrf.mxu0
        %v3804 = vadd.f32 0.0, %v3803
        %3805 = vmatmul.bf16.gmra.mxu0 %v3733
        %v3806 = vpop.f32.mrf.mxu0
        %v3807 = vadd.f32 0.0, %v3806
        %v3808 = vpop.f32.mrf.mxu0
        %v3809 = vadd.f32 0.0, %v3808
        %3810 = vdwg.mxu0
        %3811 = vmatpush.bf16.msra.mxu0 0
        %3812 = vmatpush.bf16.msra.mxu0 0
        %3813 = vmatpush.bf16.msra.mxu0 0
        %3814 = vmatpush.bf16.msra.mxu0 0
        %3815 = vmatpush.bf16.msra.mxu0 0
        %3816 = vmatpush.bf16.msra.mxu0 0
        %3817 = vmatpush.bf16.msra.mxu0 %v3715
        %3818 = vmatpush.bf16.msra.mxu0 %v3709
        %3819 = vmatmul.bf16.gmra.mxu0 %v3730
        %v3820 = vpop.f32.mrf.mxu0
        %v3821 = vadd.f32 0.0, %v3820
        %v3822 = vpop.f32.mrf.mxu0
        %v3823 = vadd.f32 0.0, %v3822
        %3824 = vmatmul.bf16.gmra.mxu0 %v3733
        %v3825 = vpop.f32.mrf.mxu0
        %v3826 = vadd.f32 0.0, %v3825
        %v3827 = vpop.f32.mrf.mxu0
        %v3828 = vadd.f32 0.0, %v3827
        %3829 = vdwg.mxu0
        %3830 = vmatpush.bf16.msra.mxu0 0
        %3831 = vmatpush.bf16.msra.mxu0 0
        %3832 = vmatpush.bf16.msra.mxu0 0
        %3833 = vmatpush.bf16.msra.mxu0 0
        %3834 = vmatpush.bf16.msra.mxu0 0
        %3835 = vmatpush.bf16.msra.mxu0 0
        %3836 = vmatpush.bf16.msra.mxu0 %v3716
        %3837 = vmatpush.bf16.msra.mxu0 %v3710
        %3838 = vmatmul.bf16.gmra.mxu0 %v3730
        %v3839 = vpop.f32.mrf.mxu0
        %v3840 = vadd.f32 0.0, %v3839
        %v3841 = vpop.f32.mrf.mxu0
        %v3842 = vadd.f32 0.0, %v3841
        %3843 = vmatmul.bf16.gmra.mxu0 %v3733
        %v3844 = vpop.f32.mrf.mxu0
        %v3845 = vadd.f32 0.0, %v3844
        %v3846 = vpop.f32.mrf.mxu0
        %v3847 = vadd.f32 0.0, %v3846
        %3848 = vdwg.mxu0
        %v3849 = vadd.f32 %v3543, %v3745
        %v3850 = vadd.f32 %v3562, %v3764
        %v3851 = vadd.f32 %v3581, %v3783
        %v3852 = vadd.f32 %v3600, %v3802
        %v3853 = vadd.f32 %v3619, %v3821
        %v3854 = vadd.f32 %v3638, %v3840
        %v3855 = vadd.f32 %v3545, %v3747
        %v3856 = vadd.f32 %v3564, %v3766
        %v3857 = vadd.f32 %v3583, %v3785
        %v3858 = vadd.f32 %v3602, %v3804
        %v3859 = vadd.f32 %v3621, %v3823
        %v3860 = vadd.f32 %v3640, %v3842
        %v3861 = vadd.f32 %v3548, %v3750
        %v3862 = vadd.f32 %v3567, %v3769
        %v3863 = vadd.f32 %v3586, %v3788
        %v3864 = vadd.f32 %v3605, %v3807
        %v3865 = vadd.f32 %v3624, %v3826
        %v3866 = vadd.f32 %v3643, %v3845
        %v3867 = vadd.f32 %v3550, %v3752
        %v3868 = vadd.f32 %v3569, %v3771
        %v3869 = vadd.f32 %v3588, %v3790
        %v3870 = vadd.f32 %v3607, %v3809
        %v3871 = vadd.f32 %v3626, %v3828
        %v3872 = vadd.f32 %v3645, %v3847
        %s3873 = scalar_lea.vmem %s980, 64
        %v3874 = vld [vmem:[%s3873] sm:$0xff]
        %v3875 = vld [vmem:[%s3873 + $0x8] sm:$0xff]
        %v3876 = vld [vmem:[%s3873 + $0x10] sm:$0xff]
        %v3877 = vld [vmem:[%s3873 + $0x18] sm:$0xff]
        %3879 = vset.pattern.permute.xlu0 0
        %3880 = vperm.xlu0 %3879, %v3874
        %v3881 = vpop.permute.xlu0 %3880
        %3884 = vset.pattern.permute.xlu0 0
        %3885 = vperm.xlu0 %3884, %v3875
        %v3886 = vpop.permute.xlu0 %3885
        %3889 = vset.pattern.permute.xlu0 0
        %3890 = vperm.xlu0 %3889, %v3876
        %v3891 = vpop.permute.xlu0 %3890
        %3894 = vset.pattern.permute.xlu0 0
        %3895 = vperm.xlu0 %3894, %v3877
        %v3896 = vpop.permute.xlu0 %3895
        %v3898 = vadd.f32 %v3849, %v3881
        %v3899 = vadd.f32 %v3850, %v3881
        %v3900 = vadd.f32 %v3851, %v3881
        %v3901 = vadd.f32 %v3852, %v3881
        %v3902 = vadd.f32 %v3853, %v3881
        %v3903 = vadd.f32 %v3854, %v3881
        %v3904 = vadd.f32 %v3855, %v3886
        %v3905 = vadd.f32 %v3856, %v3886
        %v3906 = vadd.f32 %v3857, %v3886
        %v3907 = vadd.f32 %v3858, %v3886
        %v3908 = vadd.f32 %v3859, %v3886
        %v3909 = vadd.f32 %v3860, %v3886
        %v3910 = vadd.f32 %v3861, %v3891
        %v3911 = vadd.f32 %v3862, %v3891
        %v3912 = vadd.f32 %v3863, %v3891
        %v3913 = vadd.f32 %v3864, %v3891
        %v3914 = vadd.f32 %v3865, %v3891
        %v3915 = vadd.f32 %v3866, %v3891
        %v3916 = vadd.f32 %v3867, %v3896
        %v3917 = vadd.f32 %v3868, %v3896
        %v3918 = vadd.f32 %v3869, %v3896
        %v3919 = vadd.f32 %v3870, %v3896
        %v3920 = vadd.f32 %v3871, %v3896
        %v3921 = vadd.f32 %v3872, %v3896
        %v3922 = vmax.f32 %v3898, 0.0
        %v3923 = vmax.f32 %v3899, 0.0
        %v3924 = vmax.f32 %v3900, 0.0
        %v3925 = vmax.f32 %v3901, 0.0
        %v3926 = vmax.f32 %v3902, 0.0
        %v3927 = vmax.f32 %v3903, 0.0
        %v3928 = vmax.f32 %v3904, 0.0
        %v3929 = vmax.f32 %v3905, 0.0
        %v3930 = vmax.f32 %v3906, 0.0
        %v3931 = vmax.f32 %v3907, 0.0
        %v3932 = vmax.f32 %v3908, 0.0
        %v3933 = vmax.f32 %v3909, 0.0
        %v3934 = vmax.f32 %v3910, 0.0
        %v3935 = vmax.f32 %v3911, 0.0
        %v3936 = vmax.f32 %v3912, 0.0
        %v3937 = vmax.f32 %v3913, 0.0
        %v3938 = vmax.f32 %v3914, 0.0
        %v3939 = vmax.f32 %v3915, 0.0
        %v3940 = vmax.f32 %v3916, 0.0
        %v3941 = vmax.f32 %v3917, 0.0
        %v3942 = vmax.f32 %v3918, 0.0
        %v3943 = vmax.f32 %v3919, 0.0
        %v3944 = vmax.f32 %v3920, 0.0
        %v3945 = vmax.f32 %v3921, 0.0
        %v3946 = vpack.c.bf16 %v3928, %v3922
        %v3947 = vpack.c.bf16 %v3929, %v3923
        %v3948 = vpack.c.bf16 %v3930, %v3924
        %v3949 = vpack.c.bf16 %v3931, %v3925
        %v3950 = vpack.c.bf16 %v3932, %v3926
        %v3951 = vpack.c.bf16 %v3933, %v3927
        %v3952 = vpack.c.bf16 %v3940, %v3934
        %v3953 = vpack.c.bf16 %v3941, %v3935
        %v3954 = vpack.c.bf16 %v3942, %v3936
        %v3955 = vpack.c.bf16 %v3943, %v3937
        %v3956 = vpack.c.bf16 %v3944, %v3938
        %v3957 = vpack.c.bf16 %v3945, %v3939
        %s3958 = scalar_lea.vmem %s985, 32
        %v3959 = vld [vmem:[%s3958] sm:$0xf]
        %v3960 = vld [vmem:[%s3958 + $0x4] sm:$0xf]
        %v3961 = vld [vmem:[%s3958 + $0x8] sm:$0xf]
        %v3962 = vld [vmem:[%s3958 + $0xc] sm:$0xf]
        %s3963 = scalar_lea.vmem %s990, 64
        %v3964 = vld [vmem:[%s3963] sm:$0xff]
        %v3965 = vld [vmem:[%s3963 + $0x8] sm:$0xff]
        %v3966 = vld [vmem:[%s3963 + $0x10] sm:$0xff]
        %v3967 = vld [vmem:[%s3963 + $0x18] sm:$0xff]
        %3969 = vset.pattern.permute.xlu0 0
        %3970 = vperm.xlu0 %3969, %v3964
        %v3971 = vpop.permute.xlu0 %3970
        %3974 = vset.pattern.permute.xlu0 0
        %3975 = vperm.xlu0 %3974, %v3965
        %v3976 = vpop.permute.xlu0 %3975
        %3979 = vset.pattern.permute.xlu0 0
        %3980 = vperm.xlu0 %3979, %v3966
        %v3981 = vpop.permute.xlu0 %3980
        %3984 = vset.pattern.permute.xlu0 0
        %3985 = vperm.xlu0 %3984, %v3967
        %v3986 = vpop.permute.xlu0 %3985
        %v3992 = vunpack.c.l.b16 %v3959
        %v3993 = vunpack.c.l.b16 %v3960
        %v3994 = vunpack.c.l.b16 %v3961
        %v3995 = vunpack.c.l.b16 %v3962
        %v3996 = vpack.c.b16 %v3993, %v3992
        %v3997 = vpack.c.b16 %v3995, %v3994
        %v3999 = vsel %vm1404, %v3996, 0
        %v4002 = vsel %vm1404, %v3997, 0
        %4004 = vmatpush.bf16.msra.mxu0 0
        %4005 = vmatpush.bf16.msra.mxu0 0
        %4006 = vmatpush.bf16.msra.mxu0 0
        %4007 = vmatpush.bf16.msra.mxu0 0
        %4008 = vmatpush.bf16.msra.mxu0 0
        %4009 = vmatpush.bf16.msra.mxu0 0
        %4010 = vmatpush.bf16.msra.mxu0 %v3952
        %4011 = vmatpush.bf16.msra.mxu0 %v3946
        %4012 = vmatmul.bf16.gmra.mxu0 %v3999
        %v4013 = vpop.f32.mrf.mxu0
        %v4014 = vadd.f32 %v3971, %v4013
        %v4015 = vpop.f32.mrf.mxu0
        %v4016 = vadd.f32 %v3976, %v4015
        %4017 = vmatmul.bf16.gmra.mxu0 %v4002
        %v4018 = vpop.f32.mrf.mxu0
        %v4019 = vadd.f32 %v3981, %v4018
        %v4020 = vpop.f32.mrf.mxu0
        %v4021 = vadd.f32 %v3986, %v4020
        %4022 = vdwg.mxu0
        %4023 = vmatpush.bf16.msra.mxu0 0
        %4024 = vmatpush.bf16.msra.mxu0 0
        %4025 = vmatpush.bf16.msra.mxu0 0
        %4026 = vmatpush.bf16.msra.mxu0 0
        %4027 = vmatpush.bf16.msra.mxu0 0
        %4028 = vmatpush.bf16.msra.mxu0 0
        %4029 = vmatpush.bf16.msra.mxu0 %v3953
        %4030 = vmatpush.bf16.msra.mxu0 %v3947
        %4031 = vmatmul.bf16.gmra.mxu0 %v3999
        %v4032 = vpop.f32.mrf.mxu0
        %v4033 = vadd.f32 %v3971, %v4032
        %v4034 = vpop.f32.mrf.mxu0
        %v4035 = vadd.f32 %v3976, %v4034
        %4036 = vmatmul.bf16.gmra.mxu0 %v4002
        %v4037 = vpop.f32.mrf.mxu0
        %v4038 = vadd.f32 %v3981, %v4037
        %v4039 = vpop.f32.mrf.mxu0
        %v4040 = vadd.f32 %v3986, %v4039
        %4041 = vdwg.mxu0
        %4042 = vmatpush.bf16.msra.mxu0 0
        %4043 = vmatpush.bf16.msra.mxu0 0
        %4044 = vmatpush.bf16.msra.mxu0 0
        %4045 = vmatpush.bf16.msra.mxu0 0
        %4046 = vmatpush.bf16.msra.mxu0 0
        %4047 = vmatpush.bf16.msra.mxu0 0
        %4048 = vmatpush.bf16.msra.mxu0 %v3954
        %4049 = vmatpush.bf16.msra.mxu0 %v3948
        %4050 = vmatmul.bf16.gmra.mxu0 %v3999
        %v4051 = vpop.f32.mrf.mxu0
        %v4052 = vadd.f32 %v3971, %v4051
        %v4053 = vpop.f32.mrf.mxu0
        %v4054 = vadd.f32 %v3976, %v4053
        %4055 = vmatmul.bf16.gmra.mxu0 %v4002
        %v4056 = vpop.f32.mrf.mxu0
        %v4057 = vadd.f32 %v3981, %v4056
        %v4058 = vpop.f32.mrf.mxu0
        %v4059 = vadd.f32 %v3986, %v4058
        %4060 = vdwg.mxu0
        %4061 = vmatpush.bf16.msra.mxu0 0
        %4062 = vmatpush.bf16.msra.mxu0 0
        %4063 = vmatpush.bf16.msra.mxu0 0
        %4064 = vmatpush.bf16.msra.mxu0 0
        %4065 = vmatpush.bf16.msra.mxu0 0
        %4066 = vmatpush.bf16.msra.mxu0 0
        %4067 = vmatpush.bf16.msra.mxu0 %v3955
        %4068 = vmatpush.bf16.msra.mxu0 %v3949
        %4069 = vmatmul.bf16.gmra.mxu0 %v3999
        %v4070 = vpop.f32.mrf.mxu0
        %v4071 = vadd.f32 %v3971, %v4070
        %v4072 = vpop.f32.mrf.mxu0
        %v4073 = vadd.f32 %v3976, %v4072
        %4074 = vmatmul.bf16.gmra.mxu0 %v4002
        %v4075 = vpop.f32.mrf.mxu0
        %v4076 = vadd.f32 %v3981, %v4075
        %v4077 = vpop.f32.mrf.mxu0
        %v4078 = vadd.f32 %v3986, %v4077
        %4079 = vdwg.mxu0
        %4080 = vmatpush.bf16.msra.mxu0 0
        %4081 = vmatpush.bf16.msra.mxu0 0
        %4082 = vmatpush.bf16.msra.mxu0 0
        %4083 = vmatpush.bf16.msra.mxu0 0
        %4084 = vmatpush.bf16.msra.mxu0 0
        %4085 = vmatpush.bf16.msra.mxu0 0
        %4086 = vmatpush.bf16.msra.mxu0 %v3956
        %4087 = vmatpush.bf16.msra.mxu0 %v3950
        %4088 = vmatmul.bf16.gmra.mxu0 %v3999
        %v4089 = vpop.f32.mrf.mxu0
        %v4090 = vadd.f32 %v3971, %v4089
        %v4091 = vpop.f32.mrf.mxu0
        %v4092 = vadd.f32 %v3976, %v4091
        %4093 = vmatmul.bf16.gmra.mxu0 %v4002
        %v4094 = vpop.f32.mrf.mxu0
        %v4095 = vadd.f32 %v3981, %v4094
        %v4096 = vpop.f32.mrf.mxu0
        %v4097 = vadd.f32 %v3986, %v4096
        %4098 = vdwg.mxu0
        %4099 = vmatpush.bf16.msra.mxu0 0
        %4100 = vmatpush.bf16.msra.mxu0 0
        %4101 = vmatpush.bf16.msra.mxu0 0
        %4102 = vmatpush.bf16.msra.mxu0 0
        %4103 = vmatpush.bf16.msra.mxu0 0
        %4104 = vmatpush.bf16.msra.mxu0 0
        %4105 = vmatpush.bf16.msra.mxu0 %v3957
        %4106 = vmatpush.bf16.msra.mxu0 %v3951
        %4107 = vmatmul.bf16.gmra.mxu0 %v3999
        %v4108 = vpop.f32.mrf.mxu0
        %v4109 = vadd.f32 %v3971, %v4108
        %v4110 = vpop.f32.mrf.mxu0
        %v4111 = vadd.f32 %v3976, %v4110
        %4112 = vmatmul.bf16.gmra.mxu0 %v4002
        %v4113 = vpop.f32.mrf.mxu0
        %v4114 = vadd.f32 %v3981, %v4113
        %v4115 = vpop.f32.mrf.mxu0
        %v4116 = vadd.f32 %v3986, %v4115
        %4117 = vdwg.mxu0
        %v4118 = vadd.f32 %v4014, %v3226
        %v4119 = vadd.f32 %v4033, %v3227
        %v4120 = vadd.f32 %v4052, %v3228
        %v4121 = vadd.f32 %v4071, %v3229
        %v4122 = vadd.f32 %v4090, %v3230
        %v4123 = vadd.f32 %v4109, %v3231
        %v4124 = vadd.f32 %v4016, %v3232
        %v4125 = vadd.f32 %v4035, %v3233
        %v4126 = vadd.f32 %v4054, %v3234
        %v4127 = vadd.f32 %v4073, %v3235
        %v4128 = vadd.f32 %v4092, %v3236
        %v4129 = vadd.f32 %v4111, %v3237
        %v4130 = vadd.f32 %v4019, %v3238
        %v4131 = vadd.f32 %v4038, %v3239
        %v4132 = vadd.f32 %v4057, %v3240
        %v4133 = vadd.f32 %v4076, %v3241
        %v4134 = vadd.f32 %v4095, %v3242
        %v4135 = vadd.f32 %v4114, %v3243
        %v4136 = vadd.f32 %v4021, %v3244
        %v4137 = vadd.f32 %v4040, %v3245
        %v4138 = vadd.f32 %v4059, %v3246
        %v4139 = vadd.f32 %v4078, %v3247
        %v4140 = vadd.f32 %v4097, %v3248
        %v4141 = vadd.f32 %v4116, %v3249
        %v4142 = vmul.f32 %v4118, %v1289
        %v4143 = vmul.f32 %v4119, %v1290
        %v4144 = vmul.f32 %v4120, %v1291
        %v4145 = vmul.f32 %v4121, %v1292
        %v4146 = vmul.f32 %v4122, %v1293
        %v4147 = vmul.f32 %v4123, %v1294
        %v4148 = vmul.f32 %v4124, %v1289
        %v4149 = vmul.f32 %v4125, %v1290
        %v4150 = vmul.f32 %v4126, %v1291
        %v4151 = vmul.f32 %v4127, %v1292
        %v4152 = vmul.f32 %v4128, %v1293
        %v4153 = vmul.f32 %v4129, %v1294
        %v4154 = vmul.f32 %v4130, %v1289
        %v4155 = vmul.f32 %v4131, %v1290
        %v4156 = vmul.f32 %v4132, %v1291
        %v4157 = vmul.f32 %v4133, %v1292
        %v4158 = vmul.f32 %v4134, %v1293
        %v4159 = vmul.f32 %v4135, %v1294
        %v4160 = vmul.f32 %v4136, %v1289
        %v4161 = vmul.f32 %v4137, %v1290
        %v4162 = vmul.f32 %v4138, %v1291
        %v4163 = vmul.f32 %v4139, %v1292
        %v4164 = vmul.f32 %v4140, %v1293
        %v4165 = vmul.f32 %v4141, %v1294
        %4166 = vst [vmem:[#allocation2 + $0x8] sm:$0xff] %v4142
        %4167 = vst [vmem:[#allocation2 + $0x10] sm:$0xff] %v4143
        %4168 = vst [vmem:[#allocation2 + $0x18] sm:$0xff] %v4144
        %4169 = vst [vmem:[#allocation2 + $0x20] sm:$0xff] %v4145
        %4170 = vst [vmem:[#allocation2 + $0x28] sm:$0xff] %v4146
        %4171 = vst [vmem:[#allocation2 + $0x30] sm:$0xff] %v4147
        %4172 = vst [vmem:[#allocation2 + $0x48] sm:$0xff] %v4148
        %4173 = vst [vmem:[#allocation2 + $0x50] sm:$0xff] %v4149
        %4174 = vst [vmem:[#allocation2 + $0x58] sm:$0xff] %v4150
        %4175 = vst [vmem:[#allocation2 + $0x60] sm:$0xff] %v4151
        %4176 = vst [vmem:[#allocation2 + $0x68] sm:$0xff] %v4152
        %4177 = vst [vmem:[#allocation2 + $0x70] sm:$0xff] %v4153
        %4178 = vst [vmem:[#allocation2 + $0x88] sm:$0xff] %v4154
        %4179 = vst [vmem:[#allocation2 + $0x90] sm:$0xff] %v4155
        %4180 = vst [vmem:[#allocation2 + $0x98] sm:$0xff] %v4156
        %4181 = vst [vmem:[#allocation2 + $0xa0] sm:$0xff] %v4157
        %4182 = vst [vmem:[#allocation2 + $0xa8] sm:$0xff] %v4158
        %4183 = vst [vmem:[#allocation2 + $0xb0] sm:$0xff] %v4159
        %4184 = vst [vmem:[#allocation2 + $0xc8] sm:$0xff] %v4160
        %4185 = vst [vmem:[#allocation2 + $0xd0] sm:$0xff] %v4161
        %4186 = vst [vmem:[#allocation2 + $0xd8] sm:$0xff] %v4162
        %4187 = vst [vmem:[#allocation2 + $0xe0] sm:$0xff] %v4163
        %4188 = vst [vmem:[#allocation2 + $0xe8] sm:$0xff] %v4164
        %4189 = vst [vmem:[#allocation2 + $0xf0] sm:$0xff] %v4165
        %v4190 = vld [vmem:[#allocation2 + $0x8] sm:$0xff]
        %v4191 = vld [vmem:[#allocation2 + $0x10] sm:$0xff]
        %v4192 = vld [vmem:[#allocation2 + $0x18] sm:$0xff]
        %v4193 = vld [vmem:[#allocation2 + $0x20] sm:$0xff]
        %v4194 = vld [vmem:[#allocation2 + $0x28] sm:$0xff]
        %v4195 = vld [vmem:[#allocation2 + $0x30] sm:$0xff]
        %v4196 = vld [vmem:[#allocation2 + $0x48] sm:$0xff]
        %v4197 = vld [vmem:[#allocation2 + $0x50] sm:$0xff]
        %v4198 = vld [vmem:[#allocation2 + $0x58] sm:$0xff]
        %v4199 = vld [vmem:[#allocation2 + $0x60] sm:$0xff]
        %v4200 = vld [vmem:[#allocation2 + $0x68] sm:$0xff]
        %v4201 = vld [vmem:[#allocation2 + $0x70] sm:$0xff]
        %v4202 = vld [vmem:[#allocation2 + $0x88] sm:$0xff]
        %v4203 = vld [vmem:[#allocation2 + $0x90] sm:$0xff]
        %v4204 = vld [vmem:[#allocation2 + $0x98] sm:$0xff]
        %v4205 = vld [vmem:[#allocation2 + $0xa0] sm:$0xff]
        %v4206 = vld [vmem:[#allocation2 + $0xa8] sm:$0xff]
        %v4207 = vld [vmem:[#allocation2 + $0xb0] sm:$0xff]
        %v4208 = vld [vmem:[#allocation2 + $0xc8] sm:$0xff]
        %v4209 = vld [vmem:[#allocation2 + $0xd0] sm:$0xff]
        %v4210 = vld [vmem:[#allocation2 + $0xd8] sm:$0xff]
        %v4211 = vld [vmem:[#allocation2 + $0xe0] sm:$0xff]
        %v4212 = vld [vmem:[#allocation2 + $0xe8] sm:$0xff]
        %v4213 = vld [vmem:[#allocation2 + $0xf0] sm:$0xff]
        %v4214 = vpack.c.bf16 %v4196, %v4190
        %v4215 = vpack.c.bf16 %v4197, %v4191
        %v4216 = vpack.c.bf16 %v4198, %v4192
        %v4217 = vpack.c.bf16 %v4199, %v4193
        %v4218 = vpack.c.bf16 %v4200, %v4194
        %v4219 = vpack.c.bf16 %v4201, %v4195
        %v4220 = vpack.c.bf16 %v4208, %v4202
        %v4221 = vpack.c.bf16 %v4209, %v4203
        %v4222 = vpack.c.bf16 %v4210, %v4204
        %v4223 = vpack.c.bf16 %v4211, %v4205
        %v4224 = vpack.c.bf16 %v4212, %v4206
        %v4225 = vpack.c.bf16 %v4213, %v4207
        %v4226 = vld [vmem:[%s954] sm:$0x1f]
        %v4227 = vld [vmem:[%s995] sm:$0xf]
        %v4228 = vld [vmem:[%s995 + $0x4] sm:$0xf]
        %v4229 = vld [vmem:[%s1000] sm:$0xff]
        %v4230 = vld [vmem:[%s1000 + $0x8] sm:$0xff]
        %4232 = vset.pattern.permute.xlu0 0
        %4233 = vperm.xlu0 %4232, %v4229
        %v4234 = vpop.permute.xlu0 %4233
        %4237 = vset.pattern.permute.xlu0 0
        %4238 = vperm.xlu0 %4237, %v4230
        %v4239 = vpop.permute.xlu0 %4238
        %v4243 = vunpack.c.l.b16 %v4227
        %v4244 = vunpack.c.l.b16 %v4228
        %v4245 = vpack.c.b16 %v4244, %v4243
        %4258 = vrot.lane.b32.xlu0 %v4214, 122
        %v4259 = vpop.permute.xlu0 %4258
        %4260 = vrot.lane.b32.xlu0 %v4215, 122
        %v4261 = vpop.permute.xlu0 %4260
        %4262 = vrot.lane.b32.xlu0 %v4216, 122
        %v4263 = vpop.permute.xlu0 %4262
        %4264 = vrot.lane.b32.xlu0 %v4217, 122
        %v4265 = vpop.permute.xlu0 %4264
        %4266 = vrot.lane.b32.xlu0 %v4218, 122
        %v4267 = vpop.permute.xlu0 %4266
        %4268 = vrot.lane.b32.xlu0 %v4219, 122
        %v4269 = vpop.permute.xlu0 %4268
        %4270 = vrot.lane.b32.xlu0 %v4220, 122
        %v4271 = vpop.permute.xlu0 %4270
        %4272 = vrot.lane.b32.xlu0 %v4221, 122
        %v4273 = vpop.permute.xlu0 %4272
        %4274 = vrot.lane.b32.xlu0 %v4222, 122
        %v4275 = vpop.permute.xlu0 %4274
        %4276 = vrot.lane.b32.xlu0 %v4223, 122
        %v4277 = vpop.permute.xlu0 %4276
        %4278 = vrot.lane.b32.xlu0 %v4224, 122
        %v4279 = vpop.permute.xlu0 %4278
        %4280 = vrot.lane.b32.xlu0 %v4225, 122
        %v4281 = vpop.permute.xlu0 %4280
        %vm4282 = vcmask 998400
        %v4283 = vsel %vm4282, %v4259, %v4261
        %v4284 = vsel %vm4282, %v4261, %v4263
        %v4285 = vsel %vm4282, %v4263, %v4265
        %v4286 = vsel %vm4282, %v4265, %v4267
        %v4287 = vsel %vm4282, %v4267, %v4269
        %v4288 = vsel %vm4282, %v4271, %v4273
        %v4289 = vsel %vm4282, %v4273, %v4275
        %v4290 = vsel %vm4282, %v4275, %v4277
        %v4291 = vsel %vm4282, %v4277, %v4279
        %v4292 = vsel %vm4282, %v4279, %v4281
        %v4304 = vsel %vm1404, %v4245, 0
        %4306 = vmatpush.bf16.msra.mxu0 0
        %4307 = vmatpush.bf16.msra.mxu0 0
        %4308 = vmatpush.bf16.msra.mxu0 0
        %4309 = vmatpush.bf16.msra.mxu0 0
        %4310 = vmatpush.bf16.msra.mxu0 0
        %4311 = vmatpush.bf16.msra.mxu0 0
        %4312 = vmatpush.bf16.msra.mxu0 %v4288
        %4313 = vmatpush.bf16.msra.mxu0 %v4283
        %4314 = vmatmul.bf16.gmra.mxu0 %v4304
        %v4315 = vpop.f32.mrf.mxu0
        %v4316 = vadd.f32 %v4234, %v4315
        %v4317 = vpop.f32.mrf.mxu0
        %v4318 = vadd.f32 %v4239, %v4317
        %4319 = vdwg.mxu0
        %4320 = vmatpush.bf16.msra.mxu0 0
        %4321 = vmatpush.bf16.msra.mxu0 0
        %4322 = vmatpush.bf16.msra.mxu0 0
        %4323 = vmatpush.bf16.msra.mxu0 0
        %4324 = vmatpush.bf16.msra.mxu0 0
        %4325 = vmatpush.bf16.msra.mxu0 0
        %4326 = vmatpush.bf16.msra.mxu0 %v4289
        %4327 = vmatpush.bf16.msra.mxu0 %v4284
        %4328 = vmatmul.bf16.gmra.mxu0 %v4304
        %v4329 = vpop.f32.mrf.mxu0
        %v4330 = vadd.f32 %v4234, %v4329
        %v4331 = vpop.f32.mrf.mxu0
        %v4332 = vadd.f32 %v4239, %v4331
        %4333 = vdwg.mxu0
        %4334 = vmatpush.bf16.msra.mxu0 0
        %4335 = vmatpush.bf16.msra.mxu0 0
        %4336 = vmatpush.bf16.msra.mxu0 0
        %4337 = vmatpush.bf16.msra.mxu0 0
        %4338 = vmatpush.bf16.msra.mxu0 0
        %4339 = vmatpush.bf16.msra.mxu0 0
        %4340 = vmatpush.bf16.msra.mxu0 %v4290
        %4341 = vmatpush.bf16.msra.mxu0 %v4285
        %4342 = vmatmul.bf16.gmra.mxu0 %v4304
        %v4343 = vpop.f32.mrf.mxu0
        %v4344 = vadd.f32 %v4234, %v4343
        %v4345 = vpop.f32.mrf.mxu0
        %v4346 = vadd.f32 %v4239, %v4345
        %4347 = vdwg.mxu0
        %4348 = vmatpush.bf16.msra.mxu0 0
        %4349 = vmatpush.bf16.msra.mxu0 0
        %4350 = vmatpush.bf16.msra.mxu0 0
        %4351 = vmatpush.bf16.msra.mxu0 0
        %4352 = vmatpush.bf16.msra.mxu0 0
        %4353 = vmatpush.bf16.msra.mxu0 0
        %4354 = vmatpush.bf16.msra.mxu0 %v4291
        %4355 = vmatpush.bf16.msra.mxu0 %v4286
        %4356 = vmatmul.bf16.gmra.mxu0 %v4304
        %v4357 = vpop.f32.mrf.mxu0
        %v4358 = vadd.f32 %v4234, %v4357
        %v4359 = vpop.f32.mrf.mxu0
        %v4360 = vadd.f32 %v4239, %v4359
        %4361 = vdwg.mxu0
        %4362 = vmatpush.bf16.msra.mxu0 0
        %4363 = vmatpush.bf16.msra.mxu0 0
        %4364 = vmatpush.bf16.msra.mxu0 0
        %4365 = vmatpush.bf16.msra.mxu0 0
        %4366 = vmatpush.bf16.msra.mxu0 0
        %4367 = vmatpush.bf16.msra.mxu0 0
        %4368 = vmatpush.bf16.msra.mxu0 %v4292
        %4369 = vmatpush.bf16.msra.mxu0 %v4287
        %4370 = vmatmul.bf16.gmra.mxu0 %v4304
        %v4371 = vpop.f32.mrf.mxu0
        %v4372 = vadd.f32 %v4234, %v4371
        %v4373 = vpop.f32.mrf.mxu0
        %v4374 = vadd.f32 %v4239, %v4373
        %4375 = vdwg.mxu0
        %v4377 = vperm.slane %v4226, 0
        %v4378 = vperm.slane %v4226, 1
        %v4379 = vperm.slane %v4226, 2
        %v4380 = vperm.slane %v4226, 3
        %v4381 = vperm.slane %v4226, 4
        %v4387 = vmul.f32 %v4316, %v4377
        %v4388 = vmul.f32 %v4330, %v4378
        %v4389 = vmul.f32 %v4344, %v4379
        %v4390 = vmul.f32 %v4358, %v4380
        %v4391 = vmul.f32 %v4372, %v4381
        %v4392 = vmul.f32 %v4318, %v4377
        %v4393 = vmul.f32 %v4332, %v4378
        %v4394 = vmul.f32 %v4346, %v4379
        %v4395 = vmul.f32 %v4360, %v4380
        %v4396 = vmul.f32 %v4374, %v4381
        %v4397 = vld [vmem:[%s1005] sm:$0xf]
        %v4398 = vld [vmem:[%s1005 + $0x4] sm:$0xf]
        %v4399 = vpack.c.bf16 %v4392, %v4387
        %v4400 = vpack.c.bf16 %v4393, %v4388
        %v4401 = vpack.c.bf16 %v4394, %v4389
        %v4402 = vpack.c.bf16 %v4395, %v4390
        %v4403 = vpack.c.bf16 %v4396, %v4391
        %v4404 = vld [vmem:[%s1010] sm:$0xff]
        %v4405 = vld [vmem:[%s1010 + $0x8] sm:$0xff]
        %4407 = vset.pattern.permute.xlu0 0
        %4408 = vperm.xlu0 %4407, %v4404
        %v4409 = vpop.permute.xlu0 %4408
        %4412 = vset.pattern.permute.xlu0 0
        %4413 = vperm.xlu0 %4412, %v4405
        %v4414 = vpop.permute.xlu0 %4413
        %v4418 = vunpack.c.l.b16 %v4397
        %v4419 = vunpack.c.l.b16 %v4398
        %v4420 = vpack.c.b16 %v4419, %v4418
        %vm4421 = vcmask 130048
        %v4423 = vsel %vm4421, %v4420, 0
        %4425 = vmatpush.bf16.msra.mxu0 0
        %4426 = vmatpush.bf16.msra.mxu0 0
        %4427 = vmatpush.bf16.msra.mxu0 0
        %4428 = vmatpush.bf16.msra.mxu0 0
        %4429 = vmatpush.bf16.msra.mxu0 0
        %4430 = vmatpush.bf16.msra.mxu0 0
        %4431 = vmatpush.bf16.msra.mxu0 0
        %4432 = vmatpush.bf16.msra.mxu0 %v4399
        %4433 = vmatmul.bf16.gmra.mxu0 %v4423
        %v4434 = vpop.f32.mrf.mxu0
        %v4435 = vadd.f32 %v4409, %v4434
        %v4436 = vpop.f32.mrf.mxu0
        %v4437 = vadd.f32 %v4414, %v4436
        %4438 = vdwg.mxu0
        %4439 = vmatpush.bf16.msra.mxu0 0
        %4440 = vmatpush.bf16.msra.mxu0 0
        %4441 = vmatpush.bf16.msra.mxu0 0
        %4442 = vmatpush.bf16.msra.mxu0 0
        %4443 = vmatpush.bf16.msra.mxu0 0
        %4444 = vmatpush.bf16.msra.mxu0 0
        %4445 = vmatpush.bf16.msra.mxu0 0
        %4446 = vmatpush.bf16.msra.mxu0 %v4400
        %4447 = vmatmul.bf16.gmra.mxu0 %v4423
        %v4448 = vpop.f32.mrf.mxu0
        %v4449 = vadd.f32 %v4409, %v4448
        %v4450 = vpop.f32.mrf.mxu0
        %v4451 = vadd.f32 %v4414, %v4450
        %4452 = vdwg.mxu0
        %4453 = vmatpush.bf16.msra.mxu0 0
        %4454 = vmatpush.bf16.msra.mxu0 0
        %4455 = vmatpush.bf16.msra.mxu0 0
        %4456 = vmatpush.bf16.msra.mxu0 0
        %4457 = vmatpush.bf16.msra.mxu0 0
        %4458 = vmatpush.bf16.msra.mxu0 0
        %4459 = vmatpush.bf16.msra.mxu0 0
        %4460 = vmatpush.bf16.msra.mxu0 %v4401
        %4461 = vmatmul.bf16.gmra.mxu0 %v4423
        %v4462 = vpop.f32.mrf.mxu0
        %v4463 = vadd.f32 %v4409, %v4462
        %v4464 = vpop.f32.mrf.mxu0
        %v4465 = vadd.f32 %v4414, %v4464
        %4466 = vdwg.mxu0
        %4467 = vmatpush.bf16.msra.mxu0 0
        %4468 = vmatpush.bf16.msra.mxu0 0
        %4469 = vmatpush.bf16.msra.mxu0 0
        %4470 = vmatpush.bf16.msra.mxu0 0
        %4471 = vmatpush.bf16.msra.mxu0 0
        %4472 = vmatpush.bf16.msra.mxu0 0
        %4473 = vmatpush.bf16.msra.mxu0 0
        %4474 = vmatpush.bf16.msra.mxu0 %v4402
        %4475 = vmatmul.bf16.gmra.mxu0 %v4423
        %v4476 = vpop.f32.mrf.mxu0
        %v4477 = vadd.f32 %v4409, %v4476
        %v4478 = vpop.f32.mrf.mxu0
        %v4479 = vadd.f32 %v4414, %v4478
        %4480 = vdwg.mxu0
        %4481 = vmatpush.bf16.msra.mxu0 0
        %4482 = vmatpush.bf16.msra.mxu0 0
        %4483 = vmatpush.bf16.msra.mxu0 0
        %4484 = vmatpush.bf16.msra.mxu0 0
        %4485 = vmatpush.bf16.msra.mxu0 0
        %4486 = vmatpush.bf16.msra.mxu0 0
        %4487 = vmatpush.bf16.msra.mxu0 0
        %4488 = vmatpush.bf16.msra.mxu0 %v4403
        %4489 = vmatmul.bf16.gmra.mxu0 %v4423
        %v4490 = vpop.f32.mrf.mxu0
        %v4491 = vadd.f32 %v4409, %v4490
        %v4492 = vpop.f32.mrf.mxu0
        %v4493 = vadd.f32 %v4414, %v4492
        %4494 = vdwg.mxu0
        %v4495 = vmul.f32 %v4435, %v4377
        %v4496 = vmul.f32 %v4449, %v4378
        %v4497 = vmul.f32 %v4463, %v4379
        %v4498 = vmul.f32 %v4477, %v4380
        %v4499 = vmul.f32 %v4491, %v4381
        %v4500 = vmul.f32 %v4437, %v4377
        %v4501 = vmul.f32 %v4451, %v4378
        %v4502 = vmul.f32 %v4465, %v4379
        %v4503 = vmul.f32 %v4479, %v4380
        %v4504 = vmul.f32 %v4493, %v4381
        %4505 = vst [vmem:[%s1023] sm:$0xff] %v4495
        %4506 = vst [vmem:[%s1023 + $0x8] sm:$0xff] %v4496
        %4507 = vst [vmem:[%s1023 + $0x10] sm:$0xff] %v4497
        %4508 = vst [vmem:[%s1023 + $0x18] sm:$0xff] %v4498
        %4509 = vst [vmem:[%s1023 + $0x20] sm:$0xff] %v4499
        %4510 = vst [vmem:[%s1023 + $0x28] sm:$0xff] %v4500
        %4511 = vst [vmem:[%s1023 + $0x30] sm:$0xff] %v4501
        %4512 = vst [vmem:[%s1023 + $0x38] sm:$0xff] %v4502
        %4513 = vst [vmem:[%s1023 + $0x40] sm:$0xff] %v4503
        %4514 = vst [vmem:[%s1023 + $0x48] sm:$0xff] %v4504
        %s4515 = smul.u32 5, %s32
        %p4516 = scmp.lt.s32.totalorder %s30, 2
        %s4517 = scalar_select %p4516, %s30, 2
        %p4518 = scmp.lt.s32.totalorder %s31, 1
        %s4519 = scalar_select %p4518, %s31, 1
        %p4520 = scmp.lt.s32.totalorder %s4515, 4
        %s4521 = scalar_select %p4520, %s4515, 4
        %s4522 = smul.addr %s4519, 10
        %s4523 = sadd.s32 %s4521, %s4522
        %s4524 = smul.addr %s4517, 20
        %s4525 = sadd.s32 %s4523, %s4524
        %s4526 = smul.addr %s4525, 8
        %s4527 = scalar_lea.vmem %s14, %s4526
        // Predicated region
        $region153: #{parallel_tcns_forward.3} parent=143 // pred_check
          %p4528 = pneg %p480
        $region154: #{parallel_tcns_forward.3} parent=143 // pred_check_branch
          %4530 = sbr.rel (%p4528) target = $region156
        $region155: #{parallel_tcns_forward.3} parent=143 // pred_region
          %s4531 = smul.u32 5, %s32
        $region156: #{parallel_tcns_forward.3} parent=143 // pred_fallthru
          _
      $region144: #{parallel_tcns_forward.3} parent=5 // pred_fallthru
        _
      %p4532 = scmp.le.s32.totalorder 2, %s20
      // Predicated region
      $region157: #{parallel_tcns_forward.3} parent=5 // pred_check
        %p4533 = pneg %p4532
      $region158: #{parallel_tcns_forward.3} parent=5 // pred_check_branch
        %4535 = sbr.rel (%p4533) target = $region160
      $region159: #{parallel_tcns_forward.3} parent=5 // pred_region
        %s4536 = ssub.s32 %s20, 2
        // Predicated region
        $region161: #{parallel_tcns_forward.3} parent=159 // pred_check
          %p4537 = pneg %p486
        $region162: #{parallel_tcns_forward.3} parent=159 // pred_check_branch
          %4539 = sbr.rel (%p4537) target = $region164
        $region163: #{parallel_tcns_forward.3} parent=159 // pred_region
          %s4540 = smul.u32 5, %s35
          %p4541 = scmp.lt.s32.totalorder %s33, 2
          %s4542 = scalar_select %p4541, %s33, 2
          %p4543 = scmp.lt.s32.totalorder %s34, 1
          %s4544 = scalar_select %p4543, %s34, 1
          %p4545 = scmp.lt.s32.totalorder %s4540, 4
          %s4546 = scalar_select %p4545, %s4540, 4
          %s4547 = smul.addr %s4544, 10
          %s4548 = sadd.s32 %s4546, %s4547
          %s4549 = smul.addr %s4542, 20
          %s4550 = sadd.s32 %s4548, %s4549
          %s4551 = smul.addr %s4550, 8
          %s4552 = scalar_lea.vmem %s14, %s4551
        $region164: #{parallel_tcns_forward.3} parent=159 // pred_fallthru
          _
      $region160: #{parallel_tcns_forward.3} parent=5 // pred_fallthru
        _
    $region6: #{parallel_tcns_forward.3} parent=1 // loop_footer
      %s24 = sadd.s32 1, %s20
    $region7: #{parallel_tcns_forward.3} parent=1 // loop_footer_branch
      %19 = sbr.rel target = $region3
    $region8: #{parallel_tcns_forward.3} parent=1 // loop_exit
      _

</llo_original>
